<compile_context>
chip_gen: v5e
topology: v5e:2x2
jax: 0.10.0
libtpu: 0.0.40
codegen_flags: <defaults>
</compile_context>

<pallas_src>
import functools
import math

import numpy as np
import jax
import jax.numpy as jnp
from jax.experimental import pallas as pl
from jax.experimental.pallas import tpu as pltpu


# ----------------------------------------------------------------------------------
# HEALPix nested-ordering neighbour table (pure python/numpy, no healpy dependency).
# ----------------------------------------------------------------------------------
def nside2npix(nside):
    return 12 * nside * nside


_XOFF = (-1, -1, 0, 1, 1, 1, 0, -1)
_YOFF = (0, 1, 1, 1, 0, -1, -1, -1)
_FACEARRAY = (
    (8, 9, 10, 11, -1, -1, -1, -1, 10, 11, 8, 9),    # S
    (5, 6, 7, 4, 8, 9, 10, 11, 9, 10, 11, 8),        # SE
    (-1, -1, -1, -1, 5, 6, 7, 4, -1, -1, -1, -1),    # E
    (4, 5, 6, 7, 11, 8, 9, 10, 11, 8, 9, 10),        # SW
    (0, 1, 2, 3, 4, 5, 6, 7, 8, 9, 10, 11),          # center
    (1, 2, 3, 0, 0, 1, 2, 3, 5, 6, 7, 4),            # NE
    (-1, -1, -1, -1, 7, 4, 5, 6, -1, -1, -1, -1),    # W
    (3, 0, 1, 2, 3, 0, 1, 2, 4, 5, 6, 7),            # NW
    (2, 3, 0, 1, -1, -1, -1, -1, 0, 1, 2, 3),        # N
)
_SWAPARRAY = (
    (0, 0, 3), (0, 0, 6), (0, 0, 0), (0, 0, 5), (0, 0, 0),
    (5, 0, 0), (0, 0, 0), (6, 0, 0), (3, 0, 0),
)


def _compress_bits(v):
    v &= 0x5555555555555555
    v = (v | (v >> 1)) & 0x3333333333333333
    v = (v | (v >> 2)) & 0x0F0F0F0F0F0F0F0F
    v = (v | (v >> 4)) & 0x00FF00FF00FF00FF
    v = (v | (v >> 8)) & 0x0000FFFF0000FFFF
    v = (v | (v >> 16)) & 0x00000000FFFFFFFF
    return v


def _spread_bits(v):
    v &= 0xFFFFFFFF
    v = (v ^ (v << 16)) & 0x0000FFFF0000FFFF
    v = (v ^ (v << 8)) & 0x00FF00FF00FF00FF
    v = (v ^ (v << 4)) & 0x0F0F0F0F0F0F0F0F
    v = (v ^ (v << 2)) & 0x3333333333333333
    v = (v ^ (v << 1)) & 0x5555555555555555
    return v


def healpix_neighbor_table(nside):
    """(npix, 9) int32 table: [SW, W, NW, N, self, NE, E, SE, S]; missing -> self.
    TODO(synk): verify the reference sphericalConv also replaces missing polar-seam neighbours
    with the center pixel (vs. zero padding); results at the 8 polar-face seams depend on it."""
    npix = nside2npix(nside)
    ns2 = nside * nside
    tab = np.zeros((npix, 9), dtype=np.int32)
    for pix in range(npix):
        face = pix // ns2
        pf = pix % ns2
        ix = _compress_bits(pf)
        iy = _compress_bits(pf >> 1)
        nb = []
        for d in range(8):
            x = ix + _XOFF[d]
            y = iy + _YOFF[d]
            nbnum = 4
            if x < 0:
                x += nside
                nbnum -= 1
            elif x >= nside:
                x -= nside
                nbnum += 1
            if y < 0:
                y += nside
                nbnum -= 3
            elif y >= nside:
                y -= nside
                nbnum += 3
            f = _FACEARRAY[nbnum][face]
            if f < 0:
                nb.append(-1)
                continue
            bits = _SWAPARRAY[nbnum][face >> 2]
            if bits & 1:
                x = nside - x - 1
            if bits & 2:
                y = nside - y - 1
            if bits & 4:
                x, y = y, x
            nb.append(f * ns2 + _spread_bits(x) + (_spread_bits(y) << 1))
        nb.insert(4, pix)                       # center pixel at position 4
        nb = [pix if n < 0 else n for n in nb]  # missing neighbours -> center pixel
        tab[pix] = nb
    return tab


def _pool_table(nbr):
    """Child-major regrouping of the (npix, 9) table: pool[r, q, :] = nbr[4*q + r, :].
    Lets the conv kernel fuse AvgPool1d(4) with static leading-dim indexing only."""
    return np.ascontiguousarray(
        np.stack([nbr[r::4, :] for r in range(4)], axis=0), dtype=np.int32)


# ----------------------------------------------------------------------------------
# Tiling helpers (divisor-based: no host-side pad / tail slice around the pallas_calls)
# ----------------------------------------------------------------------------------
_CONV_TILE_M = 1024    # pixel rows per block for the plain conv matmul
_POOL_TILE_G = 256     # parent pixels per block for the fused conv+pool (4*G gathered rows)
_HEAD_TILE_K = 8192    # K tile for the final latent head (weight tile ~4 MB bf16)


def _pick_tile(n, target, *, mult=16, ensure_split=False, min_tile=128):
    """Largest multiple of `mult` that divides n and is <= target (keeps bf16 sublane tiling
    legal); whole axis if n is small.  With ensure_split (single-batch case, v7x's 2 TCs) it
    prefers >= 2 blocks along this axis as long as the block stays >= min_tile rows."""
    if n <= target:
        if ensure_split and n % 2 == 0 and (n // 2) % mult == 0 and (n // 2) >= min_tile:
            return n // 2
        return n
    t = (target // mult) * mult
    while t >= mult:
        if n % t == 0:
            return t
        t -= mult
    return n


def _pick_tile_k(K, target=_HEAD_TILE_K):
    if K <= target:
        return K
    tk = (target // 128) * 128
    while tk >= 128:
        if K % tk == 0:
            return tk
        tk -= 128
    return K


# ----------------------------------------------------------------------------------
# Pallas kernels
# ----------------------------------------------------------------------------------
def _conv_kernel(x_ref, w_ref, b_ref, o_ref, *, negative_slope):
    # x:(1, tm, 9*Cin) bf16, w:(9*Cin, Cout) bf16, b:(1, Cout) f32  ->  o:(1, tm, Cout) bf16
    y = jnp.dot(x_ref[0], w_ref[...], preferred_element_type=jnp.float32) + b_ref[...]
    y = jnp.where(y > 0, y, negative_slope * y)          # LeakyReLU(0.2), f32 epilogue
    o_ref[0] = y.astype(o_ref.dtype)


def _conv_pool_kernel(x_ref, w_ref, b_ref, o_ref, *, negative_slope, merged):
    # Fused sphericalConv + LeakyReLU + sphericalDown (AvgPool1d over the 4 nested children).
    # x:(1, 4, G, 9*Cin) bf16 -- slab r holds child r of the G parent pixels of this tile
    # (child-major gather table), so the pool is a static slab reduction.
    w = w_ref[...]
    b = b_ref[...]
    xb = x_ref[0]                                        # (4, G, K)
    if merged:
        # One long MXU stream: (4G, K) x (K, N); bias+LeakyReLU on (4G, N); pool = 3 VPU adds.
        G, K = xb.shape[1], xb.shape[2]
        y = jnp.dot(xb.reshape(4 * G, K), w, preferred_element_type=jnp.float32) + b
        y = jnp.where(y > 0, y, negative_slope * y)
        y = y.reshape(4, G, y.shape[-1])
        o_ref[0] = (0.25 * (y[0] + y[1] + y[2] + y[3])).astype(o_ref.dtype)
    else:
        # Fallback (G not sublane-tile aligned, only the tiny deepest layers): 4 short matmuls.
        acc = None
        for r in range(4):
            y = jnp.dot(xb[r], w, preferred_element_type=jnp.float32) + b
            y = jnp.where(y > 0, y, negative_slope * y)
            acc = y if acc is None else acc + y
        o_ref[0] = (0.25 * acc).astype(o_ref.dtype)


def _head_kernel(x_ref, w_ref, b_ref, o_ref, acc_ref):
    # Fused mu/logvar Linear.  Grid = (N blocks ["parallel"], K tiles ["arbitrary"]) with an
    # f32 VMEM accumulator over the K axis (P3 pattern).
    @pl.when(pl.program_id(1) == 0)
    def _():
        acc_ref[...] = jnp.zeros_like(acc_ref)

    acc_ref[...] += jnp.dot(x_ref[...], w_ref[...], preferred_element_type=jnp.float32)

    @pl.when(pl.program_id(1) == pl.num_programs(1) - 1)
    def _():
        o_ref[...] = (acc_ref[...] + b_ref[...]).astype(o_ref.dtype)


# ----------------------------------------------------------------------------------
# pallas_call wrappers
# ----------------------------------------------------------------------------------
def _conv_call(xg, w, b, tm, *, negative_slope=0.2):
    B, npix, K = xg.shape
    N = w.shape[1]
    return pl.pallas_call(
        functools.partial(_conv_kernel, negative_slope=negative_slope),
        out_shape=jax.ShapeDtypeStruct((B, npix, N), jnp.bfloat16),
        grid=(B, npix // tm),
        in_specs=[pl.BlockSpec((1, tm, K), lambda bb, ii: (bb, ii, 0)),
                  pl.BlockSpec((K, N), lambda bb, ii: (0, 0)),
                  pl.BlockSpec((1, N), lambda bb, ii: (0, 0))],
        out_specs=pl.BlockSpec((1, tm, N), lambda bb, ii: (bb, ii, 0)),
        compiler_params=pltpu.CompilerParams(
            dimension_semantics=("parallel", "parallel")),
    )(xg, w, b.reshape(1, N))


def _conv_pool_call(xg, w, b, G, *, negative_slope=0.2):
    B, _, npix4, K = xg.shape
    N = w.shape[1]
    merged = bool(G % 16 == 0)        # sublane-tile aligned -> single (4G,K)x(K,N) matmul path
    return pl.pallas_call(
        functools.partial(_conv_pool_kernel, negative_slope=negative_slope, merged=merged),
        out_shape=jax.ShapeDtypeStruct((B, npix4, N), jnp.bfloat16),
        grid=(B, npix4 // G),
        in_specs=[pl.BlockSpec((1, 4, G, K), lambda bb, ii: (bb, 0, ii, 0)),
                  pl.BlockSpec((K, N), lambda bb, ii: (0, 0)),
                  pl.BlockSpec((1, N), lambda bb, ii: (0, 0))],
        out_specs=pl.BlockSpec((1, G, N), lambda bb, ii: (bb, ii, 0)),
        compiler_params=pltpu.CompilerParams(
            dimension_semantics=("parallel", "parallel")),
    )(xg, w, b.reshape(1, N))


def _latent_head(flat, w, b):
    Bsz, K = flat.shape
    N = w.shape[1]
    tk = _pick_tile_k(K)
    # Split N (= 2*dim_latent) into 2 "parallel" blocks when each half is a legal 128-multiple
    # lane block -> both v7x TensorCores stream half of the weight.
    nb = 2 if (N % 256 == 0) else 1
    tn = N // nb
    return pl.pallas_call(
        _head_kernel,
        out_shape=jax.ShapeDtypeStruct((Bsz, N), jnp.float32),
        grid=(nb, K // tk),
        in_specs=[pl.BlockSpec((Bsz, tk), lambda n, k: (0, k)),
                  pl.BlockSpec((tk, tn), lambda n, k: (k, n)),
                  pl.BlockSpec((1, tn), lambda n, k: (0, n))],
        out_specs=pl.BlockSpec((Bsz, tn), lambda n, k: (0, n)),
        scratch_shapes=[pltpu.VMEM((Bsz, tn), jnp.float32)],
        compiler_params=pltpu.CompilerParams(
            dimension_semantics=("parallel", "arbitrary")),
    )(flat, w, b.reshape(1, N))


# ----------------------------------------------------------------------------------
# sphericalConv (+ optional fused sphericalDown)
# ----------------------------------------------------------------------------------
def spherical_conv(h, nbr_tabs, w, b, *, pool):
    """sphericalConv (kernel=9 over HEALPix neighbours) + LeakyReLU(0.2); with pool=True the
    following sphericalDown (AvgPool1d(4)) is fused into the kernel epilogue.
    h:(B,npix,Cin) bf16; nbr_tabs: {'plain': (npix,9), 'pool': (4,npix//4,9)} np.int32 (batch-
    independent, reused across layers at the same nside); w:(9*Cin,Cout) bf16; b:(Cout,) f32."""
    B, npix, Cin = h.shape
    K = 9 * Cin
    # TODO(synk): neighbour gather still runs as an XLA gather (no robust in-kernel dynamic
    # row-gather on TPU Pallas); index tables are batch-deduplicated to cut index traffic.
    if pool:
        npix4 = npix // 4
        idx = jnp.asarray(nbr_tabs["pool"])                              # (4, npix4, 9)
        xg = jnp.take(h, idx, axis=1, mode="clip")                       # (B, 4, npix4, 9, Cin)
        xg = xg.reshape(B, 4, npix4, K)
        G = _pick_tile(npix4, _POOL_TILE_G, ensure_split=(B == 1))
        return _conv_pool_call(xg, w, b, G)                              # (B, npix4, Cout)
    idx = jnp.asarray(nbr_tabs["plain"])                                 # (npix, 9)
    xg = jnp.take(h, idx, axis=1, mode="clip").reshape(B, npix, K)       # (B, npix, 9*Cin)
    tm = _pick_tile(npix, _CONV_TILE_M, ensure_split=(B == 1))
    return _conv_call(xg, w, b, tm)                                      # (B, npix, Cout)


# ----------------------------------------------------------------------------------
# Encoder: parameters + forward
# ----------------------------------------------------------------------------------
def init_encoder_params(key, NSIDE, channels=16, dim_latent=128, n_steps=4):
    specs = []  # (nside_of_layer, cin, cout)
    ns, ch = NSIDE, channels
    specs.append((ns, 1, ch))
    specs.append((ns, ch, ch))       # fused with the following sphericalDown in forward
    ns //= 2
    # TODO(synk): the PyTorch reference appends sphericalConv(channels, channels) inside the loop
    # and doubles `channels` only afterwards, which is shape-inconsistent at forward time for
    # n_steps > 1; we double the channels inside the loop conv so the final
    # Linear(channels * nside2npix(NSIDE), dim_latent) dimensions are consistent.
    for _ in range(n_steps):
        specs.append((ns, ch, 2 * ch))
        ch *= 2
        ns //= 2
    flat = ch * nside2npix(ns)

    params = {"convs": [], "nbrs": {}, "flat": flat, "dim_latent": dim_latent}
    for (cns, cin, cout) in specs:
        key, k1 = jax.random.split(key)
        fan_in = 9 * cin  # kaiming_normal_ fan_in for Conv1d(cin, cout, kernel=9)
        W = jax.random.normal(k1, (9 * cin, cout), jnp.float32) * math.sqrt(2.0 / fan_in)
        # weights stored bf16 (MXU inputs); biases f32 (kaiming_init fills biases with 0)
        params["convs"].append((cns, W.astype(jnp.bfloat16), jnp.zeros((cout,), jnp.float32)))
        if cns not in params["nbrs"]:
            tab = healpix_neighbor_table(cns)
            # surface index-table bugs at build time instead of relying on silent clamping
            assert tab.min() >= 0 and tab.max() < nside2npix(cns), "bad neighbour table"
            params["nbrs"][cns] = {"plain": tab, "pool": _pool_table(tab)}

    key, k1, k2 = jax.random.split(key, 3)
    # mu / logvar Linear layers fused into one lane-dense (flat, 2*dim_latent) matmul.  Weight
    # rows are stored in *pixel-major* flatten order (row l*C + c); a real port from a torch
    # checkpoint would permute rows as W_ours[l*C + c, :] = W_torch[:, c*L + l].T, since torch's
    # x.view(B, 1, -1) flattens (C, L) channel-major.
    mu_w = jax.random.normal(k1, (flat, dim_latent), jnp.float32) * math.sqrt(2.0 / flat)
    logvar_w = jax.random.normal(k2, (flat, dim_latent), jnp.float32) * math.sqrt(2.0 / flat)
    params["head_w"] = jnp.concatenate([mu_w, logvar_w], axis=1).astype(jnp.bfloat16)
    params["head_b"] = jnp.zeros((2 * dim_latent,), jnp.float32)
    return params


def encoder_forward(params, x):
    """x: (B, 1, npix) in PyTorch NCL layout. Returns (mu, logvar), each (B, 1, dim_latent)."""
    B = x.shape[0]
    h = jnp.transpose(x, (0, 2, 1)).astype(jnp.bfloat16)   # channels-last, bf16 activations

    convs = params["convs"]
    nbrs = params["nbrs"]
    # conv, act | conv, act, down   (the down / AvgPool1d(4) is fused into the second conv)
    h = spherical_conv(h, nbrs[convs[0][0]], convs[0][1], convs[0][2], pool=False)
    # remaining layers: conv, act, down -- down fused into each conv
    for (cns, W, bvec) in convs[1:]:
        h = spherical_conv(h, nbrs[cns], W, bvec, pool=True)

    # pixel-major flatten (pure reshape, no transpose / extra HBM pass); the head weight rows
    # were permuted to this order at init (see init_encoder_params).
    flat = h.reshape(B, -1)
    out = _latent_head(flat, params["head_w"], params["head_b"])
    dl = params["dim_latent"]
    mu, logvar = out[:, :dl], out[:, dl:]
    return mu.reshape(B, 1, dl), logvar.reshape(B, 1, dl)


# ----------------------------------------------------------------------------------
if __name__ == "__main__":
    NSIDE = 8          # HEALPix resolution of the input map
    channels = 4
    dim_latent = 16
    n_steps = 2
    B = 2

    key = jax.random.PRNGKey(0)
    key, kp, kx = jax.random.split(key, 3)
    params = init_encoder_params(kp, NSIDE, channels=channels,
                                 dim_latent=dim_latent, n_steps=n_steps)

    npix = nside2npix(NSIDE)                       # 768
    x = jax.random.normal(kx, (B, 1, npix), jnp.float32)

    fwd = jax.jit(lambda xx: encoder_forward(params, xx))   # params closed over (numpy tables
                                                            # are used at trace time)
    mu, logvar = fwd(x)
    jax.block_until_ready((mu, logvar))

    assert mu.shape == (B, 1, dim_latent), mu.shape
    assert logvar.shape == (B, 1, dim_latent), logvar.shape
    assert bool(jnp.all(jnp.isfinite(mu))) and bool(jnp.all(jnp.isfinite(logvar)))
    print("KERNEL_OK")
</pallas_src>

<mosaic_0001>
module attributes {stable_mosaic.version = 11 : i64} {
  func.func @_conv_kernel(%arg0: i32, %arg1: i32, %arg2: memref<1x768x9xbf16, #tpu.memory_space<vmem>>, %arg3: memref<9x4xbf16, #tpu.memory_space<vmem>>, %arg4: memref<1x4xf32, #tpu.memory_space<vmem>>, %arg5: memref<1x768x4xbf16, #tpu.memory_space<vmem>>) attributes {dimension_semantics = [#tpu.dimension_semantics<parallel>, #tpu.dimension_semantics<parallel>], iteration_bounds = array<i64: 2, 1>, scalar_prefetch = 0 : i64, scratch_operands = 0 : i64, tpu.core_type = #tpu.core_type<tc>, window_params = [{transform_indices = @transform_0, window_bounds = array<i64: 1, 768, 9>}, {pipeline_mode = #tpu.pipeline_mode<synchronous>, transform_indices = @transform_1, window_bounds = array<i64: 9, 4>}, {pipeline_mode = #tpu.pipeline_mode<synchronous>, transform_indices = @transform_2, window_bounds = array<i64: 1, 4>}, {transform_indices = @transform_3, window_bounds = array<i64: 1, 768, 4>}]} {
    %c0 = arith.constant 0 : index
    %c0_0 = arith.constant 0 : index
    %c0_1 = arith.constant 0 : index
    %0 = vector.load %arg2[%c0, %c0_0, %c0_1] : memref<1x768x9xbf16, #tpu.memory_space<vmem>>, vector<1x768x9xbf16>
    %1 = vector.shape_cast %0 : vector<1x768x9xbf16> to vector<768x9xbf16>
    %c0_2 = arith.constant 0 : index
    %c0_3 = arith.constant 0 : index
    %2 = vector.load %arg3[%c0_2, %c0_3] : memref<9x4xbf16, #tpu.memory_space<vmem>>, vector<9x4xbf16>
    %cst = arith.constant dense<0.000000e+00> : vector<768x4xf32>
    %3 = tpu.matmul %1, %2, %cst {dimension_numbers = #tpu.dot_dimension_numbers<[1], [0], [0], [1], [0, 0, 1, 1], [], []>} : vector<768x9xbf16>, vector<9x4xbf16>, vector<768x4xf32> -> vector<768x4xf32>
    %c0_4 = arith.constant 0 : index
    %c0_5 = arith.constant 0 : index
    %4 = vector.load %arg4[%c0_4, %c0_5] : memref<1x4xf32, #tpu.memory_space<vmem>>, vector<1x4xf32>
    %5 = vector.broadcast %4 : vector<1x4xf32> to vector<768x4xf32>
    %6 = arith.addf %3, %5 : vector<768x4xf32>
    %cst_6 = arith.constant 0.000000e+00 : f32
    %7 = vector.broadcast %cst_6 : f32 to vector<768x4xf32>
    %8 = arith.cmpf ogt, %6, %7 : vector<768x4xf32>
    %cst_7 = arith.constant 2.000000e-01 : f32
    %9 = vector.broadcast %cst_7 : f32 to vector<768x4xf32>
    %10 = arith.mulf %9, %6 : vector<768x4xf32>
    %11 = arith.select %8, %6, %10 : vector<768x4xi1>, vector<768x4xf32>
    %12 = arith.truncf %11 : vector<768x4xf32> to vector<768x4xbf16>
    %c0_8 = arith.constant 0 : index
    %c0_9 = arith.constant 0 : index
    %c0_10 = arith.constant 0 : index
    %13 = vector.load %arg5[%c0_8, %c0_9, %c0_10] : memref<1x768x4xbf16, #tpu.memory_space<vmem>>, vector<1x768x4xbf16>
    %14 = vector.shape_cast %13 : vector<1x768x4xbf16> to vector<768x4xbf16>
    %15 = vector.shape_cast %12 : vector<768x4xbf16> to vector<1x768x4xbf16>
    tpu.vector_store %arg5[%c0_8, %c0_9, %c0_10], %15 {strides = array<i32>} : memref<1x768x4xbf16, #tpu.memory_space<vmem>>, vector<1x768x4xbf16>,
    return
  }
  func.func @transform_0(%arg0: i32, %arg1: i32) -> (i32, i32, i32) {
    %c0_i32 = arith.constant 0 : i32
    %c0_i32_0 = arith.constant 0 : i32
    return %arg0, %arg1, %c0_i32 : i32, i32, i32
  }
  func.func @transform_1(%arg0: i32, %arg1: i32) -> (i32, i32) {
    %c0_i32 = arith.constant 0 : i32
    %c0_i32_0 = arith.constant 0 : i32
    %c0_i32_1 = arith.constant 0 : i32
    return %c0_i32, %c0_i32_0 : i32, i32
  }
  func.func @transform_2(%arg0: i32, %arg1: i32) -> (i32, i32) {
    %c0_i32 = arith.constant 0 : i32
    %c0_i32_0 = arith.constant 0 : i32
    %c0_i32_1 = arith.constant 0 : i32
    return %c0_i32, %c0_i32_0 : i32, i32
  }
  func.func @transform_3(%arg0: i32, %arg1: i32) -> (i32, i32, i32) {
    %c0_i32 = arith.constant 0 : i32
    %c0_i32_0 = arith.constant 0 : i32
    return %arg0, %arg1, %c0_i32 : i32, i32, i32
  }
}

module attributes {stable_mosaic.version = 11 : i64} {
  func.func @_conv_pool_kernel(%arg0: i32, %arg1: i32, %arg2: memref<1x4x192x36xbf16, #tpu.memory_space<vmem>>, %arg3: memref<36x4xbf16, #tpu.memory_space<vmem>>, %arg4: memref<1x4xf32, #tpu.memory_space<vmem>>, %arg5: memref<1x192x4xbf16, #tpu.memory_space<vmem>>) attributes {dimension_semantics = [#tpu.dimension_semantics<parallel>, #tpu.dimension_semantics<parallel>], iteration_bounds = array<i64: 2, 1>, scalar_prefetch = 0 : i64, scratch_operands = 0 : i64, tpu.core_type = #tpu.core_type<tc>, window_params = [{transform_indices = @transform_0, window_bounds = array<i64: 1, 4, 192, 36>}, {pipeline_mode = #tpu.pipeline_mode<synchronous>, transform_indices = @transform_1, window_bounds = array<i64: 36, 4>}, {pipeline_mode = #tpu.pipeline_mode<synchronous>, transform_indices = @transform_2, window_bounds = array<i64: 1, 4>}, {transform_indices = @transform_3, window_bounds = array<i64: 1, 192, 4>}]} {
    %c0 = arith.constant 0 : index
    %c0_0 = arith.constant 0 : index
    %0 = vector.load %arg3[%c0, %c0_0] : memref<36x4xbf16, #tpu.memory_space<vmem>>, vector<36x4xbf16>
    %c0_1 = arith.constant 0 : index
    %c0_2 = arith.constant 0 : index
    %1 = vector.load %arg4[%c0_1, %c0_2] : memref<1x4xf32, #tpu.memory_space<vmem>>, vector<1x4xf32>
    %c0_3 = arith.constant 0 : index
    %c0_4 = arith.constant 0 : index
    %c0_5 = arith.constant 0 : index
    %c0_6 = arith.constant 0 : index
    %2 = vector.load %arg2[%c0_3, %c0_4, %c0_5, %c0_6] : memref<1x4x192x36xbf16, #tpu.memory_space<vmem>>, vector<1x4x192x36xbf16>
    %3 = vector.shape_cast %2 : vector<1x4x192x36xbf16> to vector<4x192x36xbf16>
    %4 = vector.shape_cast %3 : vector<4x192x36xbf16> to vector<768x36xbf16>
    %cst = arith.constant dense<0.000000e+00> : vector<768x4xf32>
    %5 = tpu.matmul %4, %0, %cst {dimension_numbers = #tpu.dot_dimension_numbers<[1], [0], [0], [1], [0, 0, 1, 1], [], []>} : vector<768x36xbf16>, vector<36x4xbf16>, vector<768x4xf32> -> vector<768x4xf32>
    %6 = vector.broadcast %1 : vector<1x4xf32> to vector<768x4xf32>
    %7 = arith.addf %5, %6 : vector<768x4xf32>
    %cst_7 = arith.constant 0.000000e+00 : f32
    %8 = vector.broadcast %cst_7 : f32 to vector<768x4xf32>
    %9 = arith.cmpf ogt, %7, %8 : vector<768x4xf32>
    %cst_8 = arith.constant 2.000000e-01 : f32
    %10 = vector.broadcast %cst_8 : f32 to vector<768x4xf32>
    %11 = arith.mulf %10, %7 : vector<768x4xf32>
    %12 = arith.select %9, %7, %11 : vector<768x4xi1>, vector<768x4xf32>
    %13 = vector.shape_cast %12 : vector<768x4xf32> to vector<4x192x4xf32>
    %14 = vector.extract_strided_slice %13 {offsets = [0, 0, 0], sizes = [1, 192, 4], strides = [1, 1, 1]} : vector<4x192x4xf32> to vector<1x192x4xf32>
    %15 = vector.shape_cast %14 : vector<1x192x4xf32> to vector<192x4xf32>
    %16 = vector.extract_strided_slice %13 {offsets = [1, 0, 0], sizes = [1, 192, 4], strides = [1, 1, 1]} : vector<4x192x4xf32> to vector<1x192x4xf32>
    %17 = vector.shape_cast %16 : vector<1x192x4xf32> to vector<192x4xf32>
    %18 = arith.addf %15, %17 : vector<192x4xf32>
    %19 = vector.extract_strided_slice %13 {offsets = [2, 0, 0], sizes = [1, 192, 4], strides = [1, 1, 1]} : vector<4x192x4xf32> to vector<1x192x4xf32>
    %20 = vector.shape_cast %19 : vector<1x192x4xf32> to vector<192x4xf32>
    %21 = arith.addf %18, %20 : vector<192x4xf32>
    %22 = vector.extract_strided_slice %13 {offsets = [3, 0, 0], sizes = [1, 192, 4], strides = [1, 1, 1]} : vector<4x192x4xf32> to vector<1x192x4xf32>
    %23 = vector.shape_cast %22 : vector<1x192x4xf32> to vector<192x4xf32>
    %24 = arith.addf %21, %23 : vector<192x4xf32>
    %cst_9 = arith.constant 2.500000e-01 : f32
    %25 = vector.broadcast %cst_9 : f32 to vector<192x4xf32>
    %26 = arith.mulf %25, %24 : vector<192x4xf32>
    %27 = arith.truncf %26 : vector<192x4xf32> to vector<192x4xbf16>
    %c0_10 = arith.constant 0 : index
    %c0_11 = arith.constant 0 : index
    %c0_12 = arith.constant 0 : index
    %28 = vector.load %arg5[%c0_10, %c0_11, %c0_12] : memref<1x192x4xbf16, #tpu.memory_space<vmem>>, vector<1x192x4xbf16>
    %29 = vector.shape_cast %28 : vector<1x192x4xbf16> to vector<192x4xbf16>
    %30 = vector.shape_cast %27 : vector<192x4xbf16> to vector<1x192x4xbf16>
    tpu.vector_store %arg5[%c0_10, %c0_11, %c0_12], %30 {strides = array<i32>} : memref<1x192x4xbf16, #tpu.memory_space<vmem>>, vector<1x192x4xbf16>,
    return
  }
  func.func @transform_0(%arg0: i32, %arg1: i32) -> (i32, i32, i32, i32) {
    %c0_i32 = arith.constant 0 : i32
    %c0_i32_0 = arith.constant 0 : i32
    %c0_i32_1 = arith.constant 0 : i32
    return %arg0, %c0_i32, %arg1, %c0_i32_0 : i32, i32, i32, i32
  }
  func.func @transform_1(%arg0: i32, %arg1: i32) -> (i32, i32) {
    %c0_i32 = arith.constant 0 : i32
    %c0_i32_0 = arith.constant 0 : i32
    %c0_i32_1 = arith.constant 0 : i32
    return %c0_i32, %c0_i32_0 : i32, i32
  }
  func.func @transform_2(%arg0: i32, %arg1: i32) -> (i32, i32) {
    %c0_i32 = arith.constant 0 : i32
    %c0_i32_0 = arith.constant 0 : i32
    %c0_i32_1 = arith.constant 0 : i32
    return %c0_i32, %c0_i32_0 : i32, i32
  }
  func.func @transform_3(%arg0: i32, %arg1: i32) -> (i32, i32, i32) {
    %c0_i32 = arith.constant 0 : i32
    %c0_i32_0 = arith.constant 0 : i32
    return %arg0, %arg1, %c0_i32 : i32, i32, i32
  }
}

module attributes {stable_mosaic.version = 11 : i64} {
  func.func @_conv_pool_kernel(%arg0: i32, %arg1: i32, %arg2: memref<1x4x48x36xbf16, #tpu.memory_space<vmem>>, %arg3: memref<36x8xbf16, #tpu.memory_space<vmem>>, %arg4: memref<1x8xf32, #tpu.memory_space<vmem>>, %arg5: memref<1x48x8xbf16, #tpu.memory_space<vmem>>) attributes {dimension_semantics = [#tpu.dimension_semantics<parallel>, #tpu.dimension_semantics<parallel>], iteration_bounds = array<i64: 2, 1>, scalar_prefetch = 0 : i64, scratch_operands = 0 : i64, tpu.core_type = #tpu.core_type<tc>, window_params = [{transform_indices = @transform_0, window_bounds = array<i64: 1, 4, 48, 36>}, {pipeline_mode = #tpu.pipeline_mode<synchronous>, transform_indices = @transform_1, window_bounds = array<i64: 36, 8>}, {pipeline_mode = #tpu.pipeline_mode<synchronous>, transform_indices = @transform_2, window_bounds = array<i64: 1, 8>}, {transform_indices = @transform_3, window_bounds = array<i64: 1, 48, 8>}]} {
    %c0 = arith.constant 0 : index
    %c0_0 = arith.constant 0 : index
    %0 = vector.load %arg3[%c0, %c0_0] : memref<36x8xbf16, #tpu.memory_space<vmem>>, vector<36x8xbf16>
    %c0_1 = arith.constant 0 : index
    %c0_2 = arith.constant 0 : index
    %1 = vector.load %arg4[%c0_1, %c0_2] : memref<1x8xf32, #tpu.memory_space<vmem>>, vector<1x8xf32>
    %c0_3 = arith.constant 0 : index
    %c0_4 = arith.constant 0 : index
    %c0_5 = arith.constant 0 : index
    %c0_6 = arith.constant 0 : index
    %2 = vector.load %arg2[%c0_3, %c0_4, %c0_5, %c0_6] : memref<1x4x48x36xbf16, #tpu.memory_space<vmem>>, vector<1x4x48x36xbf16>
    %3 = vector.shape_cast %2 : vector<1x4x48x36xbf16> to vector<4x48x36xbf16>
    %4 = vector.shape_cast %3 : vector<4x48x36xbf16> to vector<192x36xbf16>
    %cst = arith.constant dense<0.000000e+00> : vector<192x8xf32>
    %5 = tpu.matmul %4, %0, %cst {dimension_numbers = #tpu.dot_dimension_numbers<[1], [0], [0], [1], [0, 0, 1, 1], [], []>} : vector<192x36xbf16>, vector<36x8xbf16>, vector<192x8xf32> -> vector<192x8xf32>
    %6 = vector.broadcast %1 : vector<1x8xf32> to vector<192x8xf32>
    %7 = arith.addf %5, %6 : vector<192x8xf32>
    %cst_7 = arith.constant 0.000000e+00 : f32
    %8 = vector.broadcast %cst_7 : f32 to vector<192x8xf32>
    %9 = arith.cmpf ogt, %7, %8 : vector<192x8xf32>
    %cst_8 = arith.constant 2.000000e-01 : f32
    %10 = vector.broadcast %cst_8 : f32 to vector<192x8xf32>
    %11 = arith.mulf %10, %7 : vector<192x8xf32>
    %12 = arith.select %9, %7, %11 : vector<192x8xi1>, vector<192x8xf32>
    %13 = vector.shape_cast %12 : vector<192x8xf32> to vector<4x48x8xf32>
    %14 = vector.extract_strided_slice %13 {offsets = [0, 0, 0], sizes = [1, 48, 8], strides = [1, 1, 1]} : vector<4x48x8xf32> to vector<1x48x8xf32>
    %15 = vector.shape_cast %14 : vector<1x48x8xf32> to vector<48x8xf32>
    %16 = vector.extract_strided_slice %13 {offsets = [1, 0, 0], sizes = [1, 48, 8], strides = [1, 1, 1]} : vector<4x48x8xf32> to vector<1x48x8xf32>
    %17 = vector.shape_cast %16 : vector<1x48x8xf32> to vector<48x8xf32>
    %18 = arith.addf %15, %17 : vector<48x8xf32>
    %19 = vector.extract_strided_slice %13 {offsets = [2, 0, 0], sizes = [1, 48, 8], strides = [1, 1, 1]} : vector<4x48x8xf32> to vector<1x48x8xf32>
    %20 = vector.shape_cast %19 : vector<1x48x8xf32> to vector<48x8xf32>
    %21 = arith.addf %18, %20 : vector<48x8xf32>
    %22 = vector.extract_strided_slice %13 {offsets = [3, 0, 0], sizes = [1, 48, 8], strides = [1, 1, 1]} : vector<4x48x8xf32> to vector<1x48x8xf32>
    %23 = vector.shape_cast %22 : vector<1x48x8xf32> to vector<48x8xf32>
    %24 = arith.addf %21, %23 : vector<48x8xf32>
    %cst_9 = arith.constant 2.500000e-01 : f32
    %25 = vector.broadcast %cst_9 : f32 to vector<48x8xf32>
    %26 = arith.mulf %25, %24 : vector<48x8xf32>
    %27 = arith.truncf %26 : vector<48x8xf32> to vector<48x8xbf16>
    %c0_10 = arith.constant 0 : index
    %c0_11 = arith.constant 0 : index
    %c0_12 = arith.constant 0 : index
    %28 = vector.load %arg5[%c0_10, %c0_11, %c0_12] : memref<1x48x8xbf16, #tpu.memory_space<vmem>>, vector<1x48x8xbf16>
    %29 = vector.shape_cast %28 : vector<1x48x8xbf16> to vector<48x8xbf16>
    %30 = vector.shape_cast %27 : vector<48x8xbf16> to vector<1x48x8xbf16>
    tpu.vector_store %arg5[%c0_10, %c0_11, %c0_12], %30 {strides = array<i32>} : memref<1x48x8xbf16, #tpu.memory_space<vmem>>, vector<1x48x8xbf16>,
    return
  }
  func.func @transform_0(%arg0: i32, %arg1: i32) -> (i32, i32, i32, i32) {
    %c0_i32 = arith.constant 0 : i32
    %c0_i32_0 = arith.constant 0 : i32
    %c0_i32_1 = arith.constant 0 : i32
    return %arg0, %c0_i32, %arg1, %c0_i32_0 : i32, i32, i32, i32
  }
  func.func @transform_1(%arg0: i32, %arg1: i32) -> (i32, i32) {
    %c0_i32 = arith.constant 0 : i32
    %c0_i32_0 = arith.constant 0 : i32
    %c0_i32_1 = arith.constant 0 : i32
    return %c0_i32, %c0_i32_0 : i32, i32
  }
  func.func @transform_2(%arg0: i32, %arg1: i32) -> (i32, i32) {
    %c0_i32 = arith.constant 0 : i32
    %c0_i32_0 = arith.constant 0 : i32
    %c0_i32_1 = arith.constant 0 : i32
    return %c0_i32, %c0_i32_0 : i32, i32
  }
  func.func @transform_3(%arg0: i32, %arg1: i32) -> (i32, i32, i32) {
    %c0_i32 = arith.constant 0 : i32
    %c0_i32_0 = arith.constant 0 : i32
    return %arg0, %arg1, %c0_i32 : i32, i32, i32
  }
}

module attributes {stable_mosaic.version = 11 : i64} {
  func.func @_head_kernel(%arg0: i32, %arg1: i32, %arg2: memref<2x192xbf16, #tpu.memory_space<vmem>>, %arg3: memref<192x32xbf16, #tpu.memory_space<vmem>>, %arg4: memref<1x32xf32, #tpu.memory_space<vmem>>, %arg5: memref<2x32xf32, #tpu.memory_space<vmem>>, %arg6: memref<2x32xf32, #tpu.memory_space<vmem>>) attributes {dimension_semantics = [#tpu.dimension_semantics<parallel>, #tpu.dimension_semantics<arbitrary>], iteration_bounds = array<i64: 1, 1>, scalar_prefetch = 0 : i64, scratch_operands = 1 : i64, tpu.core_type = #tpu.core_type<tc>, window_params = [{transform_indices = @transform_0, window_bounds = array<i64: 2, 192>}, {transform_indices = @transform_1, window_bounds = array<i64: 192, 32>}, {transform_indices = @transform_2, window_bounds = array<i64: 1, 32>}, {transform_indices = @transform_3, window_bounds = array<i64: 2, 32>}]} {
    %c0_i32 = arith.constant 0 : i32
    %0 = arith.cmpi eq, %arg1, %c0_i32 : i32
    %1 = arith.extui %0 : i1 to i32
    %c0_i32_0 = arith.constant 0 : i32
    %2 = arith.cmpi ne, %1, %c0_i32_0 : i32
    scf.if %2 {
      %cst_10 = arith.constant 0.000000e+00 : f32
      %12 = vector.broadcast %cst_10 : f32 to vector<2x32xf32>
      %c0_11 = arith.constant 0 : index
      %c0_12 = arith.constant 0 : index
      %13 = vector.load %arg6[%c0_11, %c0_12] : memref<2x32xf32, #tpu.memory_space<vmem>>, vector<2x32xf32>
      tpu.vector_store %arg6[%c0_11, %c0_12], %12 {strides = array<i32>} : memref<2x32xf32, #tpu.memory_space<vmem>>, vector<2x32xf32>,
    } else {
    }
    %c0 = arith.constant 0 : index
    %c0_1 = arith.constant 0 : index
    %3 = vector.load %arg6[%c0, %c0_1] : memref<2x32xf32, #tpu.memory_space<vmem>>, vector<2x32xf32>
    %c0_2 = arith.constant 0 : index
    %c0_3 = arith.constant 0 : index
    %4 = vector.load %arg2[%c0_2, %c0_3] : memref<2x192xbf16, #tpu.memory_space<vmem>>, vector<2x192xbf16>
    %c0_4 = arith.constant 0 : index
    %c0_5 = arith.constant 0 : index
    %5 = vector.load %arg3[%c0_4, %c0_5] : memref<192x32xbf16, #tpu.memory_space<vmem>>, vector<192x32xbf16>
    %cst = arith.constant dense<0.000000e+00> : vector<2x32xf32>
    %6 = tpu.matmul %4, %5, %cst {dimension_numbers = #tpu.dot_dimension_numbers<[1], [0], [0], [1], [0, 0, 1, 1], [], []>} : vector<2x192xbf16>, vector<192x32xbf16>, vector<2x32xf32> -> vector<2x32xf32>
    %7 = arith.addf %3, %6 : vector<2x32xf32>
    %c0_6 = arith.constant 0 : index
    %c0_7 = arith.constant 0 : index
    %8 = vector.load %arg6[%c0_6, %c0_7] : memref<2x32xf32, #tpu.memory_space<vmem>>, vector<2x32xf32>
    tpu.vector_store %arg6[%c0_6, %c0_7], %7 {strides = array<i32>} : memref<2x32xf32, #tpu.memory_space<vmem>>, vector<2x32xf32>,
    %c0_i32_8 = arith.constant 0 : i32
    %9 = arith.cmpi eq, %arg1, %c0_i32_8 : i32
    %10 = arith.extui %9 : i1 to i32
    %c0_i32_9 = arith.constant 0 : i32
    %11 = arith.cmpi ne, %10, %c0_i32_9 : i32
    scf.if %11 {
      %c0_10 = arith.constant 0 : index
      %c0_11 = arith.constant 0 : index
      %12 = vector.load %arg6[%c0_10, %c0_11] : memref<2x32xf32, #tpu.memory_space<vmem>>, vector<2x32xf32>
      %c0_12 = arith.constant 0 : index
      %c0_13 = arith.constant 0 : index
      %13 = vector.load %arg4[%c0_12, %c0_13] : memref<1x32xf32, #tpu.memory_space<vmem>>, vector<1x32xf32>
      %14 = vector.broadcast %13 : vector<1x32xf32> to vector<2x32xf32>
      %15 = arith.addf %12, %14 : vector<2x32xf32>
      %c0_14 = arith.constant 0 : index
      %c0_15 = arith.constant 0 : index
      %16 = vector.load %arg5[%c0_14, %c0_15] : memref<2x32xf32, #tpu.memory_space<vmem>>, vector<2x32xf32>
      tpu.vector_store %arg5[%c0_14, %c0_15], %15 {strides = array<i32>} : memref<2x32xf32, #tpu.memory_space<vmem>>, vector<2x32xf32>,
    } else {
    }
    return
  }
  func.func @transform_0(%arg0: i32, %arg1: i32) -> (i32, i32) {
    %c0_i32 = arith.constant 0 : i32
    %c0_i32_0 = arith.constant 0 : i32
    return %c0_i32, %arg1 : i32, i32
  }
  func.func @transform_1(%arg0: i32, %arg1: i32) -> (i32, i32) {
    %c0_i32 = arith.constant 0 : i32
    return %arg1, %arg0 : i32, i32
  }
  func.func @transform_2(%arg0: i32, %arg1: i32) -> (i32, i32) {
    %c0_i32 = arith.constant 0 : i32
    %c0_i32_0 = arith.constant 0 : i32
    return %c0_i32, %arg0 : i32, i32
  }
  func.func @transform_3(%arg0: i32, %arg1: i32) -> (i32, i32) {
    %c0_i32 = arith.constant 0 : i32
    %c0_i32_0 = arith.constant 0 : i32
    return %c0_i32, %arg0 : i32, i32
  }
}

module attributes {stable_mosaic.version = 11 : i64} {
  func.func @_conv_pool_kernel(%arg0: i32, %arg1: i32, %arg2: memref<1x4x12x72xbf16, #tpu.memory_space<vmem>>, %arg3: memref<72x16xbf16, #tpu.memory_space<vmem>>, %arg4: memref<1x16xf32, #tpu.memory_space<vmem>>, %arg5: memref<1x12x16xbf16, #tpu.memory_space<vmem>>) attributes {dimension_semantics = [#tpu.dimension_semantics<parallel>, #tpu.dimension_semantics<parallel>], iteration_bounds = array<i64: 2, 1>, scalar_prefetch = 0 : i64, scratch_operands = 0 : i64, tpu.core_type = #tpu.core_type<tc>, window_params = [{transform_indices = @transform_0, window_bounds = array<i64: 1, 4, 12, 72>}, {pipeline_mode = #tpu.pipeline_mode<synchronous>, transform_indices = @transform_1, window_bounds = array<i64: 72, 16>}, {pipeline_mode = #tpu.pipeline_mode<synchronous>, transform_indices = @transform_2, window_bounds = array<i64: 1, 16>}, {transform_indices = @transform_3, window_bounds = array<i64: 1, 12, 16>}]} {
    %c0 = arith.constant 0 : index
    %c0_0 = arith.constant 0 : index
    %0 = vector.load %arg3[%c0, %c0_0] : memref<72x16xbf16, #tpu.memory_space<vmem>>, vector<72x16xbf16>
    %c0_1 = arith.constant 0 : index
    %c0_2 = arith.constant 0 : index
    %1 = vector.load %arg4[%c0_1, %c0_2] : memref<1x16xf32, #tpu.memory_space<vmem>>, vector<1x16xf32>
    %c0_3 = arith.constant 0 : index
    %c0_4 = arith.constant 0 : index
    %c0_5 = arith.constant 0 : index
    %c0_6 = arith.constant 0 : index
    %2 = vector.load %arg2[%c0_3, %c0_4, %c0_5, %c0_6] : memref<1x4x12x72xbf16, #tpu.memory_space<vmem>>, vector<1x4x12x72xbf16>
    %3 = vector.shape_cast %2 : vector<1x4x12x72xbf16> to vector<4x12x72xbf16>
    %4 = vector.extract_strided_slice %3 {offsets = [0, 0, 0], sizes = [1, 12, 72], strides = [1, 1, 1]} : vector<4x12x72xbf16> to vector<1x12x72xbf16>
    %5 = vector.shape_cast %4 : vector<1x12x72xbf16> to vector<12x72xbf16>
    %cst = arith.constant dense<0.000000e+00> : vector<12x16xf32>
    %6 = tpu.matmul %5, %0, %cst {dimension_numbers = #tpu.dot_dimension_numbers<[1], [0], [0], [1], [0, 0, 1, 1], [], []>} : vector<12x72xbf16>, vector<72x16xbf16>, vector<12x16xf32> -> vector<12x16xf32>
    %7 = vector.broadcast %1 : vector<1x16xf32> to vector<12x16xf32>
    %8 = arith.addf %6, %7 : vector<12x16xf32>
    %cst_7 = arith.constant 0.000000e+00 : f32
    %9 = vector.broadcast %cst_7 : f32 to vector<12x16xf32>
    %10 = arith.cmpf ogt, %8, %9 : vector<12x16xf32>
    %cst_8 = arith.constant 2.000000e-01 : f32
    %11 = vector.broadcast %cst_8 : f32 to vector<12x16xf32>
    %12 = arith.mulf %11, %8 : vector<12x16xf32>
    %13 = arith.select %10, %8, %12 : vector<12x16xi1>, vector<12x16xf32>
    %14 = vector.extract_strided_slice %3 {offsets = [1, 0, 0], sizes = [1, 12, 72], strides = [1, 1, 1]} : vector<4x12x72xbf16> to vector<1x12x72xbf16>
    %15 = vector.shape_cast %14 : vector<1x12x72xbf16> to vector<12x72xbf16>
    %cst_9 = arith.constant dense<0.000000e+00> : vector<12x16xf32>
    %16 = tpu.matmul %15, %0, %cst_9 {dimension_numbers = #tpu.dot_dimension_numbers<[1], [0], [0], [1], [0, 0, 1, 1], [], []>} : vector<12x72xbf16>, vector<72x16xbf16>, vector<12x16xf32> -> vector<12x16xf32>
    %17 = vector.broadcast %1 : vector<1x16xf32> to vector<12x16xf32>
    %18 = arith.addf %16, %17 : vector<12x16xf32>
    %cst_10 = arith.constant 0.000000e+00 : f32
    %19 = vector.broadcast %cst_10 : f32 to vector<12x16xf32>
    %20 = arith.cmpf ogt, %18, %19 : vector<12x16xf32>
    %cst_11 = arith.constant 2.000000e-01 : f32
    %21 = vector.broadcast %cst_11 : f32 to vector<12x16xf32>
    %22 = arith.mulf %21, %18 : vector<12x16xf32>
    %23 = arith.select %20, %18, %22 : vector<12x16xi1>, vector<12x16xf32>
    %24 = arith.addf %13, %23 : vector<12x16xf32>
    %25 = vector.extract_strided_slice %3 {offsets = [2, 0, 0], sizes = [1, 12, 72], strides = [1, 1, 1]} : vector<4x12x72xbf16> to vector<1x12x72xbf16>
    %26 = vector.shape_cast %25 : vector<1x12x72xbf16> to vector<12x72xbf16>
    %cst_12 = arith.constant dense<0.000000e+00> : vector<12x16xf32>
    %27 = tpu.matmul %26, %0, %cst_12 {dimension_numbers = #tpu.dot_dimension_numbers<[1], [0], [0], [1], [0, 0, 1, 1], [], []>} : vector<12x72xbf16>, vector<72x16xbf16>, vector<12x16xf32> -> vector<12x16xf32>
    %28 = vector.broadcast %1 : vector<1x16xf32> to vector<12x16xf32>
    %29 = arith.addf %27, %28 : vector<12x16xf32>
    %cst_13 = arith.constant 0.000000e+00 : f32
    %30 = vector.broadcast %cst_13 : f32 to vector<12x16xf32>
    %31 = arith.cmpf ogt, %29, %30 : vector<12x16xf32>
    %cst_14 = arith.constant 2.000000e-01 : f32
    %32 = vector.broadcast %cst_14 : f32 to vector<12x16xf32>
    %33 = arith.mulf %32, %29 : vector<12x16xf32>
    %34 = arith.select %31, %29, %33 : vector<12x16xi1>, vector<12x16xf32>
    %35 = arith.addf %24, %34 : vector<12x16xf32>
    %36 = vector.extract_strided_slice %3 {offsets = [3, 0, 0], sizes = [1, 12, 72], strides = [1, 1, 1]} : vector<4x12x72xbf16> to vector<1x12x72xbf16>
    %37 = vector.shape_cast %36 : vector<1x12x72xbf16> to vector<12x72xbf16>
    %cst_15 = arith.constant dense<0.000000e+00> : vector<12x16xf32>
    %38 = tpu.matmul %37, %0, %cst_15 {dimension_numbers = #tpu.dot_dimension_numbers<[1], [0], [0], [1], [0, 0, 1, 1], [], []>} : vector<12x72xbf16>, vector<72x16xbf16>, vector<12x16xf32> -> vector<12x16xf32>
    %39 = vector.broadcast %1 : vector<1x16xf32> to vector<12x16xf32>
    %40 = arith.addf %38, %39 : vector<12x16xf32>
    %cst_16 = arith.constant 0.000000e+00 : f32
    %41 = vector.broadcast %cst_16 : f32 to vector<12x16xf32>
    %42 = arith.cmpf ogt, %40, %41 : vector<12x16xf32>
    %cst_17 = arith.constant 2.000000e-01 : f32
    %43 = vector.broadcast %cst_17 : f32 to vector<12x16xf32>
    %44 = arith.mulf %43, %40 : vector<12x16xf32>
    %45 = arith.select %42, %40, %44 : vector<12x16xi1>, vector<12x16xf32>
    %46 = arith.addf %35, %45 : vector<12x16xf32>
    %cst_18 = arith.constant 2.500000e-01 : f32
    %47 = vector.broadcast %cst_18 : f32 to vector<12x16xf32>
    %48 = arith.mulf %47, %46 : vector<12x16xf32>
    %49 = arith.truncf %48 : vector<12x16xf32> to vector<12x16xbf16>
    %c0_19 = arith.constant 0 : index
    %c0_20 = arith.constant 0 : index
    %c0_21 = arith.constant 0 : index
    %50 = vector.load %arg5[%c0_19, %c0_20, %c0_21] : memref<1x12x16xbf16, #tpu.memory_space<vmem>>, vector<1x12x16xbf16>
    %51 = vector.shape_cast %50 : vector<1x12x16xbf16> to vector<12x16xbf16>
    %52 = vector.shape_cast %49 : vector<12x16xbf16> to vector<1x12x16xbf16>
    tpu.vector_store %arg5[%c0_19, %c0_20, %c0_21], %52 {strides = array<i32>} : memref<1x12x16xbf16, #tpu.memory_space<vmem>>, vector<1x12x16xbf16>,
    return
  }
  func.func @transform_0(%arg0: i32, %arg1: i32) -> (i32, i32, i32, i32) {
    %c0_i32 = arith.constant 0 : i32
    %c0_i32_0 = arith.constant 0 : i32
    %c0_i32_1 = arith.constant 0 : i32
    return %arg0, %c0_i32, %arg1, %c0_i32_0 : i32, i32, i32, i32
  }
  func.func @transform_1(%arg0: i32, %arg1: i32) -> (i32, i32) {
    %c0_i32 = arith.constant 0 : i32
    %c0_i32_0 = arith.constant 0 : i32
    %c0_i32_1 = arith.constant 0 : i32
    return %c0_i32, %c0_i32_0 : i32, i32
  }
  func.func @transform_2(%arg0: i32, %arg1: i32) -> (i32, i32) {
    %c0_i32 = arith.constant 0 : i32
    %c0_i32_0 = arith.constant 0 : i32
    %c0_i32_1 = arith.constant 0 : i32
    return %c0_i32, %c0_i32_0 : i32, i32
  }
  func.func @transform_3(%arg0: i32, %arg1: i32) -> (i32, i32, i32) {
    %c0_i32 = arith.constant 0 : i32
    %c0_i32_0 = arith.constant 0 : i32
    return %arg0, %arg1, %c0_i32 : i32, i32, i32
  }
}

</mosaic_0001>

<llo_original>
// kernel: _lambda_.5
$region0: #{_lambda_.5}
  #allocation0 [shape = 'u32[]', space=smem, size = 0x4, offset = 0x4, fixed_abs, tag = 'smem constant byte address 0x4 - core index']
  #allocation1 [shape = 'u32[72,128]{1,0:T(1,128)}', space=vmem, size = 0x9000, scoped, tag = 'internal scratch']
  %s0 = inlined_call_operand.vmem [shape: bf16[2,768,9], index: 0, kind: input, shape index: {}]
  %s1 = inlined_call_operand.vmem [shape: bf16[9,4], index: 1, kind: input, shape index: {}]
  %s2 = inlined_call_operand.vmem [shape: f32[1,4], index: 2, kind: input, shape index: {}]
  %s3 = inlined_call_operand.vmem [shape: bf16[2,768,4], index: 3, kind: output, shape index: {}]
  %s4 = sld [smem:[#allocation0]]
  $region45: #{_lambda_.5} parent=0
    _
  %s6 = ssub.s32 1, %s4
  %s7 = scalar_select 0, %s6, %s4
  loop: start=0, step=1, limit=4
  $region2: #{_lambda_.5} parent=0 // loop_pre_header
    _
  $region3: #{_lambda_.5} parent=0 // loop_header
    %s9 = sphi 0, %s13
    %p10 = scmp.ge.s32.totalorder %s9, 4
    %s16 = sphi 0, %s28
    %s17 = sphi 0, %s24
    %s18 = sphi 0, %s16
    %s19 = sphi 0, %s17
    %s20 = sphi 0, %s18
    %s21 = sphi 0, %s19
    %s33 = sphi 0, %s35
    %s36 = sphi 0, %s33
    %s37 = sphi 0, %s36
    %s53 = sphi 0, %s37
    %s57 = sphi 0, %s57
    %s59 = sphi 0, %s57
    %s60 = sphi 0, %s59
    %s74 = sphi 0, %s60
    %s78 = sphi 0, %s78
    %s80 = sphi 0, %s78
    %s81 = sphi 0, %s80
    %s95 = sphi 0, %s81
    %s103 = sphi 0, %s105
    %s106 = sphi 0, %s103
    %s107 = sphi 0, %s106
    %s123 = sphi 0, %s107
  $region4: #{_lambda_.5} parent=0 // loop_header_branch
    %12 = sbr.rel (%p10) target = $region8
  $region5: #{_lambda_.5} parent=0 // loop_body
    %s14 = ssub.s32 %s9, 1
    %s15 = ssub.s32 %s9, 2
    %s22 = sadd.s32 1, %s17
    %p23 = scmp.ge.s32.totalorder %s22, 1
    %s24 = scalar_select %p23, 0, %s22
    %s25 = sadd.s32 1, %s16
    %s26 = scalar_select %p23, %s25, %s16
    %p27 = scmp.ge.s32.totalorder %s26, 2
    %s28 = scalar_select %p27, 0, %s26
    %s29 = ssub.s32 %s16, %s28
    %s30 = ssub.s32 %s17, %s24
    %s31 = sor.u32 %s29, %s30
    %p32 = scmp.eq.s32.totalorder %s31, 0
    %s34 = sadd.s32 %s33, 1
    %s35 = scalar_select %p32, %s33, %s34
    %p38 = pneg %p32
    %p39 = scmp.eq.s32.totalorder %s9, 1
    %p40 = por %p38, %p39
    %p41 = scmp.ne.s32.totalorder %s33, %s36
    %p42 = scmp.eq.s32.totalorder %s9, 0
    %p43 = por %p41, %p42
    %p44 = scmp.ne.s32.totalorder %s33, %s36
    %p45 = scmp.eq.s32.totalorder %s14, 1
    %p46 = por %p44, %p45
    %p47 = scmp.ne.s32.totalorder %s36, %s37
    %p48 = scmp.eq.s32.totalorder %s14, 0
    %p49 = por %p47, %p48
    %p50 = scmp.ne.s32.totalorder %s36, %s37
    %p51 = scmp.eq.s32.totalorder %s15, 1
    %p52 = por %p50, %p51
    %p54 = scmp.ne.s32.totalorder %s37, %s53
    %p55 = scmp.eq.s32.totalorder %s15, 0
    %p56 = por %p54, %p55
    %s58 = sadd.s32 %s57, 1
    %p61 = scmp.eq.s32.totalorder %s9, 1
    %p62 = scmp.ne.s32.totalorder %s57, %s59
    %p63 = scmp.eq.s32.totalorder %s9, 0
    %p64 = por %p62, %p63
    %p65 = scmp.ne.s32.totalorder %s57, %s59
    %p66 = scmp.eq.s32.totalorder %s14, 1
    %p67 = por %p65, %p66
    %p68 = scmp.ne.s32.totalorder %s59, %s60
    %p69 = scmp.eq.s32.totalorder %s14, 0
    %p70 = por %p68, %p69
    %p71 = scmp.ne.s32.totalorder %s59, %s60
    %p72 = scmp.eq.s32.totalorder %s15, 1
    %p73 = por %p71, %p72
    %p75 = scmp.ne.s32.totalorder %s60, %s74
    %p76 = scmp.eq.s32.totalorder %s15, 0
    %p77 = por %p75, %p76
    %s79 = sadd.s32 %s78, 1
    %p82 = scmp.eq.s32.totalorder %s9, 1
    %p83 = scmp.ne.s32.totalorder %s78, %s80
    %p84 = scmp.eq.s32.totalorder %s9, 0
    %p85 = por %p83, %p84
    %p86 = scmp.ne.s32.totalorder %s78, %s80
    %p87 = scmp.eq.s32.totalorder %s14, 1
    %p88 = por %p86, %p87
    %p89 = scmp.ne.s32.totalorder %s80, %s81
    %p90 = scmp.eq.s32.totalorder %s14, 0
    %p91 = por %p89, %p90
    %p92 = scmp.ne.s32.totalorder %s80, %s81
    %p93 = scmp.eq.s32.totalorder %s15, 1
    %p94 = por %p92, %p93
    %p96 = scmp.ne.s32.totalorder %s81, %s95
    %p97 = scmp.eq.s32.totalorder %s15, 0
    %p98 = por %p96, %p97
    %s99 = ssub.s32 %s16, %s28
    %s100 = ssub.s32 %s17, %s24
    %s101 = sor.u32 %s99, %s100
    %p102 = scmp.eq.s32.totalorder %s101, 0
    %s104 = sadd.s32 %s103, 1
    %s105 = scalar_select %p102, %s103, %s104
    %p108 = pneg %p102
    %p109 = scmp.eq.s32.totalorder %s9, 1
    %p110 = por %p108, %p109
    %p111 = scmp.ne.s32.totalorder %s103, %s106
    %p112 = scmp.eq.s32.totalorder %s9, 0
    %p113 = por %p111, %p112
    %p114 = scmp.ne.s32.totalorder %s103, %s106
    %p115 = scmp.eq.s32.totalorder %s14, 1
    %p116 = por %p114, %p115
    %p117 = scmp.ne.s32.totalorder %s106, %s107
    %p118 = scmp.eq.s32.totalorder %s14, 0
    %p119 = por %p117, %p118
    %p120 = scmp.ne.s32.totalorder %s106, %s107
    %p121 = scmp.eq.s32.totalorder %s15, 1
    %p122 = por %p120, %p121
    %p124 = scmp.ne.s32.totalorder %s107, %s123
    %p125 = scmp.eq.s32.totalorder %s15, 0
    %p126 = por %p124, %p125
    %p127 = scmp.le.s32.totalorder 1, %s9
    %p128 = scmp.lt.s32.totalorder %s9, 3
    %p129 = pnand %p127, %p128
    %p130 = pneg %p129
    // Predicated region
    $region9: #{_lambda_.5} parent=5 // pred_check
      _
    $region10: #{_lambda_.5} parent=5 // pred_check_branch
      %132 = sbr.rel (%p129) target = $region12
    $region11: #{_lambda_.5} parent=5 // pred_region
      %s133 = ssub.s32 %s9, 1
      // Predicated region
      $region13: #{_lambda_.5} parent=11 // pred_check
        %p134 = pneg %p70
      $region14: #{_lambda_.5} parent=11 // pred_check_branch
        %136 = sbr.rel (%p134) target = $region16
      $region15: #{_lambda_.5} parent=11 // pred_region
        _
      $region16: #{_lambda_.5} parent=11 // pred_fallthru
        _
      // Predicated region
      $region17: #{_lambda_.5} parent=11 // pred_check
        %p137 = pneg %p91
      $region18: #{_lambda_.5} parent=11 // pred_check_branch
        %139 = sbr.rel (%p137) target = $region20
      $region19: #{_lambda_.5} parent=11 // pred_region
        _
      $region20: #{_lambda_.5} parent=11 // pred_fallthru
        _
    $region12: #{_lambda_.5} parent=5 // pred_fallthru
      _
    %p140 = scmp.lt.s32.totalorder %s9, 2
    // Predicated region
    $region21: #{_lambda_.5} parent=5 // pred_check
      %p141 = pneg %p140
    $region22: #{_lambda_.5} parent=5 // pred_check_branch
      %143 = sbr.rel (%p141) target = $region24
    $region23: #{_lambda_.5} parent=5 // pred_region
      // Predicated region
      $region25: #{_lambda_.5} parent=23 // pred_check
        %p144 = pneg %p43
      $region26: #{_lambda_.5} parent=23 // pred_check_branch
        %146 = sbr.rel (%p144) target = $region28
      $region27: #{_lambda_.5} parent=23 // pred_region
        %s147 = smul.u32 96, %s17
        %p148 = scmp.lt.s32.totalorder %s16, 1
        %s149 = scalar_select %p148, %s16, 1
        %p150 = scmp.lt.s32.totalorder %s147, 95
        %s151 = scalar_select %p150, %s147, 95
        %s152 = smul.addr %s149, 96
        %s153 = sadd.s32 %s151, %s152
        %s154 = smul.addr %s153, 4
        %s155 = scalar_lea.vmem %s0, %s154
        %s156 = smul.u32 96, %s17
      $region28: #{_lambda_.5} parent=23 // pred_fallthru
        _
    $region24: #{_lambda_.5} parent=5 // pred_fallthru
      _
    %p157 = scmp.le.s32.totalorder 1, %s9
    %p158 = scmp.lt.s32.totalorder %s9, 3
    %p159 = pnand %p157, %p158
    %p160 = pneg %p159
    // Predicated region
    $region29: #{_lambda_.5} parent=5 // pred_check
      _
    $region30: #{_lambda_.5} parent=5 // pred_check_branch
      %162 = sbr.rel (%p159) target = $region32
    $region31: #{_lambda_.5} parent=5 // pred_region
      %s163 = ssub.s32 %s9, 1
      %s164 = smul.u32 96, %s19
      %p165 = scmp.lt.s32.totalorder %s18, 1
      %s166 = scalar_select %p165, %s18, 1
      %p167 = scmp.lt.s32.totalorder %s164, 95
      %s168 = scalar_select %p167, %s164, 95
      %s169 = smul.addr %s166, 96
      %s170 = sadd.s32 %s168, %s169
      %s171 = smul.addr %s170, 4
      %s172 = scalar_lea.vmem %s0, %s171
      %p173 = pneg %p49
      %p174 = pneg %p46
      %p175 = pneg %p70
      %p176 = pneg %p67
      %p177 = pneg %p91
      %p178 = pneg %p88
      %p179 = pneg %p119
      %p180 = pneg %p116
      %s181 = smul.u32 96, %s19
      %p182 = scmp.lt.s32.totalorder %s18, 1
      %s183 = scalar_select %p182, %s18, 1
      %p184 = scmp.lt.s32.totalorder %s181, 95
      %s185 = scalar_select %p184, %s181, 95
      %s186 = smul.addr %s183, 96
      %s187 = sadd.s32 %s185, %s186
      %s188 = smul.addr %s187, 4
      %s189 = scalar_lea.vmem %s3, %s188
      %s190 = smul.u32 96, %s19
      %p191 = scmp.lt.s32.totalorder %s18, 1
      %s192 = scalar_select %p191, %s18, 1
      %p193 = scmp.lt.s32.totalorder %s190, 95
      %s194 = scalar_select %p193, %s190, 95
      %s195 = smul.addr %s192, 96
      %s196 = sadd.s32 %s194, %s195
      %s197 = smul.addr %s196, 4
      %s198 = scalar_lea.vmem %s0, %s197
      %s199 = smul.u32 96, %s19
      %s200 = smul.u32 96, %s19
      %p201 = scmp.lt.s32.totalorder %s18, 1
      %s202 = scalar_select %p201, %s18, 1
      %p203 = scmp.lt.s32.totalorder %s200, 95
      %s204 = scalar_select %p203, %s200, 95
      %s205 = smul.addr %s202, 96
      %s206 = sadd.s32 %s204, %s205
      %s207 = smul.addr %s206, 4
      %s208 = scalar_lea.vmem %s3, %s207
      %s209 = smul.u32 96, %s19
      %v211 = vld [vmem:[%s198] sm:$0xf]
      %v212 = vld [vmem:[%s198 + $0x4] sm:$0xf]
      %v213 = vld [vmem:[%s198 + $0x8] sm:$0xf]
      %v214 = vld [vmem:[%s198 + $0xc] sm:$0xf]
      %v215 = vld [vmem:[%s198 + $0x10] sm:$0xf]
      %v216 = vld [vmem:[%s198 + $0x14] sm:$0xf]
      %v217 = vld [vmem:[%s198 + $0x18] sm:$0xf]
      %v218 = vld [vmem:[%s198 + $0x1c] sm:$0xf]
      %v219 = vld [vmem:[%s198 + $0x20] sm:$0xf]
      %v220 = vld [vmem:[%s198 + $0x24] sm:$0xf]
      %v221 = vld [vmem:[%s198 + $0x28] sm:$0xf]
      %v222 = vld [vmem:[%s198 + $0x2c] sm:$0xf]
      %v223 = vld [vmem:[%s198 + $0x30] sm:$0xf]
      %v224 = vld [vmem:[%s198 + $0x34] sm:$0xf]
      %v225 = vld [vmem:[%s198 + $0x38] sm:$0xf]
      %v226 = vld [vmem:[%s198 + $0x3c] sm:$0xf]
      %v227 = vld [vmem:[%s198 + $0x40] sm:$0xf]
      %v228 = vld [vmem:[%s198 + $0x44] sm:$0xf]
      %v229 = vld [vmem:[%s198 + $0x48] sm:$0xf]
      %v230 = vld [vmem:[%s198 + $0x4c] sm:$0xf]
      %v231 = vld [vmem:[%s198 + $0x50] sm:$0xf]
      %v232 = vld [vmem:[%s198 + $0x54] sm:$0xf]
      %v233 = vld [vmem:[%s198 + $0x58] sm:$0xf]
      %v234 = vld [vmem:[%s198 + $0x5c] sm:$0xf]
      %v235 = vld [vmem:[%s198 + $0x60] sm:$0xf]
      %v236 = vld [vmem:[%s198 + $0x64] sm:$0xf]
      %v237 = vld [vmem:[%s198 + $0x68] sm:$0xf]
      %v238 = vld [vmem:[%s198 + $0x6c] sm:$0xf]
      %v239 = vld [vmem:[%s198 + $0x70] sm:$0xf]
      %v240 = vld [vmem:[%s198 + $0x74] sm:$0xf]
      %v241 = vld [vmem:[%s198 + $0x78] sm:$0xf]
      %v242 = vld [vmem:[%s198 + $0x7c] sm:$0xf]
      %v243 = vld [vmem:[%s198 + $0x80] sm:$0xf]
      %v244 = vld [vmem:[%s198 + $0x84] sm:$0xf]
      %v245 = vld [vmem:[%s198 + $0x88] sm:$0xf]
      %v246 = vld [vmem:[%s198 + $0x8c] sm:$0xf]
      %v247 = vld [vmem:[%s198 + $0x90] sm:$0xf]
      %v248 = vld [vmem:[%s198 + $0x94] sm:$0xf]
      %v249 = vld [vmem:[%s198 + $0x98] sm:$0xf]
      %v250 = vld [vmem:[%s198 + $0x9c] sm:$0xf]
      %v251 = vld [vmem:[%s198 + $0xa0] sm:$0xf]
      %v252 = vld [vmem:[%s198 + $0xa4] sm:$0xf]
      %v253 = vld [vmem:[%s198 + $0xa8] sm:$0xf]
      %v254 = vld [vmem:[%s198 + $0xac] sm:$0xf]
      %v255 = vld [vmem:[%s198 + $0xb0] sm:$0xf]
      %v256 = vld [vmem:[%s198 + $0xb4] sm:$0xf]
      %v257 = vld [vmem:[%s198 + $0xb8] sm:$0xf]
      %v258 = vld [vmem:[%s198 + $0xbc] sm:$0xf]
      %v259 = vld [vmem:[%s198 + $0xc0] sm:$0xf]
      %v260 = vld [vmem:[%s198 + $0xc4] sm:$0xf]
      %v261 = vld [vmem:[%s198 + $0xc8] sm:$0xf]
      %v262 = vld [vmem:[%s198 + $0xcc] sm:$0xf]
      %v263 = vld [vmem:[%s198 + $0xd0] sm:$0xf]
      %v264 = vld [vmem:[%s198 + $0xd4] sm:$0xf]
      %v265 = vld [vmem:[%s198 + $0xd8] sm:$0xf]
      %v266 = vld [vmem:[%s198 + $0xdc] sm:$0xf]
      %v267 = vld [vmem:[%s198 + $0xe0] sm:$0xf]
      %v268 = vld [vmem:[%s198 + $0xe4] sm:$0xf]
      %v269 = vld [vmem:[%s198 + $0xe8] sm:$0xf]
      %v270 = vld [vmem:[%s198 + $0xec] sm:$0xf]
      %v271 = vld [vmem:[%s198 + $0xf0] sm:$0xf]
      %v272 = vld [vmem:[%s198 + $0xf4] sm:$0xf]
      %v273 = vld [vmem:[%s198 + $0xf8] sm:$0xf]
      %v274 = vld [vmem:[%s198 + $0xfc] sm:$0xf]
      %v275 = vld [vmem:[%s198 + $0x100] sm:$0xf]
      %v276 = vld [vmem:[%s198 + $0x104] sm:$0xf]
      %v277 = vld [vmem:[%s198 + $0x108] sm:$0xf]
      %v278 = vld [vmem:[%s198 + $0x10c] sm:$0xf]
      %v279 = vld [vmem:[%s198 + $0x110] sm:$0xf]
      %v280 = vld [vmem:[%s198 + $0x114] sm:$0xf]
      %v281 = vld [vmem:[%s198 + $0x118] sm:$0xf]
      %v282 = vld [vmem:[%s198 + $0x11c] sm:$0xf]
      %v283 = vld [vmem:[%s198 + $0x120] sm:$0xf]
      %v284 = vld [vmem:[%s198 + $0x124] sm:$0xf]
      %v285 = vld [vmem:[%s198 + $0x128] sm:$0xf]
      %v286 = vld [vmem:[%s198 + $0x12c] sm:$0xf]
      %v287 = vld [vmem:[%s198 + $0x130] sm:$0xf]
      %v288 = vld [vmem:[%s198 + $0x134] sm:$0xf]
      %v289 = vld [vmem:[%s198 + $0x138] sm:$0xf]
      %v290 = vld [vmem:[%s198 + $0x13c] sm:$0xf]
      %v291 = vld [vmem:[%s198 + $0x140] sm:$0xf]
      %v292 = vld [vmem:[%s198 + $0x144] sm:$0xf]
      %v293 = vld [vmem:[%s198 + $0x148] sm:$0xf]
      %v294 = vld [vmem:[%s198 + $0x14c] sm:$0xf]
      %v295 = vld [vmem:[%s198 + $0x150] sm:$0xf]
      %v296 = vld [vmem:[%s198 + $0x154] sm:$0xf]
      %v297 = vld [vmem:[%s198 + $0x158] sm:$0xf]
      %v298 = vld [vmem:[%s198 + $0x15c] sm:$0xf]
      %v299 = vld [vmem:[%s198 + $0x160] sm:$0xf]
      %v300 = vld [vmem:[%s198 + $0x164] sm:$0xf]
      %v301 = vld [vmem:[%s198 + $0x168] sm:$0xf]
      %v302 = vld [vmem:[%s198 + $0x16c] sm:$0xf]
      %v303 = vld [vmem:[%s198 + $0x170] sm:$0xf]
      %v304 = vld [vmem:[%s198 + $0x174] sm:$0xf]
      %v305 = vld [vmem:[%s198 + $0x178] sm:$0xf]
      %v306 = vld [vmem:[%s198 + $0x17c] sm:$0xf]
      %v307 = vld [vmem:[%s1] sm:$0xf]
      %v308 = vld [vmem:[%s1 + $0x4] sm:$0x1]
      %v309 = vld [vmem:[%s2] sm:$0x1]
      %v311 = vperm.slane %v309, 0
      %v409 = vunpack.c.l.b16 %v211
      %v410 = vunpack.c.l.b16 %v212
      %v411 = vunpack.c.l.b16 %v213
      %v412 = vunpack.c.l.b16 %v214
      %v413 = vunpack.c.l.b16 %v215
      %v414 = vunpack.c.l.b16 %v216
      %v415 = vunpack.c.l.b16 %v217
      %v416 = vunpack.c.l.b16 %v218
      %v417 = vunpack.c.l.b16 %v219
      %v418 = vunpack.c.l.b16 %v220
      %v419 = vunpack.c.l.b16 %v221
      %v420 = vunpack.c.l.b16 %v222
      %v421 = vunpack.c.l.b16 %v223
      %v422 = vunpack.c.l.b16 %v224
      %v423 = vunpack.c.l.b16 %v225
      %v424 = vunpack.c.l.b16 %v226
      %v425 = vunpack.c.l.b16 %v227
      %v426 = vunpack.c.l.b16 %v228
      %v427 = vunpack.c.l.b16 %v229
      %v428 = vunpack.c.l.b16 %v230
      %v429 = vunpack.c.l.b16 %v231
      %v430 = vunpack.c.l.b16 %v232
      %v431 = vunpack.c.l.b16 %v233
      %v432 = vunpack.c.l.b16 %v234
      %v433 = vunpack.c.l.b16 %v235
      %v434 = vunpack.c.l.b16 %v236
      %v435 = vunpack.c.l.b16 %v237
      %v436 = vunpack.c.l.b16 %v238
      %v437 = vunpack.c.l.b16 %v239
      %v438 = vunpack.c.l.b16 %v240
      %v439 = vunpack.c.l.b16 %v241
      %v440 = vunpack.c.l.b16 %v242
      %v441 = vunpack.c.l.b16 %v243
      %v442 = vunpack.c.l.b16 %v244
      %v443 = vunpack.c.l.b16 %v245
      %v444 = vunpack.c.l.b16 %v246
      %v445 = vunpack.c.l.b16 %v247
      %v446 = vunpack.c.l.b16 %v248
      %v447 = vunpack.c.l.b16 %v249
      %v448 = vunpack.c.l.b16 %v250
      %v449 = vunpack.c.l.b16 %v251
      %v450 = vunpack.c.l.b16 %v252
      %v451 = vunpack.c.l.b16 %v253
      %v452 = vunpack.c.l.b16 %v254
      %v453 = vunpack.c.l.b16 %v255
      %v454 = vunpack.c.l.b16 %v256
      %v455 = vunpack.c.l.b16 %v257
      %v456 = vunpack.c.l.b16 %v258
      %v457 = vunpack.c.l.b16 %v259
      %v458 = vunpack.c.l.b16 %v260
      %v459 = vunpack.c.l.b16 %v261
      %v460 = vunpack.c.l.b16 %v262
      %v461 = vunpack.c.l.b16 %v263
      %v462 = vunpack.c.l.b16 %v264
      %v463 = vunpack.c.l.b16 %v265
      %v464 = vunpack.c.l.b16 %v266
      %v465 = vunpack.c.l.b16 %v267
      %v466 = vunpack.c.l.b16 %v268
      %v467 = vunpack.c.l.b16 %v269
      %v468 = vunpack.c.l.b16 %v270
      %v469 = vunpack.c.l.b16 %v271
      %v470 = vunpack.c.l.b16 %v272
      %v471 = vunpack.c.l.b16 %v273
      %v472 = vunpack.c.l.b16 %v274
      %v473 = vunpack.c.l.b16 %v275
      %v474 = vunpack.c.l.b16 %v276
      %v475 = vunpack.c.l.b16 %v277
      %v476 = vunpack.c.l.b16 %v278
      %v477 = vunpack.c.l.b16 %v279
      %v478 = vunpack.c.l.b16 %v280
      %v479 = vunpack.c.l.b16 %v281
      %v480 = vunpack.c.l.b16 %v282
      %v481 = vunpack.c.l.b16 %v283
      %v482 = vunpack.c.l.b16 %v284
      %v483 = vunpack.c.l.b16 %v285
      %v484 = vunpack.c.l.b16 %v286
      %v485 = vunpack.c.l.b16 %v287
      %v486 = vunpack.c.l.b16 %v288
      %v487 = vunpack.c.l.b16 %v289
      %v488 = vunpack.c.l.b16 %v290
      %v489 = vunpack.c.l.b16 %v291
      %v490 = vunpack.c.l.b16 %v292
      %v491 = vunpack.c.l.b16 %v293
      %v492 = vunpack.c.l.b16 %v294
      %v493 = vunpack.c.l.b16 %v295
      %v494 = vunpack.c.l.b16 %v296
      %v495 = vunpack.c.l.b16 %v297
      %v496 = vunpack.c.l.b16 %v298
      %v497 = vunpack.c.l.b16 %v299
      %v498 = vunpack.c.l.b16 %v300
      %v499 = vunpack.c.l.b16 %v301
      %v500 = vunpack.c.l.b16 %v302
      %v501 = vunpack.c.l.b16 %v303
      %v502 = vunpack.c.l.b16 %v304
      %v503 = vunpack.c.l.b16 %v305
      %v504 = vunpack.c.l.b16 %v306
      %v505 = vpack.c.b16 %v410, %v409
      %v506 = vpack.c.b16 %v412, %v411
      %v507 = vpack.c.b16 %v414, %v413
      %v508 = vpack.c.b16 %v416, %v415
      %v509 = vpack.c.b16 %v418, %v417
      %v510 = vpack.c.b16 %v420, %v419
      %v511 = vpack.c.b16 %v422, %v421
      %v512 = vpack.c.b16 %v424, %v423
      %v513 = vpack.c.b16 %v426, %v425
      %v514 = vpack.c.b16 %v428, %v427
      %v515 = vpack.c.b16 %v430, %v429
      %v516 = vpack.c.b16 %v432, %v431
      %v517 = vpack.c.b16 %v434, %v433
      %v518 = vpack.c.b16 %v436, %v435
      %v519 = vpack.c.b16 %v438, %v437
      %v520 = vpack.c.b16 %v440, %v439
      %v521 = vpack.c.b16 %v442, %v441
      %v522 = vpack.c.b16 %v444, %v443
      %v523 = vpack.c.b16 %v446, %v445
      %v524 = vpack.c.b16 %v448, %v447
      %v525 = vpack.c.b16 %v450, %v449
      %v526 = vpack.c.b16 %v452, %v451
      %v527 = vpack.c.b16 %v454, %v453
      %v528 = vpack.c.b16 %v456, %v455
      %v529 = vpack.c.b16 %v458, %v457
      %v530 = vpack.c.b16 %v460, %v459
      %v531 = vpack.c.b16 %v462, %v461
      %v532 = vpack.c.b16 %v464, %v463
      %v533 = vpack.c.b16 %v466, %v465
      %v534 = vpack.c.b16 %v468, %v467
      %v535 = vpack.c.b16 %v470, %v469
      %v536 = vpack.c.b16 %v472, %v471
      %v537 = vpack.c.b16 %v474, %v473
      %v538 = vpack.c.b16 %v476, %v475
      %v539 = vpack.c.b16 %v478, %v477
      %v540 = vpack.c.b16 %v480, %v479
      %v541 = vpack.c.b16 %v482, %v481
      %v542 = vpack.c.b16 %v484, %v483
      %v543 = vpack.c.b16 %v486, %v485
      %v544 = vpack.c.b16 %v488, %v487
      %v545 = vpack.c.b16 %v490, %v489
      %v546 = vpack.c.b16 %v492, %v491
      %v547 = vpack.c.b16 %v494, %v493
      %v548 = vpack.c.b16 %v496, %v495
      %v549 = vpack.c.b16 %v498, %v497
      %v550 = vpack.c.b16 %v500, %v499
      %v551 = vpack.c.b16 %v502, %v501
      %v552 = vpack.c.b16 %v504, %v503
      %v555 = vunpack.c.l.b16 %v307
      %v556 = vunpack.c.l.b16 %v308
      %v557 = vpack.c.b16 %v556, %v555
      %vm558 = vcmask 72704
      %v560 = vsel %vm558, %v505, 0
      %v563 = vsel %vm558, %v506, 0
      %v566 = vsel %vm558, %v507, 0
      %v569 = vsel %vm558, %v508, 0
      %v572 = vsel %vm558, %v509, 0
      %v575 = vsel %vm558, %v510, 0
      %v578 = vsel %vm558, %v511, 0
      %v581 = vsel %vm558, %v512, 0
      %v584 = vsel %vm558, %v513, 0
      %v587 = vsel %vm558, %v514, 0
      %v590 = vsel %vm558, %v515, 0
      %v593 = vsel %vm558, %v516, 0
      %v596 = vsel %vm558, %v517, 0
      %v599 = vsel %vm558, %v518, 0
      %v602 = vsel %vm558, %v519, 0
      %v605 = vsel %vm558, %v520, 0
      %v608 = vsel %vm558, %v521, 0
      %v611 = vsel %vm558, %v522, 0
      %v614 = vsel %vm558, %v523, 0
      %v617 = vsel %vm558, %v524, 0
      %v620 = vsel %vm558, %v525, 0
      %v623 = vsel %vm558, %v526, 0
      %v626 = vsel %vm558, %v527, 0
      %v629 = vsel %vm558, %v528, 0
      %v632 = vsel %vm558, %v529, 0
      %v635 = vsel %vm558, %v530, 0
      %v638 = vsel %vm558, %v531, 0
      %v641 = vsel %vm558, %v532, 0
      %v644 = vsel %vm558, %v533, 0
      %v647 = vsel %vm558, %v534, 0
      %v650 = vsel %vm558, %v535, 0
      %v653 = vsel %vm558, %v536, 0
      %v656 = vsel %vm558, %v537, 0
      %v659 = vsel %vm558, %v538, 0
      %v662 = vsel %vm558, %v539, 0
      %v665 = vsel %vm558, %v540, 0
      %v668 = vsel %vm558, %v541, 0
      %v671 = vsel %vm558, %v542, 0
      %v674 = vsel %vm558, %v543, 0
      %v677 = vsel %vm558, %v544, 0
      %v680 = vsel %vm558, %v545, 0
      %v683 = vsel %vm558, %v546, 0
      %v686 = vsel %vm558, %v547, 0
      %v689 = vsel %vm558, %v548, 0
      %v692 = vsel %vm558, %v549, 0
      %v695 = vsel %vm558, %v550, 0
      %v698 = vsel %vm558, %v551, 0
      %v701 = vsel %vm558, %v552, 0
      %vm703 = vcmask 1043456
      %vm704 = vcmask 1044480
      %v705 = vsel %vm703, 4294967295, 65535
      %v706 = vsel %vm704, %v705, 0
      %v708 = vand.u32 %v557, %v706
      %710 = vmatpush.bf16.msra.mxu0 0
      %711 = vmatpush.bf16.msra.mxu0 0
      %712 = vmatpush.bf16.msra.mxu0 0
      %713 = vmatpush.bf16.msra.mxu0 0
      %714 = vmatpush.bf16.msra.mxu0 0
      %715 = vmatpush.bf16.msra.mxu0 0
      %716 = vmatpush.bf16.msra.mxu0 0
      %717 = vmatpush.bf16.msra.mxu0 %v708
      %718 = vmatmul.bf16.gmra.mxu0 %v560
      %v719 = vpop.f32.mrf.mxu0
      %v720 = vadd.f32 %v311, %v719
      %v721 = vpop.f32.mrf.mxu0
      %v722 = vadd.f32 %v311, %v721
      %723 = vmatmul.bf16.gmra.mxu0 %v563
      %v724 = vpop.f32.mrf.mxu0
      %v725 = vadd.f32 %v311, %v724
      %v726 = vpop.f32.mrf.mxu0
      %v727 = vadd.f32 %v311, %v726
      %728 = vmatmul.bf16.gmra.mxu0 %v566
      %v729 = vpop.f32.mrf.mxu0
      %v730 = vadd.f32 %v311, %v729
      %v731 = vpop.f32.mrf.mxu0
      %v732 = vadd.f32 %v311, %v731
      %733 = vmatmul.bf16.gmra.mxu0 %v569
      %v734 = vpop.f32.mrf.mxu0
      %v735 = vadd.f32 %v311, %v734
      %v736 = vpop.f32.mrf.mxu0
      %v737 = vadd.f32 %v311, %v736
      %738 = vmatmul.bf16.gmra.mxu0 %v572
      %v739 = vpop.f32.mrf.mxu0
      %v740 = vadd.f32 %v311, %v739
      %v741 = vpop.f32.mrf.mxu0
      %v742 = vadd.f32 %v311, %v741
      %743 = vmatmul.bf16.gmra.mxu0 %v575
      %v744 = vpop.f32.mrf.mxu0
      %v745 = vadd.f32 %v311, %v744
      %v746 = vpop.f32.mrf.mxu0
      %v747 = vadd.f32 %v311, %v746
      %748 = vmatmul.bf16.gmra.mxu0 %v578
      %v749 = vpop.f32.mrf.mxu0
      %v750 = vadd.f32 %v311, %v749
      %v751 = vpop.f32.mrf.mxu0
      %v752 = vadd.f32 %v311, %v751
      %753 = vmatmul.bf16.gmra.mxu0 %v581
      %v754 = vpop.f32.mrf.mxu0
      %v755 = vadd.f32 %v311, %v754
      %v756 = vpop.f32.mrf.mxu0
      %v757 = vadd.f32 %v311, %v756
      %758 = vmatmul.bf16.gmra.mxu0 %v584
      %v759 = vpop.f32.mrf.mxu0
      %v760 = vadd.f32 %v311, %v759
      %v761 = vpop.f32.mrf.mxu0
      %v762 = vadd.f32 %v311, %v761
      %763 = vmatmul.bf16.gmra.mxu0 %v587
      %v764 = vpop.f32.mrf.mxu0
      %v765 = vadd.f32 %v311, %v764
      %v766 = vpop.f32.mrf.mxu0
      %v767 = vadd.f32 %v311, %v766
      %768 = vmatmul.bf16.gmra.mxu0 %v590
      %v769 = vpop.f32.mrf.mxu0
      %v770 = vadd.f32 %v311, %v769
      %v771 = vpop.f32.mrf.mxu0
      %v772 = vadd.f32 %v311, %v771
      %773 = vmatmul.bf16.gmra.mxu0 %v593
      %v774 = vpop.f32.mrf.mxu0
      %v775 = vadd.f32 %v311, %v774
      %v776 = vpop.f32.mrf.mxu0
      %v777 = vadd.f32 %v311, %v776
      %778 = vmatmul.bf16.gmra.mxu0 %v596
      %v779 = vpop.f32.mrf.mxu0
      %v780 = vadd.f32 %v311, %v779
      %v781 = vpop.f32.mrf.mxu0
      %v782 = vadd.f32 %v311, %v781
      %783 = vmatmul.bf16.gmra.mxu0 %v599
      %v784 = vpop.f32.mrf.mxu0
      %v785 = vadd.f32 %v311, %v784
      %v786 = vpop.f32.mrf.mxu0
      %v787 = vadd.f32 %v311, %v786
      %788 = vmatmul.bf16.gmra.mxu0 %v602
      %v789 = vpop.f32.mrf.mxu0
      %v790 = vadd.f32 %v311, %v789
      %v791 = vpop.f32.mrf.mxu0
      %v792 = vadd.f32 %v311, %v791
      %793 = vmatmul.bf16.gmra.mxu0 %v605
      %v794 = vpop.f32.mrf.mxu0
      %v795 = vadd.f32 %v311, %v794
      %v796 = vpop.f32.mrf.mxu0
      %v797 = vadd.f32 %v311, %v796
      %798 = vmatmul.bf16.gmra.mxu0 %v608
      %v799 = vpop.f32.mrf.mxu0
      %v800 = vadd.f32 %v311, %v799
      %v801 = vpop.f32.mrf.mxu0
      %v802 = vadd.f32 %v311, %v801
      %803 = vmatmul.bf16.gmra.mxu0 %v611
      %v804 = vpop.f32.mrf.mxu0
      %v805 = vadd.f32 %v311, %v804
      %v806 = vpop.f32.mrf.mxu0
      %v807 = vadd.f32 %v311, %v806
      %808 = vmatmul.bf16.gmra.mxu0 %v614
      %v809 = vpop.f32.mrf.mxu0
      %v810 = vadd.f32 %v311, %v809
      %v811 = vpop.f32.mrf.mxu0
      %v812 = vadd.f32 %v311, %v811
      %813 = vmatmul.bf16.gmra.mxu0 %v617
      %v814 = vpop.f32.mrf.mxu0
      %v815 = vadd.f32 %v311, %v814
      %v816 = vpop.f32.mrf.mxu0
      %v817 = vadd.f32 %v311, %v816
      %818 = vmatmul.bf16.gmra.mxu0 %v620
      %v819 = vpop.f32.mrf.mxu0
      %v820 = vadd.f32 %v311, %v819
      %v821 = vpop.f32.mrf.mxu0
      %v822 = vadd.f32 %v311, %v821
      %823 = vmatmul.bf16.gmra.mxu0 %v623
      %v824 = vpop.f32.mrf.mxu0
      %v825 = vadd.f32 %v311, %v824
      %v826 = vpop.f32.mrf.mxu0
      %v827 = vadd.f32 %v311, %v826
      %828 = vmatmul.bf16.gmra.mxu0 %v626
      %v829 = vpop.f32.mrf.mxu0
      %v830 = vadd.f32 %v311, %v829
      %v831 = vpop.f32.mrf.mxu0
      %v832 = vadd.f32 %v311, %v831
      %833 = vmatmul.bf16.gmra.mxu0 %v629
      %v834 = vpop.f32.mrf.mxu0
      %v835 = vadd.f32 %v311, %v834
      %v836 = vpop.f32.mrf.mxu0
      %v837 = vadd.f32 %v311, %v836
      %838 = vmatmul.bf16.gmra.mxu0 %v632
      %v839 = vpop.f32.mrf.mxu0
      %v840 = vadd.f32 %v311, %v839
      %v841 = vpop.f32.mrf.mxu0
      %v842 = vadd.f32 %v311, %v841
      %843 = vmatmul.bf16.gmra.mxu0 %v635
      %v844 = vpop.f32.mrf.mxu0
      %v845 = vadd.f32 %v311, %v844
      %v846 = vpop.f32.mrf.mxu0
      %v847 = vadd.f32 %v311, %v846
      %848 = vmatmul.bf16.gmra.mxu0 %v638
      %v849 = vpop.f32.mrf.mxu0
      %v850 = vadd.f32 %v311, %v849
      %v851 = vpop.f32.mrf.mxu0
      %v852 = vadd.f32 %v311, %v851
      %853 = vmatmul.bf16.gmra.mxu0 %v641
      %v854 = vpop.f32.mrf.mxu0
      %v855 = vadd.f32 %v311, %v854
      %v856 = vpop.f32.mrf.mxu0
      %v857 = vadd.f32 %v311, %v856
      %858 = vmatmul.bf16.gmra.mxu0 %v644
      %v859 = vpop.f32.mrf.mxu0
      %v860 = vadd.f32 %v311, %v859
      %v861 = vpop.f32.mrf.mxu0
      %v862 = vadd.f32 %v311, %v861
      %863 = vmatmul.bf16.gmra.mxu0 %v647
      %v864 = vpop.f32.mrf.mxu0
      %v865 = vadd.f32 %v311, %v864
      %v866 = vpop.f32.mrf.mxu0
      %v867 = vadd.f32 %v311, %v866
      %868 = vmatmul.bf16.gmra.mxu0 %v650
      %v869 = vpop.f32.mrf.mxu0
      %v870 = vadd.f32 %v311, %v869
      %v871 = vpop.f32.mrf.mxu0
      %v872 = vadd.f32 %v311, %v871
      %873 = vmatmul.bf16.gmra.mxu0 %v653
      %v874 = vpop.f32.mrf.mxu0
      %v875 = vadd.f32 %v311, %v874
      %v876 = vpop.f32.mrf.mxu0
      %v877 = vadd.f32 %v311, %v876
      %878 = vmatmul.bf16.gmra.mxu0 %v656
      %v879 = vpop.f32.mrf.mxu0
      %v880 = vadd.f32 %v311, %v879
      %v881 = vpop.f32.mrf.mxu0
      %v882 = vadd.f32 %v311, %v881
      %883 = vmatmul.bf16.gmra.mxu0 %v659
      %v884 = vpop.f32.mrf.mxu0
      %v885 = vadd.f32 %v311, %v884
      %v886 = vpop.f32.mrf.mxu0
      %v887 = vadd.f32 %v311, %v886
      %888 = vmatmul.bf16.gmra.mxu0 %v662
      %v889 = vpop.f32.mrf.mxu0
      %v890 = vadd.f32 %v311, %v889
      %v891 = vpop.f32.mrf.mxu0
      %v892 = vadd.f32 %v311, %v891
      %893 = vmatmul.bf16.gmra.mxu0 %v665
      %v894 = vpop.f32.mrf.mxu0
      %v895 = vadd.f32 %v311, %v894
      %v896 = vpop.f32.mrf.mxu0
      %v897 = vadd.f32 %v311, %v896
      %898 = vmatmul.bf16.gmra.mxu0 %v668
      %v899 = vpop.f32.mrf.mxu0
      %v900 = vadd.f32 %v311, %v899
      %v901 = vpop.f32.mrf.mxu0
      %v902 = vadd.f32 %v311, %v901
      %903 = vmatmul.bf16.gmra.mxu0 %v671
      %v904 = vpop.f32.mrf.mxu0
      %v905 = vadd.f32 %v311, %v904
      %v906 = vpop.f32.mrf.mxu0
      %v907 = vadd.f32 %v311, %v906
      %908 = vmatmul.bf16.gmra.mxu0 %v674
      %v909 = vpop.f32.mrf.mxu0
      %v910 = vadd.f32 %v311, %v909
      %v911 = vpop.f32.mrf.mxu0
      %v912 = vadd.f32 %v311, %v911
      %913 = vmatmul.bf16.gmra.mxu0 %v677
      %v914 = vpop.f32.mrf.mxu0
      %v915 = vadd.f32 %v311, %v914
      %v916 = vpop.f32.mrf.mxu0
      %v917 = vadd.f32 %v311, %v916
      %918 = vmatmul.bf16.gmra.mxu0 %v680
      %v919 = vpop.f32.mrf.mxu0
      %v920 = vadd.f32 %v311, %v919
      %v921 = vpop.f32.mrf.mxu0
      %v922 = vadd.f32 %v311, %v921
      %923 = vmatmul.bf16.gmra.mxu0 %v683
      %v924 = vpop.f32.mrf.mxu0
      %v925 = vadd.f32 %v311, %v924
      %v926 = vpop.f32.mrf.mxu0
      %v927 = vadd.f32 %v311, %v926
      %928 = vmatmul.bf16.gmra.mxu0 %v686
      %v929 = vpop.f32.mrf.mxu0
      %v930 = vadd.f32 %v311, %v929
      %v931 = vpop.f32.mrf.mxu0
      %v932 = vadd.f32 %v311, %v931
      %933 = vmatmul.bf16.gmra.mxu0 %v689
      %v934 = vpop.f32.mrf.mxu0
      %v935 = vadd.f32 %v311, %v934
      %v936 = vpop.f32.mrf.mxu0
      %v937 = vadd.f32 %v311, %v936
      %938 = vmatmul.bf16.gmra.mxu0 %v692
      %v939 = vpop.f32.mrf.mxu0
      %v940 = vadd.f32 %v311, %v939
      %v941 = vpop.f32.mrf.mxu0
      %v942 = vadd.f32 %v311, %v941
      %943 = vmatmul.bf16.gmra.mxu0 %v695
      %v944 = vpop.f32.mrf.mxu0
      %v945 = vadd.f32 %v311, %v944
      %v946 = vpop.f32.mrf.mxu0
      %v947 = vadd.f32 %v311, %v946
      %948 = vmatmul.bf16.gmra.mxu0 %v698
      %v949 = vpop.f32.mrf.mxu0
      %v950 = vadd.f32 %v311, %v949
      %v951 = vpop.f32.mrf.mxu0
      %v952 = vadd.f32 %v311, %v951
      %953 = vmatmul.bf16.gmra.mxu0 %v701
      %v954 = vpop.f32.mrf.mxu0
      %v955 = vadd.f32 %v311, %v954
      %v956 = vpop.f32.mrf.mxu0
      %v957 = vadd.f32 %v311, %v956
      %958 = vdwg.mxu0
      %vm959 = vcmp.gt.f32.partialorder %v720, 0.0
      %vm960 = vcmp.gt.f32.partialorder %v722, 0.0
      %vm961 = vcmp.gt.f32.partialorder %v725, 0.0
      %vm962 = vcmp.gt.f32.partialorder %v727, 0.0
      %vm963 = vcmp.gt.f32.partialorder %v730, 0.0
      %vm964 = vcmp.gt.f32.partialorder %v732, 0.0
      %vm965 = vcmp.gt.f32.partialorder %v735, 0.0
      %vm966 = vcmp.gt.f32.partialorder %v737, 0.0
      %vm967 = vcmp.gt.f32.partialorder %v740, 0.0
      %vm968 = vcmp.gt.f32.partialorder %v742, 0.0
      %vm969 = vcmp.gt.f32.partialorder %v745, 0.0
      %vm970 = vcmp.gt.f32.partialorder %v747, 0.0
      %vm971 = vcmp.gt.f32.partialorder %v750, 0.0
      %vm972 = vcmp.gt.f32.partialorder %v752, 0.0
      %vm973 = vcmp.gt.f32.partialorder %v755, 0.0
      %vm974 = vcmp.gt.f32.partialorder %v757, 0.0
      %vm975 = vcmp.gt.f32.partialorder %v760, 0.0
      %vm976 = vcmp.gt.f32.partialorder %v762, 0.0
      %vm977 = vcmp.gt.f32.partialorder %v765, 0.0
      %vm978 = vcmp.gt.f32.partialorder %v767, 0.0
      %vm979 = vcmp.gt.f32.partialorder %v770, 0.0
      %vm980 = vcmp.gt.f32.partialorder %v772, 0.0
      %vm981 = vcmp.gt.f32.partialorder %v775, 0.0
      %vm982 = vcmp.gt.f32.partialorder %v777, 0.0
      %vm983 = vcmp.gt.f32.partialorder %v780, 0.0
      %vm984 = vcmp.gt.f32.partialorder %v782, 0.0
      %vm985 = vcmp.gt.f32.partialorder %v785, 0.0
      %vm986 = vcmp.gt.f32.partialorder %v787, 0.0
      %vm987 = vcmp.gt.f32.partialorder %v790, 0.0
      %vm988 = vcmp.gt.f32.partialorder %v792, 0.0
      %vm989 = vcmp.gt.f32.partialorder %v795, 0.0
      %vm990 = vcmp.gt.f32.partialorder %v797, 0.0
      %vm991 = vcmp.gt.f32.partialorder %v800, 0.0
      %vm992 = vcmp.gt.f32.partialorder %v802, 0.0
      %vm993 = vcmp.gt.f32.partialorder %v805, 0.0
      %vm994 = vcmp.gt.f32.partialorder %v807, 0.0
      %vm995 = vcmp.gt.f32.partialorder %v810, 0.0
      %vm996 = vcmp.gt.f32.partialorder %v812, 0.0
      %vm997 = vcmp.gt.f32.partialorder %v815, 0.0
      %vm998 = vcmp.gt.f32.partialorder %v817, 0.0
      %vm999 = vcmp.gt.f32.partialorder %v820, 0.0
      %vm1000 = vcmp.gt.f32.partialorder %v822, 0.0
      %vm1001 = vcmp.gt.f32.partialorder %v825, 0.0
      %vm1002 = vcmp.gt.f32.partialorder %v827, 0.0
      %vm1003 = vcmp.gt.f32.partialorder %v830, 0.0
      %vm1004 = vcmp.gt.f32.partialorder %v832, 0.0
      %vm1005 = vcmp.gt.f32.partialorder %v835, 0.0
      %vm1006 = vcmp.gt.f32.partialorder %v837, 0.0
      %vm1007 = vcmp.gt.f32.partialorder %v840, 0.0
      %vm1008 = vcmp.gt.f32.partialorder %v842, 0.0
      %vm1009 = vcmp.gt.f32.partialorder %v845, 0.0
      %vm1010 = vcmp.gt.f32.partialorder %v847, 0.0
      %vm1011 = vcmp.gt.f32.partialorder %v850, 0.0
      %vm1012 = vcmp.gt.f32.partialorder %v852, 0.0
      %vm1013 = vcmp.gt.f32.partialorder %v855, 0.0
      %vm1014 = vcmp.gt.f32.partialorder %v857, 0.0
      %vm1015 = vcmp.gt.f32.partialorder %v860, 0.0
      %vm1016 = vcmp.gt.f32.partialorder %v862, 0.0
      %vm1017 = vcmp.gt.f32.partialorder %v865, 0.0
      %vm1018 = vcmp.gt.f32.partialorder %v867, 0.0
      %vm1019 = vcmp.gt.f32.partialorder %v870, 0.0
      %vm1020 = vcmp.gt.f32.partialorder %v872, 0.0
      %vm1021 = vcmp.gt.f32.partialorder %v875, 0.0
      %vm1022 = vcmp.gt.f32.partialorder %v877, 0.0
      %vm1023 = vcmp.gt.f32.partialorder %v880, 0.0
      %vm1024 = vcmp.gt.f32.partialorder %v882, 0.0
      %vm1025 = vcmp.gt.f32.partialorder %v885, 0.0
      %vm1026 = vcmp.gt.f32.partialorder %v887, 0.0
      %vm1027 = vcmp.gt.f32.partialorder %v890, 0.0
      %vm1028 = vcmp.gt.f32.partialorder %v892, 0.0
      %vm1029 = vcmp.gt.f32.partialorder %v895, 0.0
      %vm1030 = vcmp.gt.f32.partialorder %v897, 0.0
      %vm1031 = vcmp.gt.f32.partialorder %v900, 0.0
      %vm1032 = vcmp.gt.f32.partialorder %v902, 0.0
      %vm1033 = vcmp.gt.f32.partialorder %v905, 0.0
      %vm1034 = vcmp.gt.f32.partialorder %v907, 0.0
      %vm1035 = vcmp.gt.f32.partialorder %v910, 0.0
      %vm1036 = vcmp.gt.f32.partialorder %v912, 0.0
      %vm1037 = vcmp.gt.f32.partialorder %v915, 0.0
      %vm1038 = vcmp.gt.f32.partialorder %v917, 0.0
      %vm1039 = vcmp.gt.f32.partialorder %v920, 0.0
      %vm1040 = vcmp.gt.f32.partialorder %v922, 0.0
      %vm1041 = vcmp.gt.f32.partialorder %v925, 0.0
      %vm1042 = vcmp.gt.f32.partialorder %v927, 0.0
      %vm1043 = vcmp.gt.f32.partialorder %v930, 0.0
      %vm1044 = vcmp.gt.f32.partialorder %v932, 0.0
      %vm1045 = vcmp.gt.f32.partialorder %v935, 0.0
      %vm1046 = vcmp.gt.f32.partialorder %v937, 0.0
      %vm1047 = vcmp.gt.f32.partialorder %v940, 0.0
      %vm1048 = vcmp.gt.f32.partialorder %v942, 0.0
      %vm1049 = vcmp.gt.f32.partialorder %v945, 0.0
      %vm1050 = vcmp.gt.f32.partialorder %v947, 0.0
      %vm1051 = vcmp.gt.f32.partialorder %v950, 0.0
      %vm1052 = vcmp.gt.f32.partialorder %v952, 0.0
      %vm1053 = vcmp.gt.f32.partialorder %v955, 0.0
      %vm1054 = vcmp.gt.f32.partialorder %v957, 0.0
      %v1055 = vmul.f32 %v720, 0.2
      %v1056 = vmul.f32 %v722, 0.2
      %v1057 = vmul.f32 %v725, 0.2
      %v1058 = vmul.f32 %v727, 0.2
      %v1059 = vmul.f32 %v730, 0.2
      %v1060 = vmul.f32 %v732, 0.2
      %v1061 = vmul.f32 %v735, 0.2
      %v1062 = vmul.f32 %v737, 0.2
      %v1063 = vmul.f32 %v740, 0.2
      %v1064 = vmul.f32 %v742, 0.2
      %v1065 = vmul.f32 %v745, 0.2
      %v1066 = vmul.f32 %v747, 0.2
      %v1067 = vmul.f32 %v750, 0.2
      %v1068 = vmul.f32 %v752, 0.2
      %v1069 = vmul.f32 %v755, 0.2
      %v1070 = vmul.f32 %v757, 0.2
      %v1071 = vmul.f32 %v760, 0.2
      %v1072 = vmul.f32 %v762, 0.2
      %v1073 = vmul.f32 %v765, 0.2
      %v1074 = vmul.f32 %v767, 0.2
      %v1075 = vmul.f32 %v770, 0.2
      %v1076 = vmul.f32 %v772, 0.2
      %v1077 = vmul.f32 %v775, 0.2
      %v1078 = vmul.f32 %v777, 0.2
      %v1079 = vmul.f32 %v780, 0.2
      %v1080 = vmul.f32 %v782, 0.2
      %v1081 = vmul.f32 %v785, 0.2
      %v1082 = vmul.f32 %v787, 0.2
      %v1083 = vmul.f32 %v790, 0.2
      %v1084 = vmul.f32 %v792, 0.2
      %v1085 = vmul.f32 %v795, 0.2
      %v1086 = vmul.f32 %v797, 0.2
      %v1087 = vmul.f32 %v800, 0.2
      %v1088 = vmul.f32 %v802, 0.2
      %v1089 = vmul.f32 %v805, 0.2
      %v1090 = vmul.f32 %v807, 0.2
      %v1091 = vmul.f32 %v810, 0.2
      %v1092 = vmul.f32 %v812, 0.2
      %v1093 = vmul.f32 %v815, 0.2
      %v1094 = vmul.f32 %v817, 0.2
      %v1095 = vmul.f32 %v820, 0.2
      %v1096 = vmul.f32 %v822, 0.2
      %v1097 = vmul.f32 %v825, 0.2
      %v1098 = vmul.f32 %v827, 0.2
      %v1099 = vmul.f32 %v830, 0.2
      %v1100 = vmul.f32 %v832, 0.2
      %v1101 = vmul.f32 %v835, 0.2
      %v1102 = vmul.f32 %v837, 0.2
      %v1103 = vmul.f32 %v840, 0.2
      %v1104 = vmul.f32 %v842, 0.2
      %v1105 = vmul.f32 %v845, 0.2
      %v1106 = vmul.f32 %v847, 0.2
      %v1107 = vmul.f32 %v850, 0.2
      %v1108 = vmul.f32 %v852, 0.2
      %v1109 = vmul.f32 %v855, 0.2
      %v1110 = vmul.f32 %v857, 0.2
      %v1111 = vmul.f32 %v860, 0.2
      %v1112 = vmul.f32 %v862, 0.2
      %v1113 = vmul.f32 %v865, 0.2
      %v1114 = vmul.f32 %v867, 0.2
      %v1115 = vmul.f32 %v870, 0.2
      %v1116 = vmul.f32 %v872, 0.2
      %v1117 = vmul.f32 %v875, 0.2
      %v1118 = vmul.f32 %v877, 0.2
      %v1119 = vmul.f32 %v880, 0.2
      %v1120 = vmul.f32 %v882, 0.2
      %v1121 = vmul.f32 %v885, 0.2
      %v1122 = vmul.f32 %v887, 0.2
      %v1123 = vmul.f32 %v890, 0.2
      %v1124 = vmul.f32 %v892, 0.2
      %v1125 = vmul.f32 %v895, 0.2
      %v1126 = vmul.f32 %v897, 0.2
      %v1127 = vmul.f32 %v900, 0.2
      %v1128 = vmul.f32 %v902, 0.2
      %v1129 = vmul.f32 %v905, 0.2
      %v1130 = vmul.f32 %v907, 0.2
      %v1131 = vmul.f32 %v910, 0.2
      %v1132 = vmul.f32 %v912, 0.2
      %v1133 = vmul.f32 %v915, 0.2
      %v1134 = vmul.f32 %v917, 0.2
      %v1135 = vmul.f32 %v920, 0.2
      %v1136 = vmul.f32 %v922, 0.2
      %v1137 = vmul.f32 %v925, 0.2
      %v1138 = vmul.f32 %v927, 0.2
      %v1139 = vmul.f32 %v930, 0.2
      %v1140 = vmul.f32 %v932, 0.2
      %v1141 = vmul.f32 %v935, 0.2
      %v1142 = vmul.f32 %v937, 0.2
      %v1143 = vmul.f32 %v940, 0.2
      %v1144 = vmul.f32 %v942, 0.2
      %v1145 = vmul.f32 %v945, 0.2
      %v1146 = vmul.f32 %v947, 0.2
      %v1147 = vmul.f32 %v950, 0.2
      %v1148 = vmul.f32 %v952, 0.2
      %v1149 = vmul.f32 %v955, 0.2
      %v1150 = vmul.f32 %v957, 0.2
      %v1151 = vsel %vm959, %v720, %v1055
      %v1152 = vsel %vm960, %v722, %v1056
      %v1153 = vsel %vm961, %v725, %v1057
      %v1154 = vsel %vm962, %v727, %v1058
      %v1155 = vsel %vm963, %v730, %v1059
      %v1156 = vsel %vm964, %v732, %v1060
      %v1157 = vsel %vm965, %v735, %v1061
      %v1158 = vsel %vm966, %v737, %v1062
      %v1159 = vsel %vm967, %v740, %v1063
      %v1160 = vsel %vm968, %v742, %v1064
      %v1161 = vsel %vm969, %v745, %v1065
      %v1162 = vsel %vm970, %v747, %v1066
      %v1163 = vsel %vm971, %v750, %v1067
      %v1164 = vsel %vm972, %v752, %v1068
      %v1165 = vsel %vm973, %v755, %v1069
      %v1166 = vsel %vm974, %v757, %v1070
      %v1167 = vsel %vm975, %v760, %v1071
      %v1168 = vsel %vm976, %v762, %v1072
      %v1169 = vsel %vm977, %v765, %v1073
      %v1170 = vsel %vm978, %v767, %v1074
      %v1171 = vsel %vm979, %v770, %v1075
      %v1172 = vsel %vm980, %v772, %v1076
      %v1173 = vsel %vm981, %v775, %v1077
      %v1174 = vsel %vm982, %v777, %v1078
      %v1175 = vsel %vm983, %v780, %v1079
      %v1176 = vsel %vm984, %v782, %v1080
      %v1177 = vsel %vm985, %v785, %v1081
      %v1178 = vsel %vm986, %v787, %v1082
      %v1179 = vsel %vm987, %v790, %v1083
      %v1180 = vsel %vm988, %v792, %v1084
      %v1181 = vsel %vm989, %v795, %v1085
      %v1182 = vsel %vm990, %v797, %v1086
      %v1183 = vsel %vm991, %v800, %v1087
      %v1184 = vsel %vm992, %v802, %v1088
      %v1185 = vsel %vm993, %v805, %v1089
      %v1186 = vsel %vm994, %v807, %v1090
      %v1187 = vsel %vm995, %v810, %v1091
      %v1188 = vsel %vm996, %v812, %v1092
      %v1189 = vsel %vm997, %v815, %v1093
      %v1190 = vsel %vm998, %v817, %v1094
      %v1191 = vsel %vm999, %v820, %v1095
      %v1192 = vsel %vm1000, %v822, %v1096
      %v1193 = vsel %vm1001, %v825, %v1097
      %v1194 = vsel %vm1002, %v827, %v1098
      %v1195 = vsel %vm1003, %v830, %v1099
      %v1196 = vsel %vm1004, %v832, %v1100
      %v1197 = vsel %vm1005, %v835, %v1101
      %v1198 = vsel %vm1006, %v837, %v1102
      %v1199 = vsel %vm1007, %v840, %v1103
      %v1200 = vsel %vm1008, %v842, %v1104
      %v1201 = vsel %vm1009, %v845, %v1105
      %v1202 = vsel %vm1010, %v847, %v1106
      %v1203 = vsel %vm1011, %v850, %v1107
      %v1204 = vsel %vm1012, %v852, %v1108
      %v1205 = vsel %vm1013, %v855, %v1109
      %v1206 = vsel %vm1014, %v857, %v1110
      %v1207 = vsel %vm1015, %v860, %v1111
      %v1208 = vsel %vm1016, %v862, %v1112
      %v1209 = vsel %vm1017, %v865, %v1113
      %v1210 = vsel %vm1018, %v867, %v1114
      %v1211 = vsel %vm1019, %v870, %v1115
      %v1212 = vsel %vm1020, %v872, %v1116
      %v1213 = vsel %vm1021, %v875, %v1117
      %v1214 = vsel %vm1022, %v877, %v1118
      %v1215 = vsel %vm1023, %v880, %v1119
      %v1216 = vsel %vm1024, %v882, %v1120
      %v1217 = vsel %vm1025, %v885, %v1121
      %v1218 = vsel %vm1026, %v887, %v1122
      %v1219 = vsel %vm1027, %v890, %v1123
      %v1220 = vsel %vm1028, %v892, %v1124
      %v1221 = vsel %vm1029, %v895, %v1125
      %v1222 = vsel %vm1030, %v897, %v1126
      %v1223 = vsel %vm1031, %v900, %v1127
      %v1224 = vsel %vm1032, %v902, %v1128
      %v1225 = vsel %vm1033, %v905, %v1129
      %v1226 = vsel %vm1034, %v907, %v1130
      %v1227 = vsel %vm1035, %v910, %v1131
      %v1228 = vsel %vm1036, %v912, %v1132
      %v1229 = vsel %vm1037, %v915, %v1133
      %v1230 = vsel %vm1038, %v917, %v1134
      %v1231 = vsel %vm1039, %v920, %v1135
      %v1232 = vsel %vm1040, %v922, %v1136
      %v1233 = vsel %vm1041, %v925, %v1137
      %v1234 = vsel %vm1042, %v927, %v1138
      %v1235 = vsel %vm1043, %v930, %v1139
      %v1236 = vsel %vm1044, %v932, %v1140
      %v1237 = vsel %vm1045, %v935, %v1141
      %v1238 = vsel %vm1046, %v937, %v1142
      %v1239 = vsel %vm1047, %v940, %v1143
      %v1240 = vsel %vm1048, %v942, %v1144
      %v1241 = vsel %vm1049, %v945, %v1145
      %v1242 = vsel %vm1050, %v947, %v1146
      %v1243 = vsel %vm1051, %v950, %v1147
      %v1244 = vsel %vm1052, %v952, %v1148
      %v1245 = vsel %vm1053, %v955, %v1149
      %v1246 = vsel %vm1054, %v957, %v1150
      %v1247 = vpack.c.bf16 %v1151, %v1151
      %v1248 = vpack.c.bf16 %v1152, %v1152
      %v1249 = vpack.c.bf16 %v1153, %v1153
      %v1250 = vpack.c.bf16 %v1154, %v1154
      %v1251 = vpack.c.bf16 %v1155, %v1155
      %v1252 = vpack.c.bf16 %v1156, %v1156
      %v1253 = vpack.c.bf16 %v1157, %v1157
      %v1254 = vpack.c.bf16 %v1158, %v1158
      %v1255 = vpack.c.bf16 %v1159, %v1159
      %v1256 = vpack.c.bf16 %v1160, %v1160
      %v1257 = vpack.c.bf16 %v1161, %v1161
      %v1258 = vpack.c.bf16 %v1162, %v1162
      %v1259 = vpack.c.bf16 %v1163, %v1163
      %v1260 = vpack.c.bf16 %v1164, %v1164
      %v1261 = vpack.c.bf16 %v1165, %v1165
      %v1262 = vpack.c.bf16 %v1166, %v1166
      %v1263 = vpack.c.bf16 %v1167, %v1167
      %v1264 = vpack.c.bf16 %v1168, %v1168
      %v1265 = vpack.c.bf16 %v1169, %v1169
      %v1266 = vpack.c.bf16 %v1170, %v1170
      %v1267 = vpack.c.bf16 %v1171, %v1171
      %v1268 = vpack.c.bf16 %v1172, %v1172
      %v1269 = vpack.c.bf16 %v1173, %v1173
      %v1270 = vpack.c.bf16 %v1174, %v1174
      %v1271 = vpack.c.bf16 %v1175, %v1175
      %v1272 = vpack.c.bf16 %v1176, %v1176
      %v1273 = vpack.c.bf16 %v1177, %v1177
      %v1274 = vpack.c.bf16 %v1178, %v1178
      %v1275 = vpack.c.bf16 %v1179, %v1179
      %v1276 = vpack.c.bf16 %v1180, %v1180
      %v1277 = vpack.c.bf16 %v1181, %v1181
      %v1278 = vpack.c.bf16 %v1182, %v1182
      %v1279 = vpack.c.bf16 %v1183, %v1183
      %v1280 = vpack.c.bf16 %v1184, %v1184
      %v1281 = vpack.c.bf16 %v1185, %v1185
      %v1282 = vpack.c.bf16 %v1186, %v1186
      %v1283 = vpack.c.bf16 %v1187, %v1187
      %v1284 = vpack.c.bf16 %v1188, %v1188
      %v1285 = vpack.c.bf16 %v1189, %v1189
      %v1286 = vpack.c.bf16 %v1190, %v1190
      %v1287 = vpack.c.bf16 %v1191, %v1191
      %v1288 = vpack.c.bf16 %v1192, %v1192
      %v1289 = vpack.c.bf16 %v1193, %v1193
      %v1290 = vpack.c.bf16 %v1194, %v1194
      %v1291 = vpack.c.bf16 %v1195, %v1195
      %v1292 = vpack.c.bf16 %v1196, %v1196
      %v1293 = vpack.c.bf16 %v1197, %v1197
      %v1294 = vpack.c.bf16 %v1198, %v1198
      %v1295 = vpack.c.bf16 %v1199, %v1199
      %v1296 = vpack.c.bf16 %v1200, %v1200
      %v1297 = vpack.c.bf16 %v1201, %v1201
      %v1298 = vpack.c.bf16 %v1202, %v1202
      %v1299 = vpack.c.bf16 %v1203, %v1203
      %v1300 = vpack.c.bf16 %v1204, %v1204
      %v1301 = vpack.c.bf16 %v1205, %v1205
      %v1302 = vpack.c.bf16 %v1206, %v1206
      %v1303 = vpack.c.bf16 %v1207, %v1207
      %v1304 = vpack.c.bf16 %v1208, %v1208
      %v1305 = vpack.c.bf16 %v1209, %v1209
      %v1306 = vpack.c.bf16 %v1210, %v1210
      %v1307 = vpack.c.bf16 %v1211, %v1211
      %v1308 = vpack.c.bf16 %v1212, %v1212
      %v1309 = vpack.c.bf16 %v1213, %v1213
      %v1310 = vpack.c.bf16 %v1214, %v1214
      %v1311 = vpack.c.bf16 %v1215, %v1215
      %v1312 = vpack.c.bf16 %v1216, %v1216
      %v1313 = vpack.c.bf16 %v1217, %v1217
      %v1314 = vpack.c.bf16 %v1218, %v1218
      %v1315 = vpack.c.bf16 %v1219, %v1219
      %v1316 = vpack.c.bf16 %v1220, %v1220
      %v1317 = vpack.c.bf16 %v1221, %v1221
      %v1318 = vpack.c.bf16 %v1222, %v1222
      %v1319 = vpack.c.bf16 %v1223, %v1223
      %v1320 = vpack.c.bf16 %v1224, %v1224
      %v1321 = vpack.c.bf16 %v1225, %v1225
      %v1322 = vpack.c.bf16 %v1226, %v1226
      %v1323 = vpack.c.bf16 %v1227, %v1227
      %v1324 = vpack.c.bf16 %v1228, %v1228
      %v1325 = vpack.c.bf16 %v1229, %v1229
      %v1326 = vpack.c.bf16 %v1230, %v1230
      %v1327 = vpack.c.bf16 %v1231, %v1231
      %v1328 = vpack.c.bf16 %v1232, %v1232
      %v1329 = vpack.c.bf16 %v1233, %v1233
      %v1330 = vpack.c.bf16 %v1234, %v1234
      %v1331 = vpack.c.bf16 %v1235, %v1235
      %v1332 = vpack.c.bf16 %v1236, %v1236
      %v1333 = vpack.c.bf16 %v1237, %v1237
      %v1334 = vpack.c.bf16 %v1238, %v1238
      %v1335 = vpack.c.bf16 %v1239, %v1239
      %v1336 = vpack.c.bf16 %v1240, %v1240
      %v1337 = vpack.c.bf16 %v1241, %v1241
      %v1338 = vpack.c.bf16 %v1242, %v1242
      %v1339 = vpack.c.bf16 %v1243, %v1243
      %v1340 = vpack.c.bf16 %v1244, %v1244
      %v1341 = vpack.c.bf16 %v1245, %v1245
      %v1342 = vpack.c.bf16 %v1246, %v1246
      %vm1343 = vcmask 27648
      %1344 = vst.msk [vmem:[%s208] sm:$0xf] %vm1343, %v1247
      %1345 = vst.msk [vmem:[%s208 + $0x4] sm:$0xf] %vm1343, %v1248
      %1346 = vst.msk [vmem:[%s208 + $0x8] sm:$0xf] %vm1343, %v1249
      %1347 = vst.msk [vmem:[%s208 + $0xc] sm:$0xf] %vm1343, %v1250
      %1348 = vst.msk [vmem:[%s208 + $0x10] sm:$0xf] %vm1343, %v1251
      %1349 = vst.msk [vmem:[%s208 + $0x14] sm:$0xf] %vm1343, %v1252
      %1350 = vst.msk [vmem:[%s208 + $0x18] sm:$0xf] %vm1343, %v1253
      %1351 = vst.msk [vmem:[%s208 + $0x1c] sm:$0xf] %vm1343, %v1254
      %1352 = vst.msk [vmem:[%s208 + $0x20] sm:$0xf] %vm1343, %v1255
      %1353 = vst.msk [vmem:[%s208 + $0x24] sm:$0xf] %vm1343, %v1256
      %1354 = vst.msk [vmem:[%s208 + $0x28] sm:$0xf] %vm1343, %v1257
      %1355 = vst.msk [vmem:[%s208 + $0x2c] sm:$0xf] %vm1343, %v1258
      %1356 = vst.msk [vmem:[%s208 + $0x30] sm:$0xf] %vm1343, %v1259
      %1357 = vst.msk [vmem:[%s208 + $0x34] sm:$0xf] %vm1343, %v1260
      %1358 = vst.msk [vmem:[%s208 + $0x38] sm:$0xf] %vm1343, %v1261
      %1359 = vst.msk [vmem:[%s208 + $0x3c] sm:$0xf] %vm1343, %v1262
      %1360 = vst.msk [vmem:[%s208 + $0x40] sm:$0xf] %vm1343, %v1263
      %1361 = vst.msk [vmem:[%s208 + $0x44] sm:$0xf] %vm1343, %v1264
      %1362 = vst.msk [vmem:[%s208 + $0x48] sm:$0xf] %vm1343, %v1265
      %1363 = vst.msk [vmem:[%s208 + $0x4c] sm:$0xf] %vm1343, %v1266
      %1364 = vst.msk [vmem:[%s208 + $0x50] sm:$0xf] %vm1343, %v1267
      %1365 = vst.msk [vmem:[%s208 + $0x54] sm:$0xf] %vm1343, %v1268
      %1366 = vst.msk [vmem:[%s208 + $0x58] sm:$0xf] %vm1343, %v1269
      %1367 = vst.msk [vmem:[%s208 + $0x5c] sm:$0xf] %vm1343, %v1270
      %1368 = vst.msk [vmem:[%s208 + $0x60] sm:$0xf] %vm1343, %v1271
      %1369 = vst.msk [vmem:[%s208 + $0x64] sm:$0xf] %vm1343, %v1272
      %1370 = vst.msk [vmem:[%s208 + $0x68] sm:$0xf] %vm1343, %v1273
      %1371 = vst.msk [vmem:[%s208 + $0x6c] sm:$0xf] %vm1343, %v1274
      %1372 = vst.msk [vmem:[%s208 + $0x70] sm:$0xf] %vm1343, %v1275
      %1373 = vst.msk [vmem:[%s208 + $0x74] sm:$0xf] %vm1343, %v1276
      %1374 = vst.msk [vmem:[%s208 + $0x78] sm:$0xf] %vm1343, %v1277
      %1375 = vst.msk [vmem:[%s208 + $0x7c] sm:$0xf] %vm1343, %v1278
      %1376 = vst.msk [vmem:[%s208 + $0x80] sm:$0xf] %vm1343, %v1279
      %1377 = vst.msk [vmem:[%s208 + $0x84] sm:$0xf] %vm1343, %v1280
      %1378 = vst.msk [vmem:[%s208 + $0x88] sm:$0xf] %vm1343, %v1281
      %1379 = vst.msk [vmem:[%s208 + $0x8c] sm:$0xf] %vm1343, %v1282
      %1380 = vst.msk [vmem:[%s208 + $0x90] sm:$0xf] %vm1343, %v1283
      %1381 = vst.msk [vmem:[%s208 + $0x94] sm:$0xf] %vm1343, %v1284
      %1382 = vst.msk [vmem:[%s208 + $0x98] sm:$0xf] %vm1343, %v1285
      %1383 = vst.msk [vmem:[%s208 + $0x9c] sm:$0xf] %vm1343, %v1286
      %1384 = vst.msk [vmem:[%s208 + $0xa0] sm:$0xf] %vm1343, %v1287
      %1385 = vst.msk [vmem:[%s208 + $0xa4] sm:$0xf] %vm1343, %v1288
      %1386 = vst.msk [vmem:[%s208 + $0xa8] sm:$0xf] %vm1343, %v1289
      %1387 = vst.msk [vmem:[%s208 + $0xac] sm:$0xf] %vm1343, %v1290
      %1388 = vst.msk [vmem:[%s208 + $0xb0] sm:$0xf] %vm1343, %v1291
      %1389 = vst.msk [vmem:[%s208 + $0xb4] sm:$0xf] %vm1343, %v1292
      %1390 = vst.msk [vmem:[%s208 + $0xb8] sm:$0xf] %vm1343, %v1293
      %1391 = vst.msk [vmem:[%s208 + $0xbc] sm:$0xf] %vm1343, %v1294
      %1392 = vst.msk [vmem:[%s208 + $0xc0] sm:$0xf] %vm1343, %v1295
      %1393 = vst.msk [vmem:[%s208 + $0xc4] sm:$0xf] %vm1343, %v1296
      %1394 = vst.msk [vmem:[%s208 + $0xc8] sm:$0xf] %vm1343, %v1297
      %1395 = vst.msk [vmem:[%s208 + $0xcc] sm:$0xf] %vm1343, %v1298
      %1396 = vst.msk [vmem:[%s208 + $0xd0] sm:$0xf] %vm1343, %v1299
      %1397 = vst.msk [vmem:[%s208 + $0xd4] sm:$0xf] %vm1343, %v1300
      %1398 = vst.msk [vmem:[%s208 + $0xd8] sm:$0xf] %vm1343, %v1301
      %1399 = vst.msk [vmem:[%s208 + $0xdc] sm:$0xf] %vm1343, %v1302
      %1400 = vst.msk [vmem:[%s208 + $0xe0] sm:$0xf] %vm1343, %v1303
      %1401 = vst.msk [vmem:[%s208 + $0xe4] sm:$0xf] %vm1343, %v1304
      %1402 = vst.msk [vmem:[%s208 + $0xe8] sm:$0xf] %vm1343, %v1305
      %1403 = vst.msk [vmem:[%s208 + $0xec] sm:$0xf] %vm1343, %v1306
      %1404 = vst.msk [vmem:[%s208 + $0xf0] sm:$0xf] %vm1343, %v1307
      %1405 = vst.msk [vmem:[%s208 + $0xf4] sm:$0xf] %vm1343, %v1308
      %1406 = vst.msk [vmem:[%s208 + $0xf8] sm:$0xf] %vm1343, %v1309
      %1407 = vst.msk [vmem:[%s208 + $0xfc] sm:$0xf] %vm1343, %v1310
      %1408 = vst.msk [vmem:[%s208 + $0x100] sm:$0xf] %vm1343, %v1311
      %1409 = vst.msk [vmem:[%s208 + $0x104] sm:$0xf] %vm1343, %v1312
      %1410 = vst.msk [vmem:[%s208 + $0x108] sm:$0xf] %vm1343, %v1313
      %1411 = vst.msk [vmem:[%s208 + $0x10c] sm:$0xf] %vm1343, %v1314
      %1412 = vst.msk [vmem:[%s208 + $0x110] sm:$0xf] %vm1343, %v1315
      %1413 = vst.msk [vmem:[%s208 + $0x114] sm:$0xf] %vm1343, %v1316
      %1414 = vst.msk [vmem:[%s208 + $0x118] sm:$0xf] %vm1343, %v1317
      %1415 = vst.msk [vmem:[%s208 + $0x11c] sm:$0xf] %vm1343, %v1318
      %1416 = vst.msk [vmem:[%s208 + $0x120] sm:$0xf] %vm1343, %v1319
      %1417 = vst.msk [vmem:[%s208 + $0x124] sm:$0xf] %vm1343, %v1320
      %1418 = vst.msk [vmem:[%s208 + $0x128] sm:$0xf] %vm1343, %v1321
      %1419 = vst.msk [vmem:[%s208 + $0x12c] sm:$0xf] %vm1343, %v1322
      %1420 = vst.msk [vmem:[%s208 + $0x130] sm:$0xf] %vm1343, %v1323
      %1421 = vst.msk [vmem:[%s208 + $0x134] sm:$0xf] %vm1343, %v1324
      %1422 = vst.msk [vmem:[%s208 + $0x138] sm:$0xf] %vm1343, %v1325
      %1423 = vst.msk [vmem:[%s208 + $0x13c] sm:$0xf] %vm1343, %v1326
      %1424 = vst.msk [vmem:[%s208 + $0x140] sm:$0xf] %vm1343, %v1327
      %1425 = vst.msk [vmem:[%s208 + $0x144] sm:$0xf] %vm1343, %v1328
      %1426 = vst.msk [vmem:[%s208 + $0x148] sm:$0xf] %vm1343, %v1329
      %1427 = vst.msk [vmem:[%s208 + $0x14c] sm:$0xf] %vm1343, %v1330
      %1428 = vst.msk [vmem:[%s208 + $0x150] sm:$0xf] %vm1343, %v1331
      %1429 = vst.msk [vmem:[%s208 + $0x154] sm:$0xf] %vm1343, %v1332
      %1430 = vst.msk [vmem:[%s208 + $0x158] sm:$0xf] %vm1343, %v1333
      %1431 = vst.msk [vmem:[%s208 + $0x15c] sm:$0xf] %vm1343, %v1334
      %1432 = vst.msk [vmem:[%s208 + $0x160] sm:$0xf] %vm1343, %v1335
      %1433 = vst.msk [vmem:[%s208 + $0x164] sm:$0xf] %vm1343, %v1336
      %1434 = vst.msk [vmem:[%s208 + $0x168] sm:$0xf] %vm1343, %v1337
      %1435 = vst.msk [vmem:[%s208 + $0x16c] sm:$0xf] %vm1343, %v1338
      %1436 = vst.msk [vmem:[%s208 + $0x170] sm:$0xf] %vm1343, %v1339
      %1437 = vst.msk [vmem:[%s208 + $0x174] sm:$0xf] %vm1343, %v1340
      %1438 = vst.msk [vmem:[%s208 + $0x178] sm:$0xf] %vm1343, %v1341
      %1439 = vst.msk [vmem:[%s208 + $0x17c] sm:$0xf] %vm1343, %v1342
      %s1440 = smul.u32 96, %s19
      %p1441 = scmp.lt.s32.totalorder %s18, 1
      %s1442 = scalar_select %p1441, %s18, 1
      %p1443 = scmp.lt.s32.totalorder %s1440, 95
      %s1444 = scalar_select %p1443, %s1440, 95
      %s1445 = smul.addr %s1442, 96
      %s1446 = sadd.s32 %s1444, %s1445
      %s1447 = smul.addr %s1446, 4
      %s1448 = scalar_lea.vmem %s3, %s1447
      // Predicated region
      $region33: #{_lambda_.5} parent=31 // pred_check
        %p1449 = pneg %p116
      $region34: #{_lambda_.5} parent=31 // pred_check_branch
        %1451 = sbr.rel (%p1449) target = $region36
      $region35: #{_lambda_.5} parent=31 // pred_region
        %s1452 = smul.u32 96, %s19
      $region36: #{_lambda_.5} parent=31 // pred_fallthru
        _
    $region32: #{_lambda_.5} parent=5 // pred_fallthru
      _
    %p1453 = scmp.le.s32.totalorder 2, %s9
    // Predicated region
    $region37: #{_lambda_.5} parent=5 // pred_check
      %p1454 = pneg %p1453
    $region38: #{_lambda_.5} parent=5 // pred_check_branch
      %1456 = sbr.rel (%p1454) target = $region40
    $region39: #{_lambda_.5} parent=5 // pred_region
      %s1457 = ssub.s32 %s9, 2
      // Predicated region
      $region41: #{_lambda_.5} parent=39 // pred_check
        %p1458 = pneg %p122
      $region42: #{_lambda_.5} parent=39 // pred_check_branch
        %1460 = sbr.rel (%p1458) target = $region44
      $region43: #{_lambda_.5} parent=39 // pred_region
        %s1461 = smul.u32 96, %s21
        %p1462 = scmp.lt.s32.totalorder %s20, 1
        %s1463 = scalar_select %p1462, %s20, 1
        %p1464 = scmp.lt.s32.totalorder %s1461, 95
        %s1465 = scalar_select %p1464, %s1461, 95
        %s1466 = smul.addr %s1463, 96
        %s1467 = sadd.s32 %s1465, %s1466
        %s1468 = smul.addr %s1467, 4
        %s1469 = scalar_lea.vmem %s3, %s1468
      $region44: #{_lambda_.5} parent=39 // pred_fallthru
        _
    $region40: #{_lambda_.5} parent=5 // pred_fallthru
      _
  $region6: #{_lambda_.5} parent=0 // loop_footer
    %s13 = sadd.s32 1, %s9
  $region7: #{_lambda_.5} parent=0 // loop_footer_branch
    %8 = sbr.rel target = $region3
  $region8: #{_lambda_.5} parent=0 // loop_exit
    _

// kernel: _lambda_.6
$region0: #{_lambda_.6}
  #allocation0 [shape = 'u32[]', space=smem, size = 0x4, offset = 0x4, fixed_abs, tag = 'smem constant byte address 0x4 - core index']
  #allocation1 [shape = 'u32[72,128]{1,0:T(1,128)}', space=vmem, size = 0x9000, scoped, tag = 'internal scratch']
  %s0 = inlined_call_operand.vmem [shape: bf16[2,4,192,36], index: 0, kind: input, shape index: {}]
  %s1 = inlined_call_operand.vmem [shape: bf16[36,4], index: 1, kind: input, shape index: {}]
  %s2 = inlined_call_operand.vmem [shape: f32[1,4], index: 2, kind: input, shape index: {}]
  %s3 = inlined_call_operand.vmem [shape: bf16[2,192,4], index: 3, kind: output, shape index: {}]
  %s4 = sld [smem:[#allocation0]]
  $region45: #{_lambda_.6} parent=0
    _
  %s6 = ssub.s32 1, %s4
  %s7 = scalar_select 0, %s6, %s4
  loop: start=0, step=1, limit=4
  $region2: #{_lambda_.6} parent=0 // loop_pre_header
    _
  $region3: #{_lambda_.6} parent=0 // loop_header
    %s9 = sphi 0, %s13
    %p10 = scmp.ge.s32.totalorder %s9, 4
    %s16 = sphi 0, %s28
    %s17 = sphi 0, %s24
    %s18 = sphi 0, %s16
    %s19 = sphi 0, %s17
    %s20 = sphi 0, %s18
    %s21 = sphi 0, %s19
    %s33 = sphi 0, %s35
    %s36 = sphi 0, %s33
    %s37 = sphi 0, %s36
    %s53 = sphi 0, %s37
    %s57 = sphi 0, %s57
    %s59 = sphi 0, %s57
    %s60 = sphi 0, %s59
    %s74 = sphi 0, %s60
    %s78 = sphi 0, %s78
    %s80 = sphi 0, %s78
    %s81 = sphi 0, %s80
    %s95 = sphi 0, %s81
    %s103 = sphi 0, %s105
    %s106 = sphi 0, %s103
    %s107 = sphi 0, %s106
    %s123 = sphi 0, %s107
  $region4: #{_lambda_.6} parent=0 // loop_header_branch
    %12 = sbr.rel (%p10) target = $region8
  $region5: #{_lambda_.6} parent=0 // loop_body
    %s14 = ssub.s32 %s9, 1
    %s15 = ssub.s32 %s9, 2
    %s22 = sadd.s32 1, %s17
    %p23 = scmp.ge.s32.totalorder %s22, 1
    %s24 = scalar_select %p23, 0, %s22
    %s25 = sadd.s32 1, %s16
    %s26 = scalar_select %p23, %s25, %s16
    %p27 = scmp.ge.s32.totalorder %s26, 2
    %s28 = scalar_select %p27, 0, %s26
    %s29 = ssub.s32 %s16, %s28
    %s30 = ssub.s32 %s17, %s24
    %s31 = sor.u32 %s29, %s30
    %p32 = scmp.eq.s32.totalorder %s31, 0
    %s34 = sadd.s32 %s33, 1
    %s35 = scalar_select %p32, %s33, %s34
    %p38 = pneg %p32
    %p39 = scmp.eq.s32.totalorder %s9, 1
    %p40 = por %p38, %p39
    %p41 = scmp.ne.s32.totalorder %s33, %s36
    %p42 = scmp.eq.s32.totalorder %s9, 0
    %p43 = por %p41, %p42
    %p44 = scmp.ne.s32.totalorder %s33, %s36
    %p45 = scmp.eq.s32.totalorder %s14, 1
    %p46 = por %p44, %p45
    %p47 = scmp.ne.s32.totalorder %s36, %s37
    %p48 = scmp.eq.s32.totalorder %s14, 0
    %p49 = por %p47, %p48
    %p50 = scmp.ne.s32.totalorder %s36, %s37
    %p51 = scmp.eq.s32.totalorder %s15, 1
    %p52 = por %p50, %p51
    %p54 = scmp.ne.s32.totalorder %s37, %s53
    %p55 = scmp.eq.s32.totalorder %s15, 0
    %p56 = por %p54, %p55
    %s58 = sadd.s32 %s57, 1
    %p61 = scmp.eq.s32.totalorder %s9, 1
    %p62 = scmp.ne.s32.totalorder %s57, %s59
    %p63 = scmp.eq.s32.totalorder %s9, 0
    %p64 = por %p62, %p63
    %p65 = scmp.ne.s32.totalorder %s57, %s59
    %p66 = scmp.eq.s32.totalorder %s14, 1
    %p67 = por %p65, %p66
    %p68 = scmp.ne.s32.totalorder %s59, %s60
    %p69 = scmp.eq.s32.totalorder %s14, 0
    %p70 = por %p68, %p69
    %p71 = scmp.ne.s32.totalorder %s59, %s60
    %p72 = scmp.eq.s32.totalorder %s15, 1
    %p73 = por %p71, %p72
    %p75 = scmp.ne.s32.totalorder %s60, %s74
    %p76 = scmp.eq.s32.totalorder %s15, 0
    %p77 = por %p75, %p76
    %s79 = sadd.s32 %s78, 1
    %p82 = scmp.eq.s32.totalorder %s9, 1
    %p83 = scmp.ne.s32.totalorder %s78, %s80
    %p84 = scmp.eq.s32.totalorder %s9, 0
    %p85 = por %p83, %p84
    %p86 = scmp.ne.s32.totalorder %s78, %s80
    %p87 = scmp.eq.s32.totalorder %s14, 1
    %p88 = por %p86, %p87
    %p89 = scmp.ne.s32.totalorder %s80, %s81
    %p90 = scmp.eq.s32.totalorder %s14, 0
    %p91 = por %p89, %p90
    %p92 = scmp.ne.s32.totalorder %s80, %s81
    %p93 = scmp.eq.s32.totalorder %s15, 1
    %p94 = por %p92, %p93
    %p96 = scmp.ne.s32.totalorder %s81, %s95
    %p97 = scmp.eq.s32.totalorder %s15, 0
    %p98 = por %p96, %p97
    %s99 = ssub.s32 %s16, %s28
    %s100 = ssub.s32 %s17, %s24
    %s101 = sor.u32 %s99, %s100
    %p102 = scmp.eq.s32.totalorder %s101, 0
    %s104 = sadd.s32 %s103, 1
    %s105 = scalar_select %p102, %s103, %s104
    %p108 = pneg %p102
    %p109 = scmp.eq.s32.totalorder %s9, 1
    %p110 = por %p108, %p109
    %p111 = scmp.ne.s32.totalorder %s103, %s106
    %p112 = scmp.eq.s32.totalorder %s9, 0
    %p113 = por %p111, %p112
    %p114 = scmp.ne.s32.totalorder %s103, %s106
    %p115 = scmp.eq.s32.totalorder %s14, 1
    %p116 = por %p114, %p115
    %p117 = scmp.ne.s32.totalorder %s106, %s107
    %p118 = scmp.eq.s32.totalorder %s14, 0
    %p119 = por %p117, %p118
    %p120 = scmp.ne.s32.totalorder %s106, %s107
    %p121 = scmp.eq.s32.totalorder %s15, 1
    %p122 = por %p120, %p121
    %p124 = scmp.ne.s32.totalorder %s107, %s123
    %p125 = scmp.eq.s32.totalorder %s15, 0
    %p126 = por %p124, %p125
    %p127 = scmp.le.s32.totalorder 1, %s9
    %p128 = scmp.lt.s32.totalorder %s9, 3
    %p129 = pnand %p127, %p128
    %p130 = pneg %p129
    // Predicated region
    $region9: #{_lambda_.6} parent=5 // pred_check
      _
    $region10: #{_lambda_.6} parent=5 // pred_check_branch
      %132 = sbr.rel (%p129) target = $region12
    $region11: #{_lambda_.6} parent=5 // pred_region
      %s133 = ssub.s32 %s9, 1
      // Predicated region
      $region13: #{_lambda_.6} parent=11 // pred_check
        %p134 = pneg %p70
      $region14: #{_lambda_.6} parent=11 // pred_check_branch
        %136 = sbr.rel (%p134) target = $region16
      $region15: #{_lambda_.6} parent=11 // pred_region
        _
      $region16: #{_lambda_.6} parent=11 // pred_fallthru
        _
      // Predicated region
      $region17: #{_lambda_.6} parent=11 // pred_check
        %p137 = pneg %p91
      $region18: #{_lambda_.6} parent=11 // pred_check_branch
        %139 = sbr.rel (%p137) target = $region20
      $region19: #{_lambda_.6} parent=11 // pred_region
        _
      $region20: #{_lambda_.6} parent=11 // pred_fallthru
        _
    $region12: #{_lambda_.6} parent=5 // pred_fallthru
      _
    %p140 = scmp.lt.s32.totalorder %s9, 2
    // Predicated region
    $region21: #{_lambda_.6} parent=5 // pred_check
      %p141 = pneg %p140
    $region22: #{_lambda_.6} parent=5 // pred_check_branch
      %143 = sbr.rel (%p141) target = $region24
    $region23: #{_lambda_.6} parent=5 // pred_region
      // Predicated region
      $region25: #{_lambda_.6} parent=23 // pred_check
        %p144 = pneg %p43
      $region26: #{_lambda_.6} parent=23 // pred_check_branch
        %146 = sbr.rel (%p144) target = $region28
      $region27: #{_lambda_.6} parent=23 // pred_region
        %s147 = smul.u32 24, %s17
        %p148 = scmp.lt.s32.totalorder %s16, 1
        %s149 = scalar_select %p148, %s16, 1
        %p150 = scmp.lt.s32.totalorder %s147, 23
        %s151 = scalar_select %p150, %s147, 23
        %s152 = smul.addr %s149, 96
        %s153 = sadd.s32 %s151, %s152
        %s154 = smul.addr %s153, 4
        %s155 = scalar_lea.vmem %s0, %s154
        %s156 = smul.u32 24, %s17
      $region28: #{_lambda_.6} parent=23 // pred_fallthru
        _
    $region24: #{_lambda_.6} parent=5 // pred_fallthru
      _
    %p157 = scmp.le.s32.totalorder 1, %s9
    %p158 = scmp.lt.s32.totalorder %s9, 3
    %p159 = pnand %p157, %p158
    %p160 = pneg %p159
    // Predicated region
    $region29: #{_lambda_.6} parent=5 // pred_check
      _
    $region30: #{_lambda_.6} parent=5 // pred_check_branch
      %162 = sbr.rel (%p159) target = $region32
    $region31: #{_lambda_.6} parent=5 // pred_region
      %s163 = ssub.s32 %s9, 1
      %s164 = smul.u32 24, %s19
      %p165 = scmp.lt.s32.totalorder %s18, 1
      %s166 = scalar_select %p165, %s18, 1
      %p167 = scmp.lt.s32.totalorder %s164, 23
      %s168 = scalar_select %p167, %s164, 23
      %s169 = smul.addr %s166, 96
      %s170 = sadd.s32 %s168, %s169
      %s171 = smul.addr %s170, 4
      %s172 = scalar_lea.vmem %s0, %s171
      %p173 = pneg %p49
      %p174 = pneg %p46
      %p175 = pneg %p70
      %p176 = pneg %p67
      %p177 = pneg %p91
      %p178 = pneg %p88
      %p179 = pneg %p119
      %p180 = pneg %p116
      %s181 = smul.u32 24, %s19
      %p182 = scmp.lt.s32.totalorder %s18, 1
      %s183 = scalar_select %p182, %s18, 1
      %p184 = scmp.lt.s32.totalorder %s181, 23
      %s185 = scalar_select %p184, %s181, 23
      %s186 = smul.addr %s183, 24
      %s187 = sadd.s32 %s185, %s186
      %s188 = smul.addr %s187, 4
      %s189 = scalar_lea.vmem %s3, %s188
      %s190 = smul.u32 24, %s19
      %p191 = scmp.lt.s32.totalorder %s18, 1
      %s192 = scalar_select %p191, %s18, 1
      %p193 = scmp.lt.s32.totalorder %s190, 23
      %s194 = scalar_select %p193, %s190, 23
      %s195 = smul.addr %s192, 96
      %s196 = sadd.s32 %s194, %s195
      %s197 = smul.addr %s196, 4
      %s198 = scalar_lea.vmem %s0, %s197
      %s199 = smul.u32 24, %s19
      %s200 = smul.u32 24, %s19
      %p201 = scmp.lt.s32.totalorder %s18, 1
      %s202 = scalar_select %p201, %s18, 1
      %p203 = scmp.lt.s32.totalorder %s200, 23
      %s204 = scalar_select %p203, %s200, 23
      %s205 = smul.addr %s202, 24
      %s206 = sadd.s32 %s204, %s205
      %s207 = smul.addr %s206, 4
      %s208 = scalar_lea.vmem %s3, %s207
      %s209 = smul.u32 24, %s19
      %v211 = vld [vmem:[%s1] sm:$0xf]
      %v212 = vld [vmem:[%s1 + $0x4] sm:$0xf]
      %v213 = vld [vmem:[%s1 + $0x8] sm:$0xf]
      %v214 = vld [vmem:[%s1 + $0xc] sm:$0xf]
      %v215 = vld [vmem:[%s1 + $0x10] sm:$0x3]
      %v216 = vld [vmem:[%s2] sm:$0x1]
      %v217 = vld [vmem:[%s198] sm:$0xf]
      %v218 = vld [vmem:[%s198 + $0x4] sm:$0xf]
      %v219 = vld [vmem:[%s198 + $0x8] sm:$0xf]
      %v220 = vld [vmem:[%s198 + $0xc] sm:$0xf]
      %v221 = vld [vmem:[%s198 + $0x10] sm:$0xf]
      %v222 = vld [vmem:[%s198 + $0x14] sm:$0xf]
      %v223 = vld [vmem:[%s198 + $0x18] sm:$0xf]
      %v224 = vld [vmem:[%s198 + $0x1c] sm:$0xf]
      %v225 = vld [vmem:[%s198 + $0x20] sm:$0xf]
      %v226 = vld [vmem:[%s198 + $0x24] sm:$0xf]
      %v227 = vld [vmem:[%s198 + $0x28] sm:$0xf]
      %v228 = vld [vmem:[%s198 + $0x2c] sm:$0xf]
      %v229 = vld [vmem:[%s198 + $0x30] sm:$0xf]
      %v230 = vld [vmem:[%s198 + $0x34] sm:$0xf]
      %v231 = vld [vmem:[%s198 + $0x38] sm:$0xf]
      %v232 = vld [vmem:[%s198 + $0x3c] sm:$0xf]
      %v233 = vld [vmem:[%s198 + $0x40] sm:$0xf]
      %v234 = vld [vmem:[%s198 + $0x44] sm:$0xf]
      %v235 = vld [vmem:[%s198 + $0x48] sm:$0xf]
      %v236 = vld [vmem:[%s198 + $0x4c] sm:$0xf]
      %v237 = vld [vmem:[%s198 + $0x50] sm:$0xf]
      %v238 = vld [vmem:[%s198 + $0x54] sm:$0xf]
      %v239 = vld [vmem:[%s198 + $0x58] sm:$0xf]
      %v240 = vld [vmem:[%s198 + $0x5c] sm:$0xf]
      %v241 = vld [vmem:[%s198 + $0x60] sm:$0xf]
      %v242 = vld [vmem:[%s198 + $0x64] sm:$0xf]
      %v243 = vld [vmem:[%s198 + $0x68] sm:$0xf]
      %v244 = vld [vmem:[%s198 + $0x6c] sm:$0xf]
      %v245 = vld [vmem:[%s198 + $0x70] sm:$0xf]
      %v246 = vld [vmem:[%s198 + $0x74] sm:$0xf]
      %v247 = vld [vmem:[%s198 + $0x78] sm:$0xf]
      %v248 = vld [vmem:[%s198 + $0x7c] sm:$0xf]
      %v249 = vld [vmem:[%s198 + $0x80] sm:$0xf]
      %v250 = vld [vmem:[%s198 + $0x84] sm:$0xf]
      %v251 = vld [vmem:[%s198 + $0x88] sm:$0xf]
      %v252 = vld [vmem:[%s198 + $0x8c] sm:$0xf]
      %v253 = vld [vmem:[%s198 + $0x90] sm:$0xf]
      %v254 = vld [vmem:[%s198 + $0x94] sm:$0xf]
      %v255 = vld [vmem:[%s198 + $0x98] sm:$0xf]
      %v256 = vld [vmem:[%s198 + $0x9c] sm:$0xf]
      %v257 = vld [vmem:[%s198 + $0xa0] sm:$0xf]
      %v258 = vld [vmem:[%s198 + $0xa4] sm:$0xf]
      %v259 = vld [vmem:[%s198 + $0xa8] sm:$0xf]
      %v260 = vld [vmem:[%s198 + $0xac] sm:$0xf]
      %v261 = vld [vmem:[%s198 + $0xb0] sm:$0xf]
      %v262 = vld [vmem:[%s198 + $0xb4] sm:$0xf]
      %v263 = vld [vmem:[%s198 + $0xb8] sm:$0xf]
      %v264 = vld [vmem:[%s198 + $0xbc] sm:$0xf]
      %v265 = vld [vmem:[%s198 + $0xc0] sm:$0xf]
      %v266 = vld [vmem:[%s198 + $0xc4] sm:$0xf]
      %v267 = vld [vmem:[%s198 + $0xc8] sm:$0xf]
      %v268 = vld [vmem:[%s198 + $0xcc] sm:$0xf]
      %v269 = vld [vmem:[%s198 + $0xd0] sm:$0xf]
      %v270 = vld [vmem:[%s198 + $0xd4] sm:$0xf]
      %v271 = vld [vmem:[%s198 + $0xd8] sm:$0xf]
      %v272 = vld [vmem:[%s198 + $0xdc] sm:$0xf]
      %v273 = vld [vmem:[%s198 + $0xe0] sm:$0xf]
      %v274 = vld [vmem:[%s198 + $0xe4] sm:$0xf]
      %v275 = vld [vmem:[%s198 + $0xe8] sm:$0xf]
      %v276 = vld [vmem:[%s198 + $0xec] sm:$0xf]
      %v277 = vld [vmem:[%s198 + $0xf0] sm:$0xf]
      %v278 = vld [vmem:[%s198 + $0xf4] sm:$0xf]
      %v279 = vld [vmem:[%s198 + $0xf8] sm:$0xf]
      %v280 = vld [vmem:[%s198 + $0xfc] sm:$0xf]
      %v281 = vld [vmem:[%s198 + $0x100] sm:$0xf]
      %v282 = vld [vmem:[%s198 + $0x104] sm:$0xf]
      %v283 = vld [vmem:[%s198 + $0x108] sm:$0xf]
      %v284 = vld [vmem:[%s198 + $0x10c] sm:$0xf]
      %v285 = vld [vmem:[%s198 + $0x110] sm:$0xf]
      %v286 = vld [vmem:[%s198 + $0x114] sm:$0xf]
      %v287 = vld [vmem:[%s198 + $0x118] sm:$0xf]
      %v288 = vld [vmem:[%s198 + $0x11c] sm:$0xf]
      %v289 = vld [vmem:[%s198 + $0x120] sm:$0xf]
      %v290 = vld [vmem:[%s198 + $0x124] sm:$0xf]
      %v291 = vld [vmem:[%s198 + $0x128] sm:$0xf]
      %v292 = vld [vmem:[%s198 + $0x12c] sm:$0xf]
      %v293 = vld [vmem:[%s198 + $0x130] sm:$0xf]
      %v294 = vld [vmem:[%s198 + $0x134] sm:$0xf]
      %v295 = vld [vmem:[%s198 + $0x138] sm:$0xf]
      %v296 = vld [vmem:[%s198 + $0x13c] sm:$0xf]
      %v297 = vld [vmem:[%s198 + $0x140] sm:$0xf]
      %v298 = vld [vmem:[%s198 + $0x144] sm:$0xf]
      %v299 = vld [vmem:[%s198 + $0x148] sm:$0xf]
      %v300 = vld [vmem:[%s198 + $0x14c] sm:$0xf]
      %v301 = vld [vmem:[%s198 + $0x150] sm:$0xf]
      %v302 = vld [vmem:[%s198 + $0x154] sm:$0xf]
      %v303 = vld [vmem:[%s198 + $0x158] sm:$0xf]
      %v304 = vld [vmem:[%s198 + $0x15c] sm:$0xf]
      %v305 = vld [vmem:[%s198 + $0x160] sm:$0xf]
      %v306 = vld [vmem:[%s198 + $0x164] sm:$0xf]
      %v307 = vld [vmem:[%s198 + $0x168] sm:$0xf]
      %v308 = vld [vmem:[%s198 + $0x16c] sm:$0xf]
      %v309 = vld [vmem:[%s198 + $0x170] sm:$0xf]
      %v310 = vld [vmem:[%s198 + $0x174] sm:$0xf]
      %v311 = vld [vmem:[%s198 + $0x178] sm:$0xf]
      %v312 = vld [vmem:[%s198 + $0x17c] sm:$0xf]
      %v314 = vperm.slane %v216, 0
      %v412 = vunpack.c.l.b16 %v217
      %v413 = vunpack.c.l.b16 %v218
      %v414 = vunpack.c.l.b16 %v219
      %v415 = vunpack.c.l.b16 %v220
      %v416 = vunpack.c.l.b16 %v221
      %v417 = vunpack.c.l.b16 %v222
      %v418 = vunpack.c.l.b16 %v223
      %v419 = vunpack.c.l.b16 %v224
      %v420 = vunpack.c.l.b16 %v225
      %v421 = vunpack.c.l.b16 %v226
      %v422 = vunpack.c.l.b16 %v227
      %v423 = vunpack.c.l.b16 %v228
      %v424 = vunpack.c.l.b16 %v229
      %v425 = vunpack.c.l.b16 %v230
      %v426 = vunpack.c.l.b16 %v231
      %v427 = vunpack.c.l.b16 %v232
      %v428 = vunpack.c.l.b16 %v233
      %v429 = vunpack.c.l.b16 %v234
      %v430 = vunpack.c.l.b16 %v235
      %v431 = vunpack.c.l.b16 %v236
      %v432 = vunpack.c.l.b16 %v237
      %v433 = vunpack.c.l.b16 %v238
      %v434 = vunpack.c.l.b16 %v239
      %v435 = vunpack.c.l.b16 %v240
      %v436 = vunpack.c.l.b16 %v241
      %v437 = vunpack.c.l.b16 %v242
      %v438 = vunpack.c.l.b16 %v243
      %v439 = vunpack.c.l.b16 %v244
      %v440 = vunpack.c.l.b16 %v245
      %v441 = vunpack.c.l.b16 %v246
      %v442 = vunpack.c.l.b16 %v247
      %v443 = vunpack.c.l.b16 %v248
      %v444 = vunpack.c.l.b16 %v249
      %v445 = vunpack.c.l.b16 %v250
      %v446 = vunpack.c.l.b16 %v251
      %v447 = vunpack.c.l.b16 %v252
      %v448 = vunpack.c.l.b16 %v253
      %v449 = vunpack.c.l.b16 %v254
      %v450 = vunpack.c.l.b16 %v255
      %v451 = vunpack.c.l.b16 %v256
      %v452 = vunpack.c.l.b16 %v257
      %v453 = vunpack.c.l.b16 %v258
      %v454 = vunpack.c.l.b16 %v259
      %v455 = vunpack.c.l.b16 %v260
      %v456 = vunpack.c.l.b16 %v261
      %v457 = vunpack.c.l.b16 %v262
      %v458 = vunpack.c.l.b16 %v263
      %v459 = vunpack.c.l.b16 %v264
      %v460 = vunpack.c.l.b16 %v265
      %v461 = vunpack.c.l.b16 %v266
      %v462 = vunpack.c.l.b16 %v267
      %v463 = vunpack.c.l.b16 %v268
      %v464 = vunpack.c.l.b16 %v269
      %v465 = vunpack.c.l.b16 %v270
      %v466 = vunpack.c.l.b16 %v271
      %v467 = vunpack.c.l.b16 %v272
      %v468 = vunpack.c.l.b16 %v273
      %v469 = vunpack.c.l.b16 %v274
      %v470 = vunpack.c.l.b16 %v275
      %v471 = vunpack.c.l.b16 %v276
      %v472 = vunpack.c.l.b16 %v277
      %v473 = vunpack.c.l.b16 %v278
      %v474 = vunpack.c.l.b16 %v279
      %v475 = vunpack.c.l.b16 %v280
      %v476 = vunpack.c.l.b16 %v281
      %v477 = vunpack.c.l.b16 %v282
      %v478 = vunpack.c.l.b16 %v283
      %v479 = vunpack.c.l.b16 %v284
      %v480 = vunpack.c.l.b16 %v285
      %v481 = vunpack.c.l.b16 %v286
      %v482 = vunpack.c.l.b16 %v287
      %v483 = vunpack.c.l.b16 %v288
      %v484 = vunpack.c.l.b16 %v289
      %v485 = vunpack.c.l.b16 %v290
      %v486 = vunpack.c.l.b16 %v291
      %v487 = vunpack.c.l.b16 %v292
      %v488 = vunpack.c.l.b16 %v293
      %v489 = vunpack.c.l.b16 %v294
      %v490 = vunpack.c.l.b16 %v295
      %v491 = vunpack.c.l.b16 %v296
      %v492 = vunpack.c.l.b16 %v297
      %v493 = vunpack.c.l.b16 %v298
      %v494 = vunpack.c.l.b16 %v299
      %v495 = vunpack.c.l.b16 %v300
      %v496 = vunpack.c.l.b16 %v301
      %v497 = vunpack.c.l.b16 %v302
      %v498 = vunpack.c.l.b16 %v303
      %v499 = vunpack.c.l.b16 %v304
      %v500 = vunpack.c.l.b16 %v305
      %v501 = vunpack.c.l.b16 %v306
      %v502 = vunpack.c.l.b16 %v307
      %v503 = vunpack.c.l.b16 %v308
      %v504 = vunpack.c.l.b16 %v309
      %v505 = vunpack.c.l.b16 %v310
      %v506 = vunpack.c.l.b16 %v311
      %v507 = vunpack.c.l.b16 %v312
      %v508 = vpack.c.b16 %v413, %v412
      %v509 = vpack.c.b16 %v415, %v414
      %v510 = vpack.c.b16 %v417, %v416
      %v511 = vpack.c.b16 %v419, %v418
      %v512 = vpack.c.b16 %v421, %v420
      %v513 = vpack.c.b16 %v423, %v422
      %v514 = vpack.c.b16 %v425, %v424
      %v515 = vpack.c.b16 %v427, %v426
      %v516 = vpack.c.b16 %v429, %v428
      %v517 = vpack.c.b16 %v431, %v430
      %v518 = vpack.c.b16 %v433, %v432
      %v519 = vpack.c.b16 %v435, %v434
      %v520 = vpack.c.b16 %v437, %v436
      %v521 = vpack.c.b16 %v439, %v438
      %v522 = vpack.c.b16 %v441, %v440
      %v523 = vpack.c.b16 %v443, %v442
      %v524 = vpack.c.b16 %v445, %v444
      %v525 = vpack.c.b16 %v447, %v446
      %v526 = vpack.c.b16 %v449, %v448
      %v527 = vpack.c.b16 %v451, %v450
      %v528 = vpack.c.b16 %v453, %v452
      %v529 = vpack.c.b16 %v455, %v454
      %v530 = vpack.c.b16 %v457, %v456
      %v531 = vpack.c.b16 %v459, %v458
      %v532 = vpack.c.b16 %v461, %v460
      %v533 = vpack.c.b16 %v463, %v462
      %v534 = vpack.c.b16 %v465, %v464
      %v535 = vpack.c.b16 %v467, %v466
      %v536 = vpack.c.b16 %v469, %v468
      %v537 = vpack.c.b16 %v471, %v470
      %v538 = vpack.c.b16 %v473, %v472
      %v539 = vpack.c.b16 %v475, %v474
      %v540 = vpack.c.b16 %v477, %v476
      %v541 = vpack.c.b16 %v479, %v478
      %v542 = vpack.c.b16 %v481, %v480
      %v543 = vpack.c.b16 %v483, %v482
      %v544 = vpack.c.b16 %v485, %v484
      %v545 = vpack.c.b16 %v487, %v486
      %v546 = vpack.c.b16 %v489, %v488
      %v547 = vpack.c.b16 %v491, %v490
      %v548 = vpack.c.b16 %v493, %v492
      %v549 = vpack.c.b16 %v495, %v494
      %v550 = vpack.c.b16 %v497, %v496
      %v551 = vpack.c.b16 %v499, %v498
      %v552 = vpack.c.b16 %v501, %v500
      %v553 = vpack.c.b16 %v503, %v502
      %v554 = vpack.c.b16 %v505, %v504
      %v555 = vpack.c.b16 %v507, %v506
      %v561 = vunpack.c.l.b16 %v211
      %v562 = vunpack.c.l.b16 %v212
      %v563 = vunpack.c.l.b16 %v213
      %v564 = vunpack.c.l.b16 %v214
      %v565 = vunpack.c.l.b16 %v215
      %v566 = vpack.c.b16 %v562, %v561
      %v567 = vpack.c.b16 %v564, %v563
      %v568 = vpack.c.b16 %v565, %v565
      %vm571 = vcmask 293888
      %v573 = vsel %vm571, %v508, 0
      %v576 = vsel %vm571, %v509, 0
      %v579 = vsel %vm571, %v510, 0
      %v582 = vsel %vm571, %v511, 0
      %v585 = vsel %vm571, %v512, 0
      %v588 = vsel %vm571, %v513, 0
      %v591 = vsel %vm571, %v514, 0
      %v594 = vsel %vm571, %v515, 0
      %v597 = vsel %vm571, %v516, 0
      %v600 = vsel %vm571, %v517, 0
      %v603 = vsel %vm571, %v518, 0
      %v606 = vsel %vm571, %v519, 0
      %v609 = vsel %vm571, %v520, 0
      %v612 = vsel %vm571, %v521, 0
      %v615 = vsel %vm571, %v522, 0
      %v618 = vsel %vm571, %v523, 0
      %v621 = vsel %vm571, %v524, 0
      %v624 = vsel %vm571, %v525, 0
      %v627 = vsel %vm571, %v526, 0
      %v630 = vsel %vm571, %v527, 0
      %v633 = vsel %vm571, %v528, 0
      %v636 = vsel %vm571, %v529, 0
      %v639 = vsel %vm571, %v530, 0
      %v642 = vsel %vm571, %v531, 0
      %v645 = vsel %vm571, %v532, 0
      %v648 = vsel %vm571, %v533, 0
      %v651 = vsel %vm571, %v534, 0
      %v654 = vsel %vm571, %v535, 0
      %v657 = vsel %vm571, %v536, 0
      %v660 = vsel %vm571, %v537, 0
      %v663 = vsel %vm571, %v538, 0
      %v666 = vsel %vm571, %v539, 0
      %v669 = vsel %vm571, %v540, 0
      %v672 = vsel %vm571, %v541, 0
      %v675 = vsel %vm571, %v542, 0
      %v678 = vsel %vm571, %v543, 0
      %v681 = vsel %vm571, %v544, 0
      %v684 = vsel %vm571, %v545, 0
      %v687 = vsel %vm571, %v546, 0
      %v690 = vsel %vm571, %v547, 0
      %v693 = vsel %vm571, %v548, 0
      %v696 = vsel %vm571, %v549, 0
      %v699 = vsel %vm571, %v550, 0
      %v702 = vsel %vm571, %v551, 0
      %v705 = vsel %vm571, %v552, 0
      %v708 = vsel %vm571, %v553, 0
      %v711 = vsel %vm571, %v554, 0
      %v714 = vsel %vm571, %v555, 0
      %vm716 = vcmask 1041408
      %v718 = vsel %vm716, %v568, 0
      %720 = vmatpush.bf16.msra.mxu0 0
      %721 = vmatpush.bf16.msra.mxu0 0
      %722 = vmatpush.bf16.msra.mxu0 0
      %723 = vmatpush.bf16.msra.mxu0 0
      %724 = vmatpush.bf16.msra.mxu0 0
      %725 = vmatpush.bf16.msra.mxu0 %v718
      %726 = vmatpush.bf16.msra.mxu0 %v567
      %727 = vmatpush.bf16.msra.mxu0 %v566
      %728 = vmatmul.bf16.gmra.mxu0 %v573
      %v729 = vpop.f32.mrf.mxu0
      %v730 = vadd.f32 %v314, %v729
      %v731 = vpop.f32.mrf.mxu0
      %v732 = vadd.f32 %v314, %v731
      %733 = vmatmul.bf16.gmra.mxu0 %v576
      %v734 = vpop.f32.mrf.mxu0
      %v735 = vadd.f32 %v314, %v734
      %v736 = vpop.f32.mrf.mxu0
      %v737 = vadd.f32 %v314, %v736
      %738 = vmatmul.bf16.gmra.mxu0 %v579
      %v739 = vpop.f32.mrf.mxu0
      %v740 = vadd.f32 %v314, %v739
      %v741 = vpop.f32.mrf.mxu0
      %v742 = vadd.f32 %v314, %v741
      %743 = vmatmul.bf16.gmra.mxu0 %v582
      %v744 = vpop.f32.mrf.mxu0
      %v745 = vadd.f32 %v314, %v744
      %v746 = vpop.f32.mrf.mxu0
      %v747 = vadd.f32 %v314, %v746
      %748 = vmatmul.bf16.gmra.mxu0 %v585
      %v749 = vpop.f32.mrf.mxu0
      %v750 = vadd.f32 %v314, %v749
      %v751 = vpop.f32.mrf.mxu0
      %v752 = vadd.f32 %v314, %v751
      %753 = vmatmul.bf16.gmra.mxu0 %v588
      %v754 = vpop.f32.mrf.mxu0
      %v755 = vadd.f32 %v314, %v754
      %v756 = vpop.f32.mrf.mxu0
      %v757 = vadd.f32 %v314, %v756
      %758 = vmatmul.bf16.gmra.mxu0 %v591
      %v759 = vpop.f32.mrf.mxu0
      %v760 = vadd.f32 %v314, %v759
      %v761 = vpop.f32.mrf.mxu0
      %v762 = vadd.f32 %v314, %v761
      %763 = vmatmul.bf16.gmra.mxu0 %v594
      %v764 = vpop.f32.mrf.mxu0
      %v765 = vadd.f32 %v314, %v764
      %v766 = vpop.f32.mrf.mxu0
      %v767 = vadd.f32 %v314, %v766
      %768 = vmatmul.bf16.gmra.mxu0 %v597
      %v769 = vpop.f32.mrf.mxu0
      %v770 = vadd.f32 %v314, %v769
      %v771 = vpop.f32.mrf.mxu0
      %v772 = vadd.f32 %v314, %v771
      %773 = vmatmul.bf16.gmra.mxu0 %v600
      %v774 = vpop.f32.mrf.mxu0
      %v775 = vadd.f32 %v314, %v774
      %v776 = vpop.f32.mrf.mxu0
      %v777 = vadd.f32 %v314, %v776
      %778 = vmatmul.bf16.gmra.mxu0 %v603
      %v779 = vpop.f32.mrf.mxu0
      %v780 = vadd.f32 %v314, %v779
      %v781 = vpop.f32.mrf.mxu0
      %v782 = vadd.f32 %v314, %v781
      %783 = vmatmul.bf16.gmra.mxu0 %v606
      %v784 = vpop.f32.mrf.mxu0
      %v785 = vadd.f32 %v314, %v784
      %v786 = vpop.f32.mrf.mxu0
      %v787 = vadd.f32 %v314, %v786
      %788 = vmatmul.bf16.gmra.mxu0 %v609
      %v789 = vpop.f32.mrf.mxu0
      %v790 = vadd.f32 %v314, %v789
      %v791 = vpop.f32.mrf.mxu0
      %v792 = vadd.f32 %v314, %v791
      %793 = vmatmul.bf16.gmra.mxu0 %v612
      %v794 = vpop.f32.mrf.mxu0
      %v795 = vadd.f32 %v314, %v794
      %v796 = vpop.f32.mrf.mxu0
      %v797 = vadd.f32 %v314, %v796
      %798 = vmatmul.bf16.gmra.mxu0 %v615
      %v799 = vpop.f32.mrf.mxu0
      %v800 = vadd.f32 %v314, %v799
      %v801 = vpop.f32.mrf.mxu0
      %v802 = vadd.f32 %v314, %v801
      %803 = vmatmul.bf16.gmra.mxu0 %v618
      %v804 = vpop.f32.mrf.mxu0
      %v805 = vadd.f32 %v314, %v804
      %v806 = vpop.f32.mrf.mxu0
      %v807 = vadd.f32 %v314, %v806
      %808 = vmatmul.bf16.gmra.mxu0 %v621
      %v809 = vpop.f32.mrf.mxu0
      %v810 = vadd.f32 %v314, %v809
      %v811 = vpop.f32.mrf.mxu0
      %v812 = vadd.f32 %v314, %v811
      %813 = vmatmul.bf16.gmra.mxu0 %v624
      %v814 = vpop.f32.mrf.mxu0
      %v815 = vadd.f32 %v314, %v814
      %v816 = vpop.f32.mrf.mxu0
      %v817 = vadd.f32 %v314, %v816
      %818 = vmatmul.bf16.gmra.mxu0 %v627
      %v819 = vpop.f32.mrf.mxu0
      %v820 = vadd.f32 %v314, %v819
      %v821 = vpop.f32.mrf.mxu0
      %v822 = vadd.f32 %v314, %v821
      %823 = vmatmul.bf16.gmra.mxu0 %v630
      %v824 = vpop.f32.mrf.mxu0
      %v825 = vadd.f32 %v314, %v824
      %v826 = vpop.f32.mrf.mxu0
      %v827 = vadd.f32 %v314, %v826
      %828 = vmatmul.bf16.gmra.mxu0 %v633
      %v829 = vpop.f32.mrf.mxu0
      %v830 = vadd.f32 %v314, %v829
      %v831 = vpop.f32.mrf.mxu0
      %v832 = vadd.f32 %v314, %v831
      %833 = vmatmul.bf16.gmra.mxu0 %v636
      %v834 = vpop.f32.mrf.mxu0
      %v835 = vadd.f32 %v314, %v834
      %v836 = vpop.f32.mrf.mxu0
      %v837 = vadd.f32 %v314, %v836
      %838 = vmatmul.bf16.gmra.mxu0 %v639
      %v839 = vpop.f32.mrf.mxu0
      %v840 = vadd.f32 %v314, %v839
      %v841 = vpop.f32.mrf.mxu0
      %v842 = vadd.f32 %v314, %v841
      %843 = vmatmul.bf16.gmra.mxu0 %v642
      %v844 = vpop.f32.mrf.mxu0
      %v845 = vadd.f32 %v314, %v844
      %v846 = vpop.f32.mrf.mxu0
      %v847 = vadd.f32 %v314, %v846
      %848 = vmatmul.bf16.gmra.mxu0 %v645
      %v849 = vpop.f32.mrf.mxu0
      %v850 = vadd.f32 %v314, %v849
      %v851 = vpop.f32.mrf.mxu0
      %v852 = vadd.f32 %v314, %v851
      %853 = vmatmul.bf16.gmra.mxu0 %v648
      %v854 = vpop.f32.mrf.mxu0
      %v855 = vadd.f32 %v314, %v854
      %v856 = vpop.f32.mrf.mxu0
      %v857 = vadd.f32 %v314, %v856
      %858 = vmatmul.bf16.gmra.mxu0 %v651
      %v859 = vpop.f32.mrf.mxu0
      %v860 = vadd.f32 %v314, %v859
      %v861 = vpop.f32.mrf.mxu0
      %v862 = vadd.f32 %v314, %v861
      %863 = vmatmul.bf16.gmra.mxu0 %v654
      %v864 = vpop.f32.mrf.mxu0
      %v865 = vadd.f32 %v314, %v864
      %v866 = vpop.f32.mrf.mxu0
      %v867 = vadd.f32 %v314, %v866
      %868 = vmatmul.bf16.gmra.mxu0 %v657
      %v869 = vpop.f32.mrf.mxu0
      %v870 = vadd.f32 %v314, %v869
      %v871 = vpop.f32.mrf.mxu0
      %v872 = vadd.f32 %v314, %v871
      %873 = vmatmul.bf16.gmra.mxu0 %v660
      %v874 = vpop.f32.mrf.mxu0
      %v875 = vadd.f32 %v314, %v874
      %v876 = vpop.f32.mrf.mxu0
      %v877 = vadd.f32 %v314, %v876
      %878 = vmatmul.bf16.gmra.mxu0 %v663
      %v879 = vpop.f32.mrf.mxu0
      %v880 = vadd.f32 %v314, %v879
      %v881 = vpop.f32.mrf.mxu0
      %v882 = vadd.f32 %v314, %v881
      %883 = vmatmul.bf16.gmra.mxu0 %v666
      %v884 = vpop.f32.mrf.mxu0
      %v885 = vadd.f32 %v314, %v884
      %v886 = vpop.f32.mrf.mxu0
      %v887 = vadd.f32 %v314, %v886
      %888 = vmatmul.bf16.gmra.mxu0 %v669
      %v889 = vpop.f32.mrf.mxu0
      %v890 = vadd.f32 %v314, %v889
      %v891 = vpop.f32.mrf.mxu0
      %v892 = vadd.f32 %v314, %v891
      %893 = vmatmul.bf16.gmra.mxu0 %v672
      %v894 = vpop.f32.mrf.mxu0
      %v895 = vadd.f32 %v314, %v894
      %v896 = vpop.f32.mrf.mxu0
      %v897 = vadd.f32 %v314, %v896
      %898 = vmatmul.bf16.gmra.mxu0 %v675
      %v899 = vpop.f32.mrf.mxu0
      %v900 = vadd.f32 %v314, %v899
      %v901 = vpop.f32.mrf.mxu0
      %v902 = vadd.f32 %v314, %v901
      %903 = vmatmul.bf16.gmra.mxu0 %v678
      %v904 = vpop.f32.mrf.mxu0
      %v905 = vadd.f32 %v314, %v904
      %v906 = vpop.f32.mrf.mxu0
      %v907 = vadd.f32 %v314, %v906
      %908 = vmatmul.bf16.gmra.mxu0 %v681
      %v909 = vpop.f32.mrf.mxu0
      %v910 = vadd.f32 %v314, %v909
      %v911 = vpop.f32.mrf.mxu0
      %v912 = vadd.f32 %v314, %v911
      %913 = vmatmul.bf16.gmra.mxu0 %v684
      %v914 = vpop.f32.mrf.mxu0
      %v915 = vadd.f32 %v314, %v914
      %v916 = vpop.f32.mrf.mxu0
      %v917 = vadd.f32 %v314, %v916
      %918 = vmatmul.bf16.gmra.mxu0 %v687
      %v919 = vpop.f32.mrf.mxu0
      %v920 = vadd.f32 %v314, %v919
      %v921 = vpop.f32.mrf.mxu0
      %v922 = vadd.f32 %v314, %v921
      %923 = vmatmul.bf16.gmra.mxu0 %v690
      %v924 = vpop.f32.mrf.mxu0
      %v925 = vadd.f32 %v314, %v924
      %v926 = vpop.f32.mrf.mxu0
      %v927 = vadd.f32 %v314, %v926
      %928 = vmatmul.bf16.gmra.mxu0 %v693
      %v929 = vpop.f32.mrf.mxu0
      %v930 = vadd.f32 %v314, %v929
      %v931 = vpop.f32.mrf.mxu0
      %v932 = vadd.f32 %v314, %v931
      %933 = vmatmul.bf16.gmra.mxu0 %v696
      %v934 = vpop.f32.mrf.mxu0
      %v935 = vadd.f32 %v314, %v934
      %v936 = vpop.f32.mrf.mxu0
      %v937 = vadd.f32 %v314, %v936
      %938 = vmatmul.bf16.gmra.mxu0 %v699
      %v939 = vpop.f32.mrf.mxu0
      %v940 = vadd.f32 %v314, %v939
      %v941 = vpop.f32.mrf.mxu0
      %v942 = vadd.f32 %v314, %v941
      %943 = vmatmul.bf16.gmra.mxu0 %v702
      %v944 = vpop.f32.mrf.mxu0
      %v945 = vadd.f32 %v314, %v944
      %v946 = vpop.f32.mrf.mxu0
      %v947 = vadd.f32 %v314, %v946
      %948 = vmatmul.bf16.gmra.mxu0 %v705
      %v949 = vpop.f32.mrf.mxu0
      %v950 = vadd.f32 %v314, %v949
      %v951 = vpop.f32.mrf.mxu0
      %v952 = vadd.f32 %v314, %v951
      %953 = vmatmul.bf16.gmra.mxu0 %v708
      %v954 = vpop.f32.mrf.mxu0
      %v955 = vadd.f32 %v314, %v954
      %v956 = vpop.f32.mrf.mxu0
      %v957 = vadd.f32 %v314, %v956
      %958 = vmatmul.bf16.gmra.mxu0 %v711
      %v959 = vpop.f32.mrf.mxu0
      %v960 = vadd.f32 %v314, %v959
      %v961 = vpop.f32.mrf.mxu0
      %v962 = vadd.f32 %v314, %v961
      %963 = vmatmul.bf16.gmra.mxu0 %v714
      %v964 = vpop.f32.mrf.mxu0
      %v965 = vadd.f32 %v314, %v964
      %v966 = vpop.f32.mrf.mxu0
      %v967 = vadd.f32 %v314, %v966
      %968 = vdwg.mxu0
      %vm969 = vcmp.gt.f32.partialorder %v730, 0.0
      %vm970 = vcmp.gt.f32.partialorder %v732, 0.0
      %vm971 = vcmp.gt.f32.partialorder %v735, 0.0
      %vm972 = vcmp.gt.f32.partialorder %v737, 0.0
      %vm973 = vcmp.gt.f32.partialorder %v740, 0.0
      %vm974 = vcmp.gt.f32.partialorder %v742, 0.0
      %vm975 = vcmp.gt.f32.partialorder %v745, 0.0
      %vm976 = vcmp.gt.f32.partialorder %v747, 0.0
      %vm977 = vcmp.gt.f32.partialorder %v750, 0.0
      %vm978 = vcmp.gt.f32.partialorder %v752, 0.0
      %vm979 = vcmp.gt.f32.partialorder %v755, 0.0
      %vm980 = vcmp.gt.f32.partialorder %v757, 0.0
      %vm981 = vcmp.gt.f32.partialorder %v760, 0.0
      %vm982 = vcmp.gt.f32.partialorder %v762, 0.0
      %vm983 = vcmp.gt.f32.partialorder %v765, 0.0
      %vm984 = vcmp.gt.f32.partialorder %v767, 0.0
      %vm985 = vcmp.gt.f32.partialorder %v770, 0.0
      %vm986 = vcmp.gt.f32.partialorder %v772, 0.0
      %vm987 = vcmp.gt.f32.partialorder %v775, 0.0
      %vm988 = vcmp.gt.f32.partialorder %v777, 0.0
      %vm989 = vcmp.gt.f32.partialorder %v780, 0.0
      %vm990 = vcmp.gt.f32.partialorder %v782, 0.0
      %vm991 = vcmp.gt.f32.partialorder %v785, 0.0
      %vm992 = vcmp.gt.f32.partialorder %v787, 0.0
      %vm993 = vcmp.gt.f32.partialorder %v790, 0.0
      %vm994 = vcmp.gt.f32.partialorder %v792, 0.0
      %vm995 = vcmp.gt.f32.partialorder %v795, 0.0
      %vm996 = vcmp.gt.f32.partialorder %v797, 0.0
      %vm997 = vcmp.gt.f32.partialorder %v800, 0.0
      %vm998 = vcmp.gt.f32.partialorder %v802, 0.0
      %vm999 = vcmp.gt.f32.partialorder %v805, 0.0
      %vm1000 = vcmp.gt.f32.partialorder %v807, 0.0
      %vm1001 = vcmp.gt.f32.partialorder %v810, 0.0
      %vm1002 = vcmp.gt.f32.partialorder %v812, 0.0
      %vm1003 = vcmp.gt.f32.partialorder %v815, 0.0
      %vm1004 = vcmp.gt.f32.partialorder %v817, 0.0
      %vm1005 = vcmp.gt.f32.partialorder %v820, 0.0
      %vm1006 = vcmp.gt.f32.partialorder %v822, 0.0
      %vm1007 = vcmp.gt.f32.partialorder %v825, 0.0
      %vm1008 = vcmp.gt.f32.partialorder %v827, 0.0
      %vm1009 = vcmp.gt.f32.partialorder %v830, 0.0
      %vm1010 = vcmp.gt.f32.partialorder %v832, 0.0
      %vm1011 = vcmp.gt.f32.partialorder %v835, 0.0
      %vm1012 = vcmp.gt.f32.partialorder %v837, 0.0
      %vm1013 = vcmp.gt.f32.partialorder %v840, 0.0
      %vm1014 = vcmp.gt.f32.partialorder %v842, 0.0
      %vm1015 = vcmp.gt.f32.partialorder %v845, 0.0
      %vm1016 = vcmp.gt.f32.partialorder %v847, 0.0
      %vm1017 = vcmp.gt.f32.partialorder %v850, 0.0
      %vm1018 = vcmp.gt.f32.partialorder %v852, 0.0
      %vm1019 = vcmp.gt.f32.partialorder %v855, 0.0
      %vm1020 = vcmp.gt.f32.partialorder %v857, 0.0
      %vm1021 = vcmp.gt.f32.partialorder %v860, 0.0
      %vm1022 = vcmp.gt.f32.partialorder %v862, 0.0
      %vm1023 = vcmp.gt.f32.partialorder %v865, 0.0
      %vm1024 = vcmp.gt.f32.partialorder %v867, 0.0
      %vm1025 = vcmp.gt.f32.partialorder %v870, 0.0
      %vm1026 = vcmp.gt.f32.partialorder %v872, 0.0
      %vm1027 = vcmp.gt.f32.partialorder %v875, 0.0
      %vm1028 = vcmp.gt.f32.partialorder %v877, 0.0
      %vm1029 = vcmp.gt.f32.partialorder %v880, 0.0
      %vm1030 = vcmp.gt.f32.partialorder %v882, 0.0
      %vm1031 = vcmp.gt.f32.partialorder %v885, 0.0
      %vm1032 = vcmp.gt.f32.partialorder %v887, 0.0
      %vm1033 = vcmp.gt.f32.partialorder %v890, 0.0
      %vm1034 = vcmp.gt.f32.partialorder %v892, 0.0
      %vm1035 = vcmp.gt.f32.partialorder %v895, 0.0
      %vm1036 = vcmp.gt.f32.partialorder %v897, 0.0
      %vm1037 = vcmp.gt.f32.partialorder %v900, 0.0
      %vm1038 = vcmp.gt.f32.partialorder %v902, 0.0
      %vm1039 = vcmp.gt.f32.partialorder %v905, 0.0
      %vm1040 = vcmp.gt.f32.partialorder %v907, 0.0
      %vm1041 = vcmp.gt.f32.partialorder %v910, 0.0
      %vm1042 = vcmp.gt.f32.partialorder %v912, 0.0
      %vm1043 = vcmp.gt.f32.partialorder %v915, 0.0
      %vm1044 = vcmp.gt.f32.partialorder %v917, 0.0
      %vm1045 = vcmp.gt.f32.partialorder %v920, 0.0
      %vm1046 = vcmp.gt.f32.partialorder %v922, 0.0
      %vm1047 = vcmp.gt.f32.partialorder %v925, 0.0
      %vm1048 = vcmp.gt.f32.partialorder %v927, 0.0
      %vm1049 = vcmp.gt.f32.partialorder %v930, 0.0
      %vm1050 = vcmp.gt.f32.partialorder %v932, 0.0
      %vm1051 = vcmp.gt.f32.partialorder %v935, 0.0
      %vm1052 = vcmp.gt.f32.partialorder %v937, 0.0
      %vm1053 = vcmp.gt.f32.partialorder %v940, 0.0
      %vm1054 = vcmp.gt.f32.partialorder %v942, 0.0
      %vm1055 = vcmp.gt.f32.partialorder %v945, 0.0
      %vm1056 = vcmp.gt.f32.partialorder %v947, 0.0
      %vm1057 = vcmp.gt.f32.partialorder %v950, 0.0
      %vm1058 = vcmp.gt.f32.partialorder %v952, 0.0
      %vm1059 = vcmp.gt.f32.partialorder %v955, 0.0
      %vm1060 = vcmp.gt.f32.partialorder %v957, 0.0
      %vm1061 = vcmp.gt.f32.partialorder %v960, 0.0
      %vm1062 = vcmp.gt.f32.partialorder %v962, 0.0
      %vm1063 = vcmp.gt.f32.partialorder %v965, 0.0
      %vm1064 = vcmp.gt.f32.partialorder %v967, 0.0
      %v1065 = vmul.f32 %v730, 0.2
      %v1066 = vmul.f32 %v732, 0.2
      %v1067 = vmul.f32 %v735, 0.2
      %v1068 = vmul.f32 %v737, 0.2
      %v1069 = vmul.f32 %v740, 0.2
      %v1070 = vmul.f32 %v742, 0.2
      %v1071 = vmul.f32 %v745, 0.2
      %v1072 = vmul.f32 %v747, 0.2
      %v1073 = vmul.f32 %v750, 0.2
      %v1074 = vmul.f32 %v752, 0.2
      %v1075 = vmul.f32 %v755, 0.2
      %v1076 = vmul.f32 %v757, 0.2
      %v1077 = vmul.f32 %v760, 0.2
      %v1078 = vmul.f32 %v762, 0.2
      %v1079 = vmul.f32 %v765, 0.2
      %v1080 = vmul.f32 %v767, 0.2
      %v1081 = vmul.f32 %v770, 0.2
      %v1082 = vmul.f32 %v772, 0.2
      %v1083 = vmul.f32 %v775, 0.2
      %v1084 = vmul.f32 %v777, 0.2
      %v1085 = vmul.f32 %v780, 0.2
      %v1086 = vmul.f32 %v782, 0.2
      %v1087 = vmul.f32 %v785, 0.2
      %v1088 = vmul.f32 %v787, 0.2
      %v1089 = vmul.f32 %v790, 0.2
      %v1090 = vmul.f32 %v792, 0.2
      %v1091 = vmul.f32 %v795, 0.2
      %v1092 = vmul.f32 %v797, 0.2
      %v1093 = vmul.f32 %v800, 0.2
      %v1094 = vmul.f32 %v802, 0.2
      %v1095 = vmul.f32 %v805, 0.2
      %v1096 = vmul.f32 %v807, 0.2
      %v1097 = vmul.f32 %v810, 0.2
      %v1098 = vmul.f32 %v812, 0.2
      %v1099 = vmul.f32 %v815, 0.2
      %v1100 = vmul.f32 %v817, 0.2
      %v1101 = vmul.f32 %v820, 0.2
      %v1102 = vmul.f32 %v822, 0.2
      %v1103 = vmul.f32 %v825, 0.2
      %v1104 = vmul.f32 %v827, 0.2
      %v1105 = vmul.f32 %v830, 0.2
      %v1106 = vmul.f32 %v832, 0.2
      %v1107 = vmul.f32 %v835, 0.2
      %v1108 = vmul.f32 %v837, 0.2
      %v1109 = vmul.f32 %v840, 0.2
      %v1110 = vmul.f32 %v842, 0.2
      %v1111 = vmul.f32 %v845, 0.2
      %v1112 = vmul.f32 %v847, 0.2
      %v1113 = vmul.f32 %v850, 0.2
      %v1114 = vmul.f32 %v852, 0.2
      %v1115 = vmul.f32 %v855, 0.2
      %v1116 = vmul.f32 %v857, 0.2
      %v1117 = vmul.f32 %v860, 0.2
      %v1118 = vmul.f32 %v862, 0.2
      %v1119 = vmul.f32 %v865, 0.2
      %v1120 = vmul.f32 %v867, 0.2
      %v1121 = vmul.f32 %v870, 0.2
      %v1122 = vmul.f32 %v872, 0.2
      %v1123 = vmul.f32 %v875, 0.2
      %v1124 = vmul.f32 %v877, 0.2
      %v1125 = vmul.f32 %v880, 0.2
      %v1126 = vmul.f32 %v882, 0.2
      %v1127 = vmul.f32 %v885, 0.2
      %v1128 = vmul.f32 %v887, 0.2
      %v1129 = vmul.f32 %v890, 0.2
      %v1130 = vmul.f32 %v892, 0.2
      %v1131 = vmul.f32 %v895, 0.2
      %v1132 = vmul.f32 %v897, 0.2
      %v1133 = vmul.f32 %v900, 0.2
      %v1134 = vmul.f32 %v902, 0.2
      %v1135 = vmul.f32 %v905, 0.2
      %v1136 = vmul.f32 %v907, 0.2
      %v1137 = vmul.f32 %v910, 0.2
      %v1138 = vmul.f32 %v912, 0.2
      %v1139 = vmul.f32 %v915, 0.2
      %v1140 = vmul.f32 %v917, 0.2
      %v1141 = vmul.f32 %v920, 0.2
      %v1142 = vmul.f32 %v922, 0.2
      %v1143 = vmul.f32 %v925, 0.2
      %v1144 = vmul.f32 %v927, 0.2
      %v1145 = vmul.f32 %v930, 0.2
      %v1146 = vmul.f32 %v932, 0.2
      %v1147 = vmul.f32 %v935, 0.2
      %v1148 = vmul.f32 %v937, 0.2
      %v1149 = vmul.f32 %v940, 0.2
      %v1150 = vmul.f32 %v942, 0.2
      %v1151 = vmul.f32 %v945, 0.2
      %v1152 = vmul.f32 %v947, 0.2
      %v1153 = vmul.f32 %v950, 0.2
      %v1154 = vmul.f32 %v952, 0.2
      %v1155 = vmul.f32 %v955, 0.2
      %v1156 = vmul.f32 %v957, 0.2
      %v1157 = vmul.f32 %v960, 0.2
      %v1158 = vmul.f32 %v962, 0.2
      %v1159 = vmul.f32 %v965, 0.2
      %v1160 = vmul.f32 %v967, 0.2
      %v1161 = vsel %vm969, %v730, %v1065
      %v1162 = vsel %vm970, %v732, %v1066
      %v1163 = vsel %vm971, %v735, %v1067
      %v1164 = vsel %vm972, %v737, %v1068
      %v1165 = vsel %vm973, %v740, %v1069
      %v1166 = vsel %vm974, %v742, %v1070
      %v1167 = vsel %vm975, %v745, %v1071
      %v1168 = vsel %vm976, %v747, %v1072
      %v1169 = vsel %vm977, %v750, %v1073
      %v1170 = vsel %vm978, %v752, %v1074
      %v1171 = vsel %vm979, %v755, %v1075
      %v1172 = vsel %vm980, %v757, %v1076
      %v1173 = vsel %vm981, %v760, %v1077
      %v1174 = vsel %vm982, %v762, %v1078
      %v1175 = vsel %vm983, %v765, %v1079
      %v1176 = vsel %vm984, %v767, %v1080
      %v1177 = vsel %vm985, %v770, %v1081
      %v1178 = vsel %vm986, %v772, %v1082
      %v1179 = vsel %vm987, %v775, %v1083
      %v1180 = vsel %vm988, %v777, %v1084
      %v1181 = vsel %vm989, %v780, %v1085
      %v1182 = vsel %vm990, %v782, %v1086
      %v1183 = vsel %vm991, %v785, %v1087
      %v1184 = vsel %vm992, %v787, %v1088
      %v1185 = vsel %vm993, %v790, %v1089
      %v1186 = vsel %vm994, %v792, %v1090
      %v1187 = vsel %vm995, %v795, %v1091
      %v1188 = vsel %vm996, %v797, %v1092
      %v1189 = vsel %vm997, %v800, %v1093
      %v1190 = vsel %vm998, %v802, %v1094
      %v1191 = vsel %vm999, %v805, %v1095
      %v1192 = vsel %vm1000, %v807, %v1096
      %v1193 = vsel %vm1001, %v810, %v1097
      %v1194 = vsel %vm1002, %v812, %v1098
      %v1195 = vsel %vm1003, %v815, %v1099
      %v1196 = vsel %vm1004, %v817, %v1100
      %v1197 = vsel %vm1005, %v820, %v1101
      %v1198 = vsel %vm1006, %v822, %v1102
      %v1199 = vsel %vm1007, %v825, %v1103
      %v1200 = vsel %vm1008, %v827, %v1104
      %v1201 = vsel %vm1009, %v830, %v1105
      %v1202 = vsel %vm1010, %v832, %v1106
      %v1203 = vsel %vm1011, %v835, %v1107
      %v1204 = vsel %vm1012, %v837, %v1108
      %v1205 = vsel %vm1013, %v840, %v1109
      %v1206 = vsel %vm1014, %v842, %v1110
      %v1207 = vsel %vm1015, %v845, %v1111
      %v1208 = vsel %vm1016, %v847, %v1112
      %v1209 = vsel %vm1017, %v850, %v1113
      %v1210 = vsel %vm1018, %v852, %v1114
      %v1211 = vsel %vm1019, %v855, %v1115
      %v1212 = vsel %vm1020, %v857, %v1116
      %v1213 = vsel %vm1021, %v860, %v1117
      %v1214 = vsel %vm1022, %v862, %v1118
      %v1215 = vsel %vm1023, %v865, %v1119
      %v1216 = vsel %vm1024, %v867, %v1120
      %v1217 = vsel %vm1025, %v870, %v1121
      %v1218 = vsel %vm1026, %v872, %v1122
      %v1219 = vsel %vm1027, %v875, %v1123
      %v1220 = vsel %vm1028, %v877, %v1124
      %v1221 = vsel %vm1029, %v880, %v1125
      %v1222 = vsel %vm1030, %v882, %v1126
      %v1223 = vsel %vm1031, %v885, %v1127
      %v1224 = vsel %vm1032, %v887, %v1128
      %v1225 = vsel %vm1033, %v890, %v1129
      %v1226 = vsel %vm1034, %v892, %v1130
      %v1227 = vsel %vm1035, %v895, %v1131
      %v1228 = vsel %vm1036, %v897, %v1132
      %v1229 = vsel %vm1037, %v900, %v1133
      %v1230 = vsel %vm1038, %v902, %v1134
      %v1231 = vsel %vm1039, %v905, %v1135
      %v1232 = vsel %vm1040, %v907, %v1136
      %v1233 = vsel %vm1041, %v910, %v1137
      %v1234 = vsel %vm1042, %v912, %v1138
      %v1235 = vsel %vm1043, %v915, %v1139
      %v1236 = vsel %vm1044, %v917, %v1140
      %v1237 = vsel %vm1045, %v920, %v1141
      %v1238 = vsel %vm1046, %v922, %v1142
      %v1239 = vsel %vm1047, %v925, %v1143
      %v1240 = vsel %vm1048, %v927, %v1144
      %v1241 = vsel %vm1049, %v930, %v1145
      %v1242 = vsel %vm1050, %v932, %v1146
      %v1243 = vsel %vm1051, %v935, %v1147
      %v1244 = vsel %vm1052, %v937, %v1148
      %v1245 = vsel %vm1053, %v940, %v1149
      %v1246 = vsel %vm1054, %v942, %v1150
      %v1247 = vsel %vm1055, %v945, %v1151
      %v1248 = vsel %vm1056, %v947, %v1152
      %v1249 = vsel %vm1057, %v950, %v1153
      %v1250 = vsel %vm1058, %v952, %v1154
      %v1251 = vsel %vm1059, %v955, %v1155
      %v1252 = vsel %vm1060, %v957, %v1156
      %v1253 = vsel %vm1061, %v960, %v1157
      %v1254 = vsel %vm1062, %v962, %v1158
      %v1255 = vsel %vm1063, %v965, %v1159
      %v1256 = vsel %vm1064, %v967, %v1160
      %v1257 = vadd.f32 %v1161, %v1185
      %v1258 = vadd.f32 %v1162, %v1186
      %v1259 = vadd.f32 %v1163, %v1187
      %v1260 = vadd.f32 %v1164, %v1188
      %v1261 = vadd.f32 %v1165, %v1189
      %v1262 = vadd.f32 %v1166, %v1190
      %v1263 = vadd.f32 %v1167, %v1191
      %v1264 = vadd.f32 %v1168, %v1192
      %v1265 = vadd.f32 %v1169, %v1193
      %v1266 = vadd.f32 %v1170, %v1194
      %v1267 = vadd.f32 %v1171, %v1195
      %v1268 = vadd.f32 %v1172, %v1196
      %v1269 = vadd.f32 %v1173, %v1197
      %v1270 = vadd.f32 %v1174, %v1198
      %v1271 = vadd.f32 %v1175, %v1199
      %v1272 = vadd.f32 %v1176, %v1200
      %v1273 = vadd.f32 %v1177, %v1201
      %v1274 = vadd.f32 %v1178, %v1202
      %v1275 = vadd.f32 %v1179, %v1203
      %v1276 = vadd.f32 %v1180, %v1204
      %v1277 = vadd.f32 %v1181, %v1205
      %v1278 = vadd.f32 %v1182, %v1206
      %v1279 = vadd.f32 %v1183, %v1207
      %v1280 = vadd.f32 %v1184, %v1208
      %v1281 = vadd.f32 %v1257, %v1209
      %v1282 = vadd.f32 %v1258, %v1210
      %v1283 = vadd.f32 %v1259, %v1211
      %v1284 = vadd.f32 %v1260, %v1212
      %v1285 = vadd.f32 %v1261, %v1213
      %v1286 = vadd.f32 %v1262, %v1214
      %v1287 = vadd.f32 %v1263, %v1215
      %v1288 = vadd.f32 %v1264, %v1216
      %v1289 = vadd.f32 %v1265, %v1217
      %v1290 = vadd.f32 %v1266, %v1218
      %v1291 = vadd.f32 %v1267, %v1219
      %v1292 = vadd.f32 %v1268, %v1220
      %v1293 = vadd.f32 %v1269, %v1221
      %v1294 = vadd.f32 %v1270, %v1222
      %v1295 = vadd.f32 %v1271, %v1223
      %v1296 = vadd.f32 %v1272, %v1224
      %v1297 = vadd.f32 %v1273, %v1225
      %v1298 = vadd.f32 %v1274, %v1226
      %v1299 = vadd.f32 %v1275, %v1227
      %v1300 = vadd.f32 %v1276, %v1228
      %v1301 = vadd.f32 %v1277, %v1229
      %v1302 = vadd.f32 %v1278, %v1230
      %v1303 = vadd.f32 %v1279, %v1231
      %v1304 = vadd.f32 %v1280, %v1232
      %v1305 = vadd.f32 %v1281, %v1233
      %v1306 = vadd.f32 %v1282, %v1234
      %v1307 = vadd.f32 %v1283, %v1235
      %v1308 = vadd.f32 %v1284, %v1236
      %v1309 = vadd.f32 %v1285, %v1237
      %v1310 = vadd.f32 %v1286, %v1238
      %v1311 = vadd.f32 %v1287, %v1239
      %v1312 = vadd.f32 %v1288, %v1240
      %v1313 = vadd.f32 %v1289, %v1241
      %v1314 = vadd.f32 %v1290, %v1242
      %v1315 = vadd.f32 %v1291, %v1243
      %v1316 = vadd.f32 %v1292, %v1244
      %v1317 = vadd.f32 %v1293, %v1245
      %v1318 = vadd.f32 %v1294, %v1246
      %v1319 = vadd.f32 %v1295, %v1247
      %v1320 = vadd.f32 %v1296, %v1248
      %v1321 = vadd.f32 %v1297, %v1249
      %v1322 = vadd.f32 %v1298, %v1250
      %v1323 = vadd.f32 %v1299, %v1251
      %v1324 = vadd.f32 %v1300, %v1252
      %v1325 = vadd.f32 %v1301, %v1253
      %v1326 = vadd.f32 %v1302, %v1254
      %v1327 = vadd.f32 %v1303, %v1255
      %v1328 = vadd.f32 %v1304, %v1256
      %v1329 = vmul.f32 %v1305, 0.25
      %v1330 = vmul.f32 %v1306, 0.25
      %v1331 = vmul.f32 %v1307, 0.25
      %v1332 = vmul.f32 %v1308, 0.25
      %v1333 = vmul.f32 %v1309, 0.25
      %v1334 = vmul.f32 %v1310, 0.25
      %v1335 = vmul.f32 %v1311, 0.25
      %v1336 = vmul.f32 %v1312, 0.25
      %v1337 = vmul.f32 %v1313, 0.25
      %v1338 = vmul.f32 %v1314, 0.25
      %v1339 = vmul.f32 %v1315, 0.25
      %v1340 = vmul.f32 %v1316, 0.25
      %v1341 = vmul.f32 %v1317, 0.25
      %v1342 = vmul.f32 %v1318, 0.25
      %v1343 = vmul.f32 %v1319, 0.25
      %v1344 = vmul.f32 %v1320, 0.25
      %v1345 = vmul.f32 %v1321, 0.25
      %v1346 = vmul.f32 %v1322, 0.25
      %v1347 = vmul.f32 %v1323, 0.25
      %v1348 = vmul.f32 %v1324, 0.25
      %v1349 = vmul.f32 %v1325, 0.25
      %v1350 = vmul.f32 %v1326, 0.25
      %v1351 = vmul.f32 %v1327, 0.25
      %v1352 = vmul.f32 %v1328, 0.25
      %v1353 = vpack.c.bf16 %v1329, %v1329
      %v1354 = vpack.c.bf16 %v1330, %v1330
      %v1355 = vpack.c.bf16 %v1331, %v1331
      %v1356 = vpack.c.bf16 %v1332, %v1332
      %v1357 = vpack.c.bf16 %v1333, %v1333
      %v1358 = vpack.c.bf16 %v1334, %v1334
      %v1359 = vpack.c.bf16 %v1335, %v1335
      %v1360 = vpack.c.bf16 %v1336, %v1336
      %v1361 = vpack.c.bf16 %v1337, %v1337
      %v1362 = vpack.c.bf16 %v1338, %v1338
      %v1363 = vpack.c.bf16 %v1339, %v1339
      %v1364 = vpack.c.bf16 %v1340, %v1340
      %v1365 = vpack.c.bf16 %v1341, %v1341
      %v1366 = vpack.c.bf16 %v1342, %v1342
      %v1367 = vpack.c.bf16 %v1343, %v1343
      %v1368 = vpack.c.bf16 %v1344, %v1344
      %v1369 = vpack.c.bf16 %v1345, %v1345
      %v1370 = vpack.c.bf16 %v1346, %v1346
      %v1371 = vpack.c.bf16 %v1347, %v1347
      %v1372 = vpack.c.bf16 %v1348, %v1348
      %v1373 = vpack.c.bf16 %v1349, %v1349
      %v1374 = vpack.c.bf16 %v1350, %v1350
      %v1375 = vpack.c.bf16 %v1351, %v1351
      %v1376 = vpack.c.bf16 %v1352, %v1352
      %vm1377 = vcmask 27648
      %1378 = vst.msk [vmem:[%s208] sm:$0xf] %vm1377, %v1353
      %1379 = vst.msk [vmem:[%s208 + $0x4] sm:$0xf] %vm1377, %v1354
      %1380 = vst.msk [vmem:[%s208 + $0x8] sm:$0xf] %vm1377, %v1355
      %1381 = vst.msk [vmem:[%s208 + $0xc] sm:$0xf] %vm1377, %v1356
      %1382 = vst.msk [vmem:[%s208 + $0x10] sm:$0xf] %vm1377, %v1357
      %1383 = vst.msk [vmem:[%s208 + $0x14] sm:$0xf] %vm1377, %v1358
      %1384 = vst.msk [vmem:[%s208 + $0x18] sm:$0xf] %vm1377, %v1359
      %1385 = vst.msk [vmem:[%s208 + $0x1c] sm:$0xf] %vm1377, %v1360
      %1386 = vst.msk [vmem:[%s208 + $0x20] sm:$0xf] %vm1377, %v1361
      %1387 = vst.msk [vmem:[%s208 + $0x24] sm:$0xf] %vm1377, %v1362
      %1388 = vst.msk [vmem:[%s208 + $0x28] sm:$0xf] %vm1377, %v1363
      %1389 = vst.msk [vmem:[%s208 + $0x2c] sm:$0xf] %vm1377, %v1364
      %1390 = vst.msk [vmem:[%s208 + $0x30] sm:$0xf] %vm1377, %v1365
      %1391 = vst.msk [vmem:[%s208 + $0x34] sm:$0xf] %vm1377, %v1366
      %1392 = vst.msk [vmem:[%s208 + $0x38] sm:$0xf] %vm1377, %v1367
      %1393 = vst.msk [vmem:[%s208 + $0x3c] sm:$0xf] %vm1377, %v1368
      %1394 = vst.msk [vmem:[%s208 + $0x40] sm:$0xf] %vm1377, %v1369
      %1395 = vst.msk [vmem:[%s208 + $0x44] sm:$0xf] %vm1377, %v1370
      %1396 = vst.msk [vmem:[%s208 + $0x48] sm:$0xf] %vm1377, %v1371
      %1397 = vst.msk [vmem:[%s208 + $0x4c] sm:$0xf] %vm1377, %v1372
      %1398 = vst.msk [vmem:[%s208 + $0x50] sm:$0xf] %vm1377, %v1373
      %1399 = vst.msk [vmem:[%s208 + $0x54] sm:$0xf] %vm1377, %v1374
      %1400 = vst.msk [vmem:[%s208 + $0x58] sm:$0xf] %vm1377, %v1375
      %1401 = vst.msk [vmem:[%s208 + $0x5c] sm:$0xf] %vm1377, %v1376
      %s1402 = smul.u32 24, %s19
      %p1403 = scmp.lt.s32.totalorder %s18, 1
      %s1404 = scalar_select %p1403, %s18, 1
      %p1405 = scmp.lt.s32.totalorder %s1402, 23
      %s1406 = scalar_select %p1405, %s1402, 23
      %s1407 = smul.addr %s1404, 24
      %s1408 = sadd.s32 %s1406, %s1407
      %s1409 = smul.addr %s1408, 4
      %s1410 = scalar_lea.vmem %s3, %s1409
      // Predicated region
      $region33: #{_lambda_.6} parent=31 // pred_check
        %p1411 = pneg %p116
      $region34: #{_lambda_.6} parent=31 // pred_check_branch
        %1413 = sbr.rel (%p1411) target = $region36
      $region35: #{_lambda_.6} parent=31 // pred_region
        %s1414 = smul.u32 24, %s19
      $region36: #{_lambda_.6} parent=31 // pred_fallthru
        _
    $region32: #{_lambda_.6} parent=5 // pred_fallthru
      _
    %p1415 = scmp.le.s32.totalorder 2, %s9
    // Predicated region
    $region37: #{_lambda_.6} parent=5 // pred_check
      %p1416 = pneg %p1415
    $region38: #{_lambda_.6} parent=5 // pred_check_branch
      %1418 = sbr.rel (%p1416) target = $region40
    $region39: #{_lambda_.6} parent=5 // pred_region
      %s1419 = ssub.s32 %s9, 2
      // Predicated region
      $region41: #{_lambda_.6} parent=39 // pred_check
        %p1420 = pneg %p122
      $region42: #{_lambda_.6} parent=39 // pred_check_branch
        %1422 = sbr.rel (%p1420) target = $region44
      $region43: #{_lambda_.6} parent=39 // pred_region
        %s1423 = smul.u32 24, %s21
        %p1424 = scmp.lt.s32.totalorder %s20, 1
        %s1425 = scalar_select %p1424, %s20, 1
        %p1426 = scmp.lt.s32.totalorder %s1423, 23
        %s1427 = scalar_select %p1426, %s1423, 23
        %s1428 = smul.addr %s1425, 24
        %s1429 = sadd.s32 %s1427, %s1428
        %s1430 = smul.addr %s1429, 4
        %s1431 = scalar_lea.vmem %s3, %s1430
      $region44: #{_lambda_.6} parent=39 // pred_fallthru
        _
    $region40: #{_lambda_.6} parent=5 // pred_fallthru
      _
  $region6: #{_lambda_.6} parent=0 // loop_footer
    %s13 = sadd.s32 1, %s9
  $region7: #{_lambda_.6} parent=0 // loop_footer_branch
    %8 = sbr.rel target = $region3
  $region8: #{_lambda_.6} parent=0 // loop_exit
    _

// kernel: _lambda_.7
$region0: #{_lambda_.7}
  #allocation0 [shape = 'u32[]', space=smem, size = 0x4, offset = 0x4, fixed_abs, tag = 'smem constant byte address 0x4 - core index']
  #allocation1 [shape = 'u32[72,128]{1,0:T(1,128)}', space=vmem, size = 0x9000, scoped, tag = 'internal scratch']
  %s0 = inlined_call_operand.vmem [shape: bf16[2,4,48,36], index: 0, kind: input, shape index: {}]
  %s1 = inlined_call_operand.vmem [shape: bf16[36,8], index: 1, kind: input, shape index: {}]
  %s2 = inlined_call_operand.vmem [shape: f32[1,8], index: 2, kind: input, shape index: {}]
  %s3 = inlined_call_operand.vmem [shape: bf16[2,48,8], index: 3, kind: output, shape index: {}]
  %s4 = sld [smem:[#allocation0]]
  $region45: #{_lambda_.7} parent=0
    _
  %s6 = ssub.s32 1, %s4
  %s7 = scalar_select 0, %s6, %s4
  loop: start=0, step=1, limit=4
  $region2: #{_lambda_.7} parent=0 // loop_pre_header
    _
  $region3: #{_lambda_.7} parent=0 // loop_header
    %s9 = sphi 0, %s13
    %p10 = scmp.ge.s32.totalorder %s9, 4
    %s16 = sphi 0, %s28
    %s17 = sphi 0, %s24
    %s18 = sphi 0, %s16
    %s19 = sphi 0, %s17
    %s20 = sphi 0, %s18
    %s21 = sphi 0, %s19
    %s33 = sphi 0, %s35
    %s36 = sphi 0, %s33
    %s37 = sphi 0, %s36
    %s53 = sphi 0, %s37
    %s57 = sphi 0, %s57
    %s59 = sphi 0, %s57
    %s60 = sphi 0, %s59
    %s74 = sphi 0, %s60
    %s78 = sphi 0, %s78
    %s80 = sphi 0, %s78
    %s81 = sphi 0, %s80
    %s95 = sphi 0, %s81
    %s103 = sphi 0, %s105
    %s106 = sphi 0, %s103
    %s107 = sphi 0, %s106
    %s123 = sphi 0, %s107
  $region4: #{_lambda_.7} parent=0 // loop_header_branch
    %12 = sbr.rel (%p10) target = $region8
  $region5: #{_lambda_.7} parent=0 // loop_body
    %s14 = ssub.s32 %s9, 1
    %s15 = ssub.s32 %s9, 2
    %s22 = sadd.s32 1, %s17
    %p23 = scmp.ge.s32.totalorder %s22, 1
    %s24 = scalar_select %p23, 0, %s22
    %s25 = sadd.s32 1, %s16
    %s26 = scalar_select %p23, %s25, %s16
    %p27 = scmp.ge.s32.totalorder %s26, 2
    %s28 = scalar_select %p27, 0, %s26
    %s29 = ssub.s32 %s16, %s28
    %s30 = ssub.s32 %s17, %s24
    %s31 = sor.u32 %s29, %s30
    %p32 = scmp.eq.s32.totalorder %s31, 0
    %s34 = sadd.s32 %s33, 1
    %s35 = scalar_select %p32, %s33, %s34
    %p38 = pneg %p32
    %p39 = scmp.eq.s32.totalorder %s9, 1
    %p40 = por %p38, %p39
    %p41 = scmp.ne.s32.totalorder %s33, %s36
    %p42 = scmp.eq.s32.totalorder %s9, 0
    %p43 = por %p41, %p42
    %p44 = scmp.ne.s32.totalorder %s33, %s36
    %p45 = scmp.eq.s32.totalorder %s14, 1
    %p46 = por %p44, %p45
    %p47 = scmp.ne.s32.totalorder %s36, %s37
    %p48 = scmp.eq.s32.totalorder %s14, 0
    %p49 = por %p47, %p48
    %p50 = scmp.ne.s32.totalorder %s36, %s37
    %p51 = scmp.eq.s32.totalorder %s15, 1
    %p52 = por %p50, %p51
    %p54 = scmp.ne.s32.totalorder %s37, %s53
    %p55 = scmp.eq.s32.totalorder %s15, 0
    %p56 = por %p54, %p55
    %s58 = sadd.s32 %s57, 1
    %p61 = scmp.eq.s32.totalorder %s9, 1
    %p62 = scmp.ne.s32.totalorder %s57, %s59
    %p63 = scmp.eq.s32.totalorder %s9, 0
    %p64 = por %p62, %p63
    %p65 = scmp.ne.s32.totalorder %s57, %s59
    %p66 = scmp.eq.s32.totalorder %s14, 1
    %p67 = por %p65, %p66
    %p68 = scmp.ne.s32.totalorder %s59, %s60
    %p69 = scmp.eq.s32.totalorder %s14, 0
    %p70 = por %p68, %p69
    %p71 = scmp.ne.s32.totalorder %s59, %s60
    %p72 = scmp.eq.s32.totalorder %s15, 1
    %p73 = por %p71, %p72
    %p75 = scmp.ne.s32.totalorder %s60, %s74
    %p76 = scmp.eq.s32.totalorder %s15, 0
    %p77 = por %p75, %p76
    %s79 = sadd.s32 %s78, 1
    %p82 = scmp.eq.s32.totalorder %s9, 1
    %p83 = scmp.ne.s32.totalorder %s78, %s80
    %p84 = scmp.eq.s32.totalorder %s9, 0
    %p85 = por %p83, %p84
    %p86 = scmp.ne.s32.totalorder %s78, %s80
    %p87 = scmp.eq.s32.totalorder %s14, 1
    %p88 = por %p86, %p87
    %p89 = scmp.ne.s32.totalorder %s80, %s81
    %p90 = scmp.eq.s32.totalorder %s14, 0
    %p91 = por %p89, %p90
    %p92 = scmp.ne.s32.totalorder %s80, %s81
    %p93 = scmp.eq.s32.totalorder %s15, 1
    %p94 = por %p92, %p93
    %p96 = scmp.ne.s32.totalorder %s81, %s95
    %p97 = scmp.eq.s32.totalorder %s15, 0
    %p98 = por %p96, %p97
    %s99 = ssub.s32 %s16, %s28
    %s100 = ssub.s32 %s17, %s24
    %s101 = sor.u32 %s99, %s100
    %p102 = scmp.eq.s32.totalorder %s101, 0
    %s104 = sadd.s32 %s103, 1
    %s105 = scalar_select %p102, %s103, %s104
    %p108 = pneg %p102
    %p109 = scmp.eq.s32.totalorder %s9, 1
    %p110 = por %p108, %p109
    %p111 = scmp.ne.s32.totalorder %s103, %s106
    %p112 = scmp.eq.s32.totalorder %s9, 0
    %p113 = por %p111, %p112
    %p114 = scmp.ne.s32.totalorder %s103, %s106
    %p115 = scmp.eq.s32.totalorder %s14, 1
    %p116 = por %p114, %p115
    %p117 = scmp.ne.s32.totalorder %s106, %s107
    %p118 = scmp.eq.s32.totalorder %s14, 0
    %p119 = por %p117, %p118
    %p120 = scmp.ne.s32.totalorder %s106, %s107
    %p121 = scmp.eq.s32.totalorder %s15, 1
    %p122 = por %p120, %p121
    %p124 = scmp.ne.s32.totalorder %s107, %s123
    %p125 = scmp.eq.s32.totalorder %s15, 0
    %p126 = por %p124, %p125
    %p127 = scmp.le.s32.totalorder 1, %s9
    %p128 = scmp.lt.s32.totalorder %s9, 3
    %p129 = pnand %p127, %p128
    %p130 = pneg %p129
    // Predicated region
    $region9: #{_lambda_.7} parent=5 // pred_check
      _
    $region10: #{_lambda_.7} parent=5 // pred_check_branch
      %132 = sbr.rel (%p129) target = $region12
    $region11: #{_lambda_.7} parent=5 // pred_region
      %s133 = ssub.s32 %s9, 1
      // Predicated region
      $region13: #{_lambda_.7} parent=11 // pred_check
        %p134 = pneg %p70
      $region14: #{_lambda_.7} parent=11 // pred_check_branch
        %136 = sbr.rel (%p134) target = $region16
      $region15: #{_lambda_.7} parent=11 // pred_region
        _
      $region16: #{_lambda_.7} parent=11 // pred_fallthru
        _
      // Predicated region
      $region17: #{_lambda_.7} parent=11 // pred_check
        %p137 = pneg %p91
      $region18: #{_lambda_.7} parent=11 // pred_check_branch
        %139 = sbr.rel (%p137) target = $region20
      $region19: #{_lambda_.7} parent=11 // pred_region
        _
      $region20: #{_lambda_.7} parent=11 // pred_fallthru
        _
    $region12: #{_lambda_.7} parent=5 // pred_fallthru
      _
    %p140 = scmp.lt.s32.totalorder %s9, 2
    // Predicated region
    $region21: #{_lambda_.7} parent=5 // pred_check
      %p141 = pneg %p140
    $region22: #{_lambda_.7} parent=5 // pred_check_branch
      %143 = sbr.rel (%p141) target = $region24
    $region23: #{_lambda_.7} parent=5 // pred_region
      // Predicated region
      $region25: #{_lambda_.7} parent=23 // pred_check
        %p144 = pneg %p43
      $region26: #{_lambda_.7} parent=23 // pred_check_branch
        %146 = sbr.rel (%p144) target = $region28
      $region27: #{_lambda_.7} parent=23 // pred_region
        %s147 = smul.u32 6, %s17
        %p148 = scmp.lt.s32.totalorder %s16, 1
        %s149 = scalar_select %p148, %s16, 1
        %p150 = scmp.lt.s32.totalorder %s147, 5
        %s151 = scalar_select %p150, %s147, 5
        %s152 = smul.addr %s149, 24
        %s153 = sadd.s32 %s151, %s152
        %s154 = smul.addr %s153, 4
        %s155 = scalar_lea.vmem %s0, %s154
        %s156 = smul.u32 6, %s17
      $region28: #{_lambda_.7} parent=23 // pred_fallthru
        _
    $region24: #{_lambda_.7} parent=5 // pred_fallthru
      _
    %p157 = scmp.le.s32.totalorder 1, %s9
    %p158 = scmp.lt.s32.totalorder %s9, 3
    %p159 = pnand %p157, %p158
    %p160 = pneg %p159
    // Predicated region
    $region29: #{_lambda_.7} parent=5 // pred_check
      _
    $region30: #{_lambda_.7} parent=5 // pred_check_branch
      %162 = sbr.rel (%p159) target = $region32
    $region31: #{_lambda_.7} parent=5 // pred_region
      %s163 = ssub.s32 %s9, 1
      %s164 = smul.u32 6, %s19
      %p165 = scmp.lt.s32.totalorder %s18, 1
      %s166 = scalar_select %p165, %s18, 1
      %p167 = scmp.lt.s32.totalorder %s164, 5
      %s168 = scalar_select %p167, %s164, 5
      %s169 = smul.addr %s166, 24
      %s170 = sadd.s32 %s168, %s169
      %s171 = smul.addr %s170, 4
      %s172 = scalar_lea.vmem %s0, %s171
      %p173 = pneg %p49
      %p174 = pneg %p46
      %p175 = pneg %p70
      %p176 = pneg %p67
      %p177 = pneg %p91
      %p178 = pneg %p88
      %p179 = pneg %p119
      %p180 = pneg %p116
      %s181 = smul.u32 6, %s19
      %p182 = scmp.lt.s32.totalorder %s18, 1
      %s183 = scalar_select %p182, %s18, 1
      %p184 = scmp.lt.s32.totalorder %s181, 5
      %s185 = scalar_select %p184, %s181, 5
      %s186 = smul.addr %s183, 6
      %s187 = sadd.s32 %s185, %s186
      %s188 = smul.addr %s187, 4
      %s189 = scalar_lea.vmem %s3, %s188
      %s190 = smul.u32 6, %s19
      %p191 = scmp.lt.s32.totalorder %s18, 1
      %s192 = scalar_select %p191, %s18, 1
      %p193 = scmp.lt.s32.totalorder %s190, 5
      %s194 = scalar_select %p193, %s190, 5
      %s195 = smul.addr %s192, 24
      %s196 = sadd.s32 %s194, %s195
      %s197 = smul.addr %s196, 4
      %s198 = scalar_lea.vmem %s0, %s197
      %s199 = smul.u32 6, %s19
      %s200 = smul.u32 6, %s19
      %p201 = scmp.lt.s32.totalorder %s18, 1
      %s202 = scalar_select %p201, %s18, 1
      %p203 = scmp.lt.s32.totalorder %s200, 5
      %s204 = scalar_select %p203, %s200, 5
      %s205 = smul.addr %s202, 6
      %s206 = sadd.s32 %s204, %s205
      %s207 = smul.addr %s206, 4
      %s208 = scalar_lea.vmem %s3, %s207
      %s209 = smul.u32 6, %s19
      %v211 = vld [vmem:[%s1] sm:$0xf]
      %v212 = vld [vmem:[%s1 + $0x4] sm:$0xf]
      %v213 = vld [vmem:[%s1 + $0x8] sm:$0xf]
      %v214 = vld [vmem:[%s1 + $0xc] sm:$0xf]
      %v215 = vld [vmem:[%s1 + $0x10] sm:$0x3]
      %v216 = vld [vmem:[%s2] sm:$0x1]
      %v217 = vld [vmem:[%s198] sm:$0xf]
      %v218 = vld [vmem:[%s198 + $0x4] sm:$0xf]
      %v219 = vld [vmem:[%s198 + $0x8] sm:$0xf]
      %v220 = vld [vmem:[%s198 + $0xc] sm:$0xf]
      %v221 = vld [vmem:[%s198 + $0x10] sm:$0xf]
      %v222 = vld [vmem:[%s198 + $0x14] sm:$0xf]
      %v223 = vld [vmem:[%s198 + $0x18] sm:$0xf]
      %v224 = vld [vmem:[%s198 + $0x1c] sm:$0xf]
      %v225 = vld [vmem:[%s198 + $0x20] sm:$0xf]
      %v226 = vld [vmem:[%s198 + $0x24] sm:$0xf]
      %v227 = vld [vmem:[%s198 + $0x28] sm:$0xf]
      %v228 = vld [vmem:[%s198 + $0x2c] sm:$0xf]
      %v229 = vld [vmem:[%s198 + $0x30] sm:$0xf]
      %v230 = vld [vmem:[%s198 + $0x34] sm:$0xf]
      %v231 = vld [vmem:[%s198 + $0x38] sm:$0xf]
      %v232 = vld [vmem:[%s198 + $0x3c] sm:$0xf]
      %v233 = vld [vmem:[%s198 + $0x40] sm:$0xf]
      %v234 = vld [vmem:[%s198 + $0x44] sm:$0xf]
      %v235 = vld [vmem:[%s198 + $0x48] sm:$0xf]
      %v236 = vld [vmem:[%s198 + $0x4c] sm:$0xf]
      %v237 = vld [vmem:[%s198 + $0x50] sm:$0xf]
      %v238 = vld [vmem:[%s198 + $0x54] sm:$0xf]
      %v239 = vld [vmem:[%s198 + $0x58] sm:$0xf]
      %v240 = vld [vmem:[%s198 + $0x5c] sm:$0xf]
      %v242 = vperm.slane %v216, 0
      %v268 = vunpack.c.l.b16 %v217
      %v269 = vunpack.c.l.b16 %v218
      %v270 = vunpack.c.l.b16 %v219
      %v271 = vunpack.c.l.b16 %v220
      %v272 = vunpack.c.l.b16 %v221
      %v273 = vunpack.c.l.b16 %v222
      %v274 = vunpack.c.l.b16 %v223
      %v275 = vunpack.c.l.b16 %v224
      %v276 = vunpack.c.l.b16 %v225
      %v277 = vunpack.c.l.b16 %v226
      %v278 = vunpack.c.l.b16 %v227
      %v279 = vunpack.c.l.b16 %v228
      %v280 = vunpack.c.l.b16 %v229
      %v281 = vunpack.c.l.b16 %v230
      %v282 = vunpack.c.l.b16 %v231
      %v283 = vunpack.c.l.b16 %v232
      %v284 = vunpack.c.l.b16 %v233
      %v285 = vunpack.c.l.b16 %v234
      %v286 = vunpack.c.l.b16 %v235
      %v287 = vunpack.c.l.b16 %v236
      %v288 = vunpack.c.l.b16 %v237
      %v289 = vunpack.c.l.b16 %v238
      %v290 = vunpack.c.l.b16 %v239
      %v291 = vunpack.c.l.b16 %v240
      %v292 = vpack.c.b16 %v269, %v268
      %v293 = vpack.c.b16 %v271, %v270
      %v294 = vpack.c.b16 %v273, %v272
      %v295 = vpack.c.b16 %v275, %v274
      %v296 = vpack.c.b16 %v277, %v276
      %v297 = vpack.c.b16 %v279, %v278
      %v298 = vpack.c.b16 %v281, %v280
      %v299 = vpack.c.b16 %v283, %v282
      %v300 = vpack.c.b16 %v285, %v284
      %v301 = vpack.c.b16 %v287, %v286
      %v302 = vpack.c.b16 %v289, %v288
      %v303 = vpack.c.b16 %v291, %v290
      %v309 = vunpack.c.l.b16 %v211
      %v310 = vunpack.c.l.b16 %v212
      %v311 = vunpack.c.l.b16 %v213
      %v312 = vunpack.c.l.b16 %v214
      %v313 = vunpack.c.l.b16 %v215
      %v314 = vpack.c.b16 %v310, %v309
      %v315 = vpack.c.b16 %v312, %v311
      %v316 = vpack.c.b16 %v313, %v313
      %vm319 = vcmask 293888
      %v321 = vsel %vm319, %v292, 0
      %v324 = vsel %vm319, %v293, 0
      %v327 = vsel %vm319, %v294, 0
      %v330 = vsel %vm319, %v295, 0
      %v333 = vsel %vm319, %v296, 0
      %v336 = vsel %vm319, %v297, 0
      %v339 = vsel %vm319, %v298, 0
      %v342 = vsel %vm319, %v299, 0
      %v345 = vsel %vm319, %v300, 0
      %v348 = vsel %vm319, %v301, 0
      %v351 = vsel %vm319, %v302, 0
      %v354 = vsel %vm319, %v303, 0
      %vm356 = vcmask 1041408
      %v358 = vsel %vm356, %v316, 0
      %360 = vmatpush.bf16.msra.mxu0 0
      %361 = vmatpush.bf16.msra.mxu0 0
      %362 = vmatpush.bf16.msra.mxu0 0
      %363 = vmatpush.bf16.msra.mxu0 0
      %364 = vmatpush.bf16.msra.mxu0 0
      %365 = vmatpush.bf16.msra.mxu0 %v358
      %366 = vmatpush.bf16.msra.mxu0 %v315
      %367 = vmatpush.bf16.msra.mxu0 %v314
      %368 = vmatmul.bf16.gmra.mxu0 %v321
      %v369 = vpop.f32.mrf.mxu0
      %v370 = vadd.f32 %v242, %v369
      %v371 = vpop.f32.mrf.mxu0
      %v372 = vadd.f32 %v242, %v371
      %373 = vmatmul.bf16.gmra.mxu0 %v324
      %v374 = vpop.f32.mrf.mxu0
      %v375 = vadd.f32 %v242, %v374
      %v376 = vpop.f32.mrf.mxu0
      %v377 = vadd.f32 %v242, %v376
      %378 = vmatmul.bf16.gmra.mxu0 %v327
      %v379 = vpop.f32.mrf.mxu0
      %v380 = vadd.f32 %v242, %v379
      %v381 = vpop.f32.mrf.mxu0
      %v382 = vadd.f32 %v242, %v381
      %383 = vmatmul.bf16.gmra.mxu0 %v330
      %v384 = vpop.f32.mrf.mxu0
      %v385 = vadd.f32 %v242, %v384
      %v386 = vpop.f32.mrf.mxu0
      %v387 = vadd.f32 %v242, %v386
      %388 = vmatmul.bf16.gmra.mxu0 %v333
      %v389 = vpop.f32.mrf.mxu0
      %v390 = vadd.f32 %v242, %v389
      %v391 = vpop.f32.mrf.mxu0
      %v392 = vadd.f32 %v242, %v391
      %393 = vmatmul.bf16.gmra.mxu0 %v336
      %v394 = vpop.f32.mrf.mxu0
      %v395 = vadd.f32 %v242, %v394
      %v396 = vpop.f32.mrf.mxu0
      %v397 = vadd.f32 %v242, %v396
      %398 = vmatmul.bf16.gmra.mxu0 %v339
      %v399 = vpop.f32.mrf.mxu0
      %v400 = vadd.f32 %v242, %v399
      %v401 = vpop.f32.mrf.mxu0
      %v402 = vadd.f32 %v242, %v401
      %403 = vmatmul.bf16.gmra.mxu0 %v342
      %v404 = vpop.f32.mrf.mxu0
      %v405 = vadd.f32 %v242, %v404
      %v406 = vpop.f32.mrf.mxu0
      %v407 = vadd.f32 %v242, %v406
      %408 = vmatmul.bf16.gmra.mxu0 %v345
      %v409 = vpop.f32.mrf.mxu0
      %v410 = vadd.f32 %v242, %v409
      %v411 = vpop.f32.mrf.mxu0
      %v412 = vadd.f32 %v242, %v411
      %413 = vmatmul.bf16.gmra.mxu0 %v348
      %v414 = vpop.f32.mrf.mxu0
      %v415 = vadd.f32 %v242, %v414
      %v416 = vpop.f32.mrf.mxu0
      %v417 = vadd.f32 %v242, %v416
      %418 = vmatmul.bf16.gmra.mxu0 %v351
      %v419 = vpop.f32.mrf.mxu0
      %v420 = vadd.f32 %v242, %v419
      %v421 = vpop.f32.mrf.mxu0
      %v422 = vadd.f32 %v242, %v421
      %423 = vmatmul.bf16.gmra.mxu0 %v354
      %v424 = vpop.f32.mrf.mxu0
      %v425 = vadd.f32 %v242, %v424
      %v426 = vpop.f32.mrf.mxu0
      %v427 = vadd.f32 %v242, %v426
      %428 = vdwg.mxu0
      %vm429 = vcmp.gt.f32.partialorder %v370, 0.0
      %vm430 = vcmp.gt.f32.partialorder %v372, 0.0
      %vm431 = vcmp.gt.f32.partialorder %v375, 0.0
      %vm432 = vcmp.gt.f32.partialorder %v377, 0.0
      %vm433 = vcmp.gt.f32.partialorder %v380, 0.0
      %vm434 = vcmp.gt.f32.partialorder %v382, 0.0
      %vm435 = vcmp.gt.f32.partialorder %v385, 0.0
      %vm436 = vcmp.gt.f32.partialorder %v387, 0.0
      %vm437 = vcmp.gt.f32.partialorder %v390, 0.0
      %vm438 = vcmp.gt.f32.partialorder %v392, 0.0
      %vm439 = vcmp.gt.f32.partialorder %v395, 0.0
      %vm440 = vcmp.gt.f32.partialorder %v397, 0.0
      %vm441 = vcmp.gt.f32.partialorder %v400, 0.0
      %vm442 = vcmp.gt.f32.partialorder %v402, 0.0
      %vm443 = vcmp.gt.f32.partialorder %v405, 0.0
      %vm444 = vcmp.gt.f32.partialorder %v407, 0.0
      %vm445 = vcmp.gt.f32.partialorder %v410, 0.0
      %vm446 = vcmp.gt.f32.partialorder %v412, 0.0
      %vm447 = vcmp.gt.f32.partialorder %v415, 0.0
      %vm448 = vcmp.gt.f32.partialorder %v417, 0.0
      %vm449 = vcmp.gt.f32.partialorder %v420, 0.0
      %vm450 = vcmp.gt.f32.partialorder %v422, 0.0
      %vm451 = vcmp.gt.f32.partialorder %v425, 0.0
      %vm452 = vcmp.gt.f32.partialorder %v427, 0.0
      %v453 = vmul.f32 %v370, 0.2
      %v454 = vmul.f32 %v372, 0.2
      %v455 = vmul.f32 %v375, 0.2
      %v456 = vmul.f32 %v377, 0.2
      %v457 = vmul.f32 %v380, 0.2
      %v458 = vmul.f32 %v382, 0.2
      %v459 = vmul.f32 %v385, 0.2
      %v460 = vmul.f32 %v387, 0.2
      %v461 = vmul.f32 %v390, 0.2
      %v462 = vmul.f32 %v392, 0.2
      %v463 = vmul.f32 %v395, 0.2
      %v464 = vmul.f32 %v397, 0.2
      %v465 = vmul.f32 %v400, 0.2
      %v466 = vmul.f32 %v402, 0.2
      %v467 = vmul.f32 %v405, 0.2
      %v468 = vmul.f32 %v407, 0.2
      %v469 = vmul.f32 %v410, 0.2
      %v470 = vmul.f32 %v412, 0.2
      %v471 = vmul.f32 %v415, 0.2
      %v472 = vmul.f32 %v417, 0.2
      %v473 = vmul.f32 %v420, 0.2
      %v474 = vmul.f32 %v422, 0.2
      %v475 = vmul.f32 %v425, 0.2
      %v476 = vmul.f32 %v427, 0.2
      %v477 = vsel %vm429, %v370, %v453
      %v478 = vsel %vm430, %v372, %v454
      %v479 = vsel %vm431, %v375, %v455
      %v480 = vsel %vm432, %v377, %v456
      %v481 = vsel %vm433, %v380, %v457
      %v482 = vsel %vm434, %v382, %v458
      %v483 = vsel %vm435, %v385, %v459
      %v484 = vsel %vm436, %v387, %v460
      %v485 = vsel %vm437, %v390, %v461
      %v486 = vsel %vm438, %v392, %v462
      %v487 = vsel %vm439, %v395, %v463
      %v488 = vsel %vm440, %v397, %v464
      %v489 = vsel %vm441, %v400, %v465
      %v490 = vsel %vm442, %v402, %v466
      %v491 = vsel %vm443, %v405, %v467
      %v492 = vsel %vm444, %v407, %v468
      %v493 = vsel %vm445, %v410, %v469
      %v494 = vsel %vm446, %v412, %v470
      %v495 = vsel %vm447, %v415, %v471
      %v496 = vsel %vm448, %v417, %v472
      %v497 = vsel %vm449, %v420, %v473
      %v498 = vsel %vm450, %v422, %v474
      %v499 = vsel %vm451, %v425, %v475
      %v500 = vsel %vm452, %v427, %v476
      %v501 = vadd.f32 %v477, %v483
      %v502 = vadd.f32 %v478, %v484
      %v503 = vadd.f32 %v479, %v485
      %v504 = vadd.f32 %v480, %v486
      %v505 = vadd.f32 %v481, %v487
      %v506 = vadd.f32 %v482, %v488
      %v507 = vadd.f32 %v501, %v489
      %v508 = vadd.f32 %v502, %v490
      %v509 = vadd.f32 %v503, %v491
      %v510 = vadd.f32 %v504, %v492
      %v511 = vadd.f32 %v505, %v493
      %v512 = vadd.f32 %v506, %v494
      %v513 = vadd.f32 %v507, %v495
      %v514 = vadd.f32 %v508, %v496
      %v515 = vadd.f32 %v509, %v497
      %v516 = vadd.f32 %v510, %v498
      %v517 = vadd.f32 %v511, %v499
      %v518 = vadd.f32 %v512, %v500
      %v519 = vmul.f32 %v513, 0.25
      %v520 = vmul.f32 %v514, 0.25
      %v521 = vmul.f32 %v515, 0.25
      %v522 = vmul.f32 %v516, 0.25
      %v523 = vmul.f32 %v517, 0.25
      %v524 = vmul.f32 %v518, 0.25
      %v525 = vpack.c.bf16 %v519, %v519
      %v526 = vpack.c.bf16 %v520, %v520
      %v527 = vpack.c.bf16 %v521, %v521
      %v528 = vpack.c.bf16 %v522, %v522
      %v529 = vpack.c.bf16 %v523, %v523
      %v530 = vpack.c.bf16 %v524, %v524
      %vm531 = vcmask 60416
      %532 = vst.msk [vmem:[%s208] sm:$0xf] %vm531, %v525
      %533 = vst.msk [vmem:[%s208 + $0x4] sm:$0xf] %vm531, %v526
      %534 = vst.msk [vmem:[%s208 + $0x8] sm:$0xf] %vm531, %v527
      %535 = vst.msk [vmem:[%s208 + $0xc] sm:$0xf] %vm531, %v528
      %536 = vst.msk [vmem:[%s208 + $0x10] sm:$0xf] %vm531, %v529
      %537 = vst.msk [vmem:[%s208 + $0x14] sm:$0xf] %vm531, %v530
      %s538 = smul.u32 6, %s19
      %p539 = scmp.lt.s32.totalorder %s18, 1
      %s540 = scalar_select %p539, %s18, 1
      %p541 = scmp.lt.s32.totalorder %s538, 5
      %s542 = scalar_select %p541, %s538, 5
      %s543 = smul.addr %s540, 6
      %s544 = sadd.s32 %s542, %s543
      %s545 = smul.addr %s544, 4
      %s546 = scalar_lea.vmem %s3, %s545
      // Predicated region
      $region33: #{_lambda_.7} parent=31 // pred_check
        %p547 = pneg %p116
      $region34: #{_lambda_.7} parent=31 // pred_check_branch
        %549 = sbr.rel (%p547) target = $region36
      $region35: #{_lambda_.7} parent=31 // pred_region
        %s550 = smul.u32 6, %s19
      $region36: #{_lambda_.7} parent=31 // pred_fallthru
        _
    $region32: #{_lambda_.7} parent=5 // pred_fallthru
      _
    %p551 = scmp.le.s32.totalorder 2, %s9
    // Predicated region
    $region37: #{_lambda_.7} parent=5 // pred_check
      %p552 = pneg %p551
    $region38: #{_lambda_.7} parent=5 // pred_check_branch
      %554 = sbr.rel (%p552) target = $region40
    $region39: #{_lambda_.7} parent=5 // pred_region
      %s555 = ssub.s32 %s9, 2
      // Predicated region
      $region41: #{_lambda_.7} parent=39 // pred_check
        %p556 = pneg %p122
      $region42: #{_lambda_.7} parent=39 // pred_check_branch
        %558 = sbr.rel (%p556) target = $region44
      $region43: #{_lambda_.7} parent=39 // pred_region
        %s559 = smul.u32 6, %s21
        %p560 = scmp.lt.s32.totalorder %s20, 1
        %s561 = scalar_select %p560, %s20, 1
        %p562 = scmp.lt.s32.totalorder %s559, 5
        %s563 = scalar_select %p562, %s559, 5
        %s564 = smul.addr %s561, 6
        %s565 = sadd.s32 %s563, %s564
        %s566 = smul.addr %s565, 4
        %s567 = scalar_lea.vmem %s3, %s566
      $region44: #{_lambda_.7} parent=39 // pred_fallthru
        _
    $region40: #{_lambda_.7} parent=5 // pred_fallthru
      _
  $region6: #{_lambda_.7} parent=0 // loop_footer
    %s13 = sadd.s32 1, %s9
  $region7: #{_lambda_.7} parent=0 // loop_footer_branch
    %8 = sbr.rel target = $region3
  $region8: #{_lambda_.7} parent=0 // loop_exit
    _

// kernel: _lambda_.9
$region0: #{_lambda_.9}
  #allocation0 [shape = 'u32[]', space=smem, size = 0x4, offset = 0x4, fixed_abs, tag = 'smem constant byte address 0x4 - core index']
  #allocation1 [shape = 'u32[72,128]{1,0:T(1,128)}', space=vmem, size = 0x9000, scoped, tag = 'internal scratch']
  #allocation2 [shape = 'f32[2,32]{1,0:T(2,128)}', space=vmem, size = 0x400, scoped, tag = 'scratch operand']
  %s0 = inlined_call_operand.vmem [shape: bf16[2,192], index: 0, kind: input, shape index: {}]
  %s1 = inlined_call_operand.vmem [shape: bf16[192,32], index: 1, kind: input, shape index: {}]
  %s2 = inlined_call_operand.vmem [shape: f32[1,32], index: 2, kind: input, shape index: {}]
  %s3 = inlined_call_operand.vmem [shape: f32[2,32], index: 3, kind: output, shape index: {}]
  %s4 = sld [smem:[#allocation0]]
  $region30: #{_lambda_.9} parent=0
    _
  %s6 = ssub.s32 1, %s4
  %s7 = scalar_select 0, %s6, %s4
  // Predicated region
  $region2: #{_lambda_.9} parent=0 // pred_check
    _
  $region3: #{_lambda_.9} parent=0 // pred_check_branch
    %9 = sbr.rel (0) target = $region5
  $region4: #{_lambda_.9} parent=0 // pred_region
    _
  $region5: #{_lambda_.9} parent=0 // pred_fallthru
    _
  // Predicated region
  $region6: #{_lambda_.9} parent=0 // pred_check
    _
  $region7: #{_lambda_.9} parent=0 // pred_check_branch
    %11 = sbr.rel (0) target = $region9
  $region8: #{_lambda_.9} parent=0 // pred_region
    _
  $region9: #{_lambda_.9} parent=0 // pred_fallthru
    _
  // Predicated region
  $region10: #{_lambda_.9} parent=0 // pred_check
    _
  $region11: #{_lambda_.9} parent=0 // pred_check_branch
    %13 = sbr.rel (0) target = $region13
  $region12: #{_lambda_.9} parent=0 // pred_region
    _
  $region13: #{_lambda_.9} parent=0 // pred_fallthru
    _
  %p15 = scmp.eq.s32.totalorder 0, 0
  // Predicated region
  $region14: #{_lambda_.9} parent=0 // pred_check
    %p16 = pneg %p15
  $region15: #{_lambda_.9} parent=0 // pred_check_branch
    %18 = sbr.rel (%p16) target = $region17
  $region16: #{_lambda_.9} parent=0 // pred_region
    %vm19 = vcmask 254976
    %20 = vst.msk [vmem:[#allocation2] sm:$0x3] %vm19, 0.0
  $region17: #{_lambda_.9} parent=0 // pred_fallthru
    _
  %v21 = vld [vmem:[#allocation2] sm:$0x3]
  %v22 = vld [vmem:[%s0] sm:$0x3]
  %v23 = vld [vmem:[%s1] sm:$0xf]
  %v24 = vld [vmem:[%s1 + $0x4] sm:$0xf]
  %v25 = vld [vmem:[%s1 + $0x8] sm:$0xf]
  %v26 = vld [vmem:[%s1 + $0xc] sm:$0xf]
  %v27 = vld [vmem:[%s1 + $0x10] sm:$0xf]
  %v28 = vld [vmem:[%s1 + $0x14] sm:$0xf]
  %v29 = vld [vmem:[%s1 + $0x18] sm:$0xf]
  %v30 = vld [vmem:[%s1 + $0x1c] sm:$0xf]
  %v31 = vld [vmem:[%s1 + $0x20] sm:$0xf]
  %v32 = vld [vmem:[%s1 + $0x24] sm:$0xf]
  %v33 = vld [vmem:[%s1 + $0x28] sm:$0xf]
  %v34 = vld [vmem:[%s1 + $0x2c] sm:$0xf]
  %v35 = vld [vmem:[%s1 + $0x30] sm:$0xf]
  %v36 = vld [vmem:[%s1 + $0x34] sm:$0xf]
  %v37 = vld [vmem:[%s1 + $0x38] sm:$0xf]
  %v38 = vld [vmem:[%s1 + $0x3c] sm:$0xf]
  %v39 = vld [vmem:[%s1 + $0x40] sm:$0xf]
  %v40 = vld [vmem:[%s1 + $0x44] sm:$0xf]
  %v41 = vld [vmem:[%s1 + $0x48] sm:$0xf]
  %v42 = vld [vmem:[%s1 + $0x4c] sm:$0xf]
  %v43 = vld [vmem:[%s1 + $0x50] sm:$0xf]
  %v44 = vld [vmem:[%s1 + $0x54] sm:$0xf]
  %v45 = vld [vmem:[%s1 + $0x58] sm:$0xf]
  %v46 = vld [vmem:[%s1 + $0x5c] sm:$0xf]
  %48 = vst [vmem:[#allocation1] ss:$9 sm:$0xff] %v22
  %v49 = vld [vmem:[#allocation1] sm:$0xff]
  %v50 = vld [vmem:[#allocation1 + $0x9] sm:$0xff]
  %v76 = vunpack.c.l.b16 %v23
  %v77 = vunpack.c.l.b16 %v24
  %v78 = vunpack.c.l.b16 %v25
  %v79 = vunpack.c.l.b16 %v26
  %v80 = vunpack.c.l.b16 %v27
  %v81 = vunpack.c.l.b16 %v28
  %v82 = vunpack.c.l.b16 %v29
  %v83 = vunpack.c.l.b16 %v30
  %v84 = vunpack.c.l.b16 %v31
  %v85 = vunpack.c.l.b16 %v32
  %v86 = vunpack.c.l.b16 %v33
  %v87 = vunpack.c.l.b16 %v34
  %v88 = vunpack.c.l.b16 %v35
  %v89 = vunpack.c.l.b16 %v36
  %v90 = vunpack.c.l.b16 %v37
  %v91 = vunpack.c.l.b16 %v38
  %v92 = vunpack.c.l.b16 %v39
  %v93 = vunpack.c.l.b16 %v40
  %v94 = vunpack.c.l.b16 %v41
  %v95 = vunpack.c.l.b16 %v42
  %v96 = vunpack.c.l.b16 %v43
  %v97 = vunpack.c.l.b16 %v44
  %v98 = vunpack.c.l.b16 %v45
  %v99 = vunpack.c.l.b16 %v46
  %v100 = vpack.c.b16 %v77, %v76
  %v101 = vpack.c.b16 %v79, %v78
  %v102 = vpack.c.b16 %v81, %v80
  %v103 = vpack.c.b16 %v83, %v82
  %v104 = vpack.c.b16 %v85, %v84
  %v105 = vpack.c.b16 %v87, %v86
  %v106 = vpack.c.b16 %v89, %v88
  %v107 = vpack.c.b16 %v91, %v90
  %v108 = vpack.c.b16 %v93, %v92
  %v109 = vpack.c.b16 %v95, %v94
  %v110 = vpack.c.b16 %v97, %v96
  %v111 = vpack.c.b16 %v99, %v98
  %vm124 = vcmask 523264
  %v125 = vsel %vm124, %v50, 0
  %127 = vmatpush.bf16.msra.mxu0 %v107
  %128 = vmatpush.bf16.msra.mxu0 %v106
  %129 = vmatpush.bf16.msra.mxu0 %v105
  %130 = vmatpush.bf16.msra.mxu0 %v104
  %131 = vmatpush.bf16.msra.mxu0 %v103
  %132 = vmatpush.bf16.msra.mxu0 %v102
  %133 = vmatpush.bf16.msra.mxu0 %v101
  %134 = vmatpush.bf16.msra.mxu0 %v100
  %135 = vmatmul.bf16.gmra.mxu0 %v49
  %v136 = vpop.f32.mrf.mxu0
  %v137 = vadd.f32 0.0, %v136
  %v138 = vpop.f32.mrf.mxu0
  %139 = vdwg.mxu0
  %140 = vmatpush.bf16.msra.mxu0 0
  %141 = vmatpush.bf16.msra.mxu0 0
  %142 = vmatpush.bf16.msra.mxu0 0
  %143 = vmatpush.bf16.msra.mxu0 0
  %144 = vmatpush.bf16.msra.mxu0 %v111
  %145 = vmatpush.bf16.msra.mxu0 %v110
  %146 = vmatpush.bf16.msra.mxu0 %v109
  %147 = vmatpush.bf16.msra.mxu0 %v108
  %148 = vmatmul.bf16.gmra.mxu0 %v125
  %v149 = vpop.f32.mrf.mxu0
  %v150 = vadd.f32 %v137, %v149
  %v151 = vpop.f32.mrf.mxu0
  %152 = vdwg.mxu0
  %v153 = vadd.f32 %v21, %v150
  %vm154 = vcmask 254976
  %155 = vst.msk [vmem:[#allocation2] sm:$0x3] %vm154, %v153
  // Predicated region
  $region18: #{_lambda_.9} parent=0 // pred_check
    %p156 = pneg %p15
  $region19: #{_lambda_.9} parent=0 // pred_check_branch
    %158 = sbr.rel (%p156) target = $region21
  $region20: #{_lambda_.9} parent=0 // pred_region
    %v159 = vld [vmem:[#allocation2] sm:$0x3]
    %v160 = vld [vmem:[%s2] sm:$0x1]
    %v162 = vperm.slane %v160, 0
    %v164 = vadd.f32 %v159, %v162
    %165 = vst.msk [vmem:[%s3] sm:$0x3] %vm154, %v164
  $region21: #{_lambda_.9} parent=0 // pred_fallthru
    _
  // Predicated region
  $region22: #{_lambda_.9} parent=0 // pred_check
    _
  $region23: #{_lambda_.9} parent=0 // pred_check_branch
    %167 = sbr.rel (0) target = $region25
  $region24: #{_lambda_.9} parent=0 // pred_region
    _
  $region25: #{_lambda_.9} parent=0 // pred_fallthru
    _
  // Predicated region
  $region26: #{_lambda_.9} parent=0 // pred_check
    _
  $region27: #{_lambda_.9} parent=0 // pred_check_branch
    %169 = sbr.rel (0) target = $region29
  $region28: #{_lambda_.9} parent=0 // pred_region
    _
  $region29: #{_lambda_.9} parent=0 // pred_fallthru
    _

// kernel: _lambda_.8
$region0: #{_lambda_.8}
  #allocation0 [shape = 'u32[]', space=smem, size = 0x4, offset = 0x4, fixed_abs, tag = 'smem constant byte address 0x4 - core index']
  #allocation1 [shape = 'u32[72,128]{1,0:T(1,128)}', space=vmem, size = 0x9000, scoped, tag = 'internal scratch']
  %s0 = inlined_call_operand.vmem [shape: bf16[2,4,12,72], index: 0, kind: input, shape index: {}]
  %s1 = inlined_call_operand.vmem [shape: bf16[72,16], index: 1, kind: input, shape index: {}]
  %s2 = inlined_call_operand.vmem [shape: f32[1,16], index: 2, kind: input, shape index: {}]
  %s3 = inlined_call_operand.vmem [shape: bf16[2,12,16], index: 3, kind: output, shape index: {}]
  %s4 = sld [smem:[#allocation0]]
  $region45: #{_lambda_.8} parent=0
    _
  %s6 = ssub.s32 1, %s4
  %s7 = scalar_select 0, %s6, %s4
  loop: start=0, step=1, limit=4
  $region2: #{_lambda_.8} parent=0 // loop_pre_header
    _
  $region3: #{_lambda_.8} parent=0 // loop_header
    %s9 = sphi 0, %s13
    %p10 = scmp.ge.s32.totalorder %s9, 4
    %s16 = sphi 0, %s28
    %s17 = sphi 0, %s24
    %s18 = sphi 0, %s16
    %s19 = sphi 0, %s17
    %s20 = sphi 0, %s18
    %s21 = sphi 0, %s19
    %s33 = sphi 0, %s35
    %s36 = sphi 0, %s33
    %s37 = sphi 0, %s36
    %s53 = sphi 0, %s37
    %s57 = sphi 0, %s57
    %s59 = sphi 0, %s57
    %s60 = sphi 0, %s59
    %s74 = sphi 0, %s60
    %s78 = sphi 0, %s78
    %s80 = sphi 0, %s78
    %s81 = sphi 0, %s80
    %s95 = sphi 0, %s81
    %s103 = sphi 0, %s105
    %s106 = sphi 0, %s103
    %s107 = sphi 0, %s106
    %s123 = sphi 0, %s107
  $region4: #{_lambda_.8} parent=0 // loop_header_branch
    %12 = sbr.rel (%p10) target = $region8
  $region5: #{_lambda_.8} parent=0 // loop_body
    %s14 = ssub.s32 %s9, 1
    %s15 = ssub.s32 %s9, 2
    %s22 = sadd.s32 1, %s17
    %p23 = scmp.ge.s32.totalorder %s22, 1
    %s24 = scalar_select %p23, 0, %s22
    %s25 = sadd.s32 1, %s16
    %s26 = scalar_select %p23, %s25, %s16
    %p27 = scmp.ge.s32.totalorder %s26, 2
    %s28 = scalar_select %p27, 0, %s26
    %s29 = ssub.s32 %s16, %s28
    %s30 = ssub.s32 %s17, %s24
    %s31 = sor.u32 %s29, %s30
    %p32 = scmp.eq.s32.totalorder %s31, 0
    %s34 = sadd.s32 %s33, 1
    %s35 = scalar_select %p32, %s33, %s34
    %p38 = pneg %p32
    %p39 = scmp.eq.s32.totalorder %s9, 1
    %p40 = por %p38, %p39
    %p41 = scmp.ne.s32.totalorder %s33, %s36
    %p42 = scmp.eq.s32.totalorder %s9, 0
    %p43 = por %p41, %p42
    %p44 = scmp.ne.s32.totalorder %s33, %s36
    %p45 = scmp.eq.s32.totalorder %s14, 1
    %p46 = por %p44, %p45
    %p47 = scmp.ne.s32.totalorder %s36, %s37
    %p48 = scmp.eq.s32.totalorder %s14, 0
    %p49 = por %p47, %p48
    %p50 = scmp.ne.s32.totalorder %s36, %s37
    %p51 = scmp.eq.s32.totalorder %s15, 1
    %p52 = por %p50, %p51
    %p54 = scmp.ne.s32.totalorder %s37, %s53
    %p55 = scmp.eq.s32.totalorder %s15, 0
    %p56 = por %p54, %p55
    %s58 = sadd.s32 %s57, 1
    %p61 = scmp.eq.s32.totalorder %s9, 1
    %p62 = scmp.ne.s32.totalorder %s57, %s59
    %p63 = scmp.eq.s32.totalorder %s9, 0
    %p64 = por %p62, %p63
    %p65 = scmp.ne.s32.totalorder %s57, %s59
    %p66 = scmp.eq.s32.totalorder %s14, 1
    %p67 = por %p65, %p66
    %p68 = scmp.ne.s32.totalorder %s59, %s60
    %p69 = scmp.eq.s32.totalorder %s14, 0
    %p70 = por %p68, %p69
    %p71 = scmp.ne.s32.totalorder %s59, %s60
    %p72 = scmp.eq.s32.totalorder %s15, 1
    %p73 = por %p71, %p72
    %p75 = scmp.ne.s32.totalorder %s60, %s74
    %p76 = scmp.eq.s32.totalorder %s15, 0
    %p77 = por %p75, %p76
    %s79 = sadd.s32 %s78, 1
    %p82 = scmp.eq.s32.totalorder %s9, 1
    %p83 = scmp.ne.s32.totalorder %s78, %s80
    %p84 = scmp.eq.s32.totalorder %s9, 0
    %p85 = por %p83, %p84
    %p86 = scmp.ne.s32.totalorder %s78, %s80
    %p87 = scmp.eq.s32.totalorder %s14, 1
    %p88 = por %p86, %p87
    %p89 = scmp.ne.s32.totalorder %s80, %s81
    %p90 = scmp.eq.s32.totalorder %s14, 0
    %p91 = por %p89, %p90
    %p92 = scmp.ne.s32.totalorder %s80, %s81
    %p93 = scmp.eq.s32.totalorder %s15, 1
    %p94 = por %p92, %p93
    %p96 = scmp.ne.s32.totalorder %s81, %s95
    %p97 = scmp.eq.s32.totalorder %s15, 0
    %p98 = por %p96, %p97
    %s99 = ssub.s32 %s16, %s28
    %s100 = ssub.s32 %s17, %s24
    %s101 = sor.u32 %s99, %s100
    %p102 = scmp.eq.s32.totalorder %s101, 0
    %s104 = sadd.s32 %s103, 1
    %s105 = scalar_select %p102, %s103, %s104
    %p108 = pneg %p102
    %p109 = scmp.eq.s32.totalorder %s9, 1
    %p110 = por %p108, %p109
    %p111 = scmp.ne.s32.totalorder %s103, %s106
    %p112 = scmp.eq.s32.totalorder %s9, 0
    %p113 = por %p111, %p112
    %p114 = scmp.ne.s32.totalorder %s103, %s106
    %p115 = scmp.eq.s32.totalorder %s14, 1
    %p116 = por %p114, %p115
    %p117 = scmp.ne.s32.totalorder %s106, %s107
    %p118 = scmp.eq.s32.totalorder %s14, 0
    %p119 = por %p117, %p118
    %p120 = scmp.ne.s32.totalorder %s106, %s107
    %p121 = scmp.eq.s32.totalorder %s15, 1
    %p122 = por %p120, %p121
    %p124 = scmp.ne.s32.totalorder %s107, %s123
    %p125 = scmp.eq.s32.totalorder %s15, 0
    %p126 = por %p124, %p125
    %p127 = scmp.le.s32.totalorder 1, %s9
    %p128 = scmp.lt.s32.totalorder %s9, 3
    %p129 = pnand %p127, %p128
    %p130 = pneg %p129
    // Predicated region
    $region9: #{_lambda_.8} parent=5 // pred_check
      _
    $region10: #{_lambda_.8} parent=5 // pred_check_branch
      %132 = sbr.rel (%p129) target = $region12
    $region11: #{_lambda_.8} parent=5 // pred_region
      %s133 = ssub.s32 %s9, 1
      // Predicated region
      $region13: #{_lambda_.8} parent=11 // pred_check
        %p134 = pneg %p70
      $region14: #{_lambda_.8} parent=11 // pred_check_branch
        %136 = sbr.rel (%p134) target = $region16
      $region15: #{_lambda_.8} parent=11 // pred_region
        _
      $region16: #{_lambda_.8} parent=11 // pred_fallthru
        _
      // Predicated region
      $region17: #{_lambda_.8} parent=11 // pred_check
        %p137 = pneg %p91
      $region18: #{_lambda_.8} parent=11 // pred_check_branch
        %139 = sbr.rel (%p137) target = $region20
      $region19: #{_lambda_.8} parent=11 // pred_region
        _
      $region20: #{_lambda_.8} parent=11 // pred_fallthru
        _
    $region12: #{_lambda_.8} parent=5 // pred_fallthru
      _
    %p140 = scmp.lt.s32.totalorder %s9, 2
    // Predicated region
    $region21: #{_lambda_.8} parent=5 // pred_check
      %p141 = pneg %p140
    $region22: #{_lambda_.8} parent=5 // pred_check_branch
      %143 = sbr.rel (%p141) target = $region24
    $region23: #{_lambda_.8} parent=5 // pred_region
      // Predicated region
      $region25: #{_lambda_.8} parent=23 // pred_check
        %p144 = pneg %p43
      $region26: #{_lambda_.8} parent=23 // pred_check_branch
        %146 = sbr.rel (%p144) target = $region28
      $region27: #{_lambda_.8} parent=23 // pred_region
        %s147 = smul.u32 2, %s17
        %p148 = scmp.lt.s32.totalorder %s16, 1
        %s149 = scalar_select %p148, %s16, 1
        %p150 = scmp.lt.s32.totalorder %s147, 1
        %s151 = scalar_select %p150, %s147, 1
        %s152 = smul.addr %s149, 8
        %s153 = sadd.s32 %s151, %s152
        %s154 = smul.addr %s153, 4
        %s155 = scalar_lea.vmem %s0, %s154
        %s156 = smul.u32 2, %s17
      $region28: #{_lambda_.8} parent=23 // pred_fallthru
        _
    $region24: #{_lambda_.8} parent=5 // pred_fallthru
      _
    %p157 = scmp.le.s32.totalorder 1, %s9
    %p158 = scmp.lt.s32.totalorder %s9, 3
    %p159 = pnand %p157, %p158
    %p160 = pneg %p159
    // Predicated region
    $region29: #{_lambda_.8} parent=5 // pred_check
      _
    $region30: #{_lambda_.8} parent=5 // pred_check_branch
      %162 = sbr.rel (%p159) target = $region32
    $region31: #{_lambda_.8} parent=5 // pred_region
      %s163 = ssub.s32 %s9, 1
      %s164 = smul.u32 2, %s19
      %p165 = scmp.lt.s32.totalorder %s18, 1
      %s166 = scalar_select %p165, %s18, 1
      %p167 = scmp.lt.s32.totalorder %s164, 1
      %s168 = scalar_select %p167, %s164, 1
      %s169 = smul.addr %s166, 8
      %s170 = sadd.s32 %s168, %s169
      %s171 = smul.addr %s170, 4
      %s172 = scalar_lea.vmem %s0, %s171
      %p173 = pneg %p49
      %p174 = pneg %p46
      %p175 = pneg %p70
      %p176 = pneg %p67
      %p177 = pneg %p91
      %p178 = pneg %p88
      %p179 = pneg %p119
      %p180 = pneg %p116
      %s181 = smul.u32 2, %s19
      %p182 = scmp.lt.s32.totalorder %s18, 1
      %s183 = scalar_select %p182, %s18, 1
      %p184 = scmp.lt.s32.totalorder %s181, 1
      %s185 = scalar_select %p184, %s181, 1
      %s186 = smul.addr %s183, 2
      %s187 = sadd.s32 %s185, %s186
      %s188 = smul.addr %s187, 4
      %s189 = scalar_lea.vmem %s3, %s188
      %s190 = smul.u32 2, %s19
      %p191 = scmp.lt.s32.totalorder %s18, 1
      %s192 = scalar_select %p191, %s18, 1
      %p193 = scmp.lt.s32.totalorder %s190, 1
      %s194 = scalar_select %p193, %s190, 1
      %s195 = smul.addr %s192, 8
      %s196 = sadd.s32 %s194, %s195
      %s197 = smul.addr %s196, 4
      %s198 = scalar_lea.vmem %s0, %s197
      %s199 = smul.u32 2, %s19
      %s200 = smul.u32 2, %s19
      %p201 = scmp.lt.s32.totalorder %s18, 1
      %s202 = scalar_select %p201, %s18, 1
      %p203 = scmp.lt.s32.totalorder %s200, 1
      %s204 = scalar_select %p203, %s200, 1
      %s205 = smul.addr %s202, 2
      %s206 = sadd.s32 %s204, %s205
      %s207 = smul.addr %s206, 4
      %s208 = scalar_lea.vmem %s3, %s207
      %s209 = smul.u32 2, %s19
      %v211 = vld [vmem:[%s1] sm:$0xf]
      %v212 = vld [vmem:[%s1 + $0x4] sm:$0xf]
      %v213 = vld [vmem:[%s1 + $0x8] sm:$0xf]
      %v214 = vld [vmem:[%s1 + $0xc] sm:$0xf]
      %v215 = vld [vmem:[%s1 + $0x10] sm:$0xf]
      %v216 = vld [vmem:[%s1 + $0x14] sm:$0xf]
      %v217 = vld [vmem:[%s1 + $0x18] sm:$0xf]
      %v218 = vld [vmem:[%s1 + $0x1c] sm:$0xf]
      %v219 = vld [vmem:[%s1 + $0x20] sm:$0xf]
      %v220 = vld [vmem:[%s2] sm:$0x1]
      %v221 = vld [vmem:[%s198] sm:$0xf]
      %v222 = vld [vmem:[%s198 + $0x4] sm:$0x3]
      %v223 = vld [vmem:[%s198 + $0x8] sm:$0xf]
      %v224 = vld [vmem:[%s198 + $0xc] sm:$0x3]
      %v225 = vld [vmem:[%s198 + $0x10] sm:$0xf]
      %v226 = vld [vmem:[%s198 + $0x14] sm:$0x3]
      %v227 = vld [vmem:[%s198 + $0x18] sm:$0xf]
      %v228 = vld [vmem:[%s198 + $0x1c] sm:$0x3]
      %v230 = vperm.slane %v220, 0
      %v234 = vunpack.c.l.b16 %v221
      %v235 = vunpack.c.l.b16 %v222
      %v236 = vpack.c.b16 %v235, %v234
      %v246 = vunpack.c.l.b16 %v211
      %v247 = vunpack.c.l.b16 %v212
      %v248 = vunpack.c.l.b16 %v213
      %v249 = vunpack.c.l.b16 %v214
      %v250 = vunpack.c.l.b16 %v215
      %v251 = vunpack.c.l.b16 %v216
      %v252 = vunpack.c.l.b16 %v217
      %v253 = vunpack.c.l.b16 %v218
      %v254 = vunpack.c.l.b16 %v219
      %v255 = vpack.c.b16 %v247, %v246
      %v256 = vpack.c.b16 %v249, %v248
      %v257 = vpack.c.b16 %v251, %v250
      %v258 = vpack.c.b16 %v253, %v252
      %v259 = vpack.c.b16 %v254, %v254
      %vm264 = vcmask 588800
      %v266 = vsel %vm264, %v236, 0
      %vm268 = vcmask 1043456
      %v270 = vsel %vm268, %v259, 0
      %272 = vmatpush.bf16.msra.mxu0 0
      %273 = vmatpush.bf16.msra.mxu0 0
      %274 = vmatpush.bf16.msra.mxu0 0
      %275 = vmatpush.bf16.msra.mxu0 %v270
      %276 = vmatpush.bf16.msra.mxu0 %v258
      %277 = vmatpush.bf16.msra.mxu0 %v257
      %278 = vmatpush.bf16.msra.mxu0 %v256
      %279 = vmatpush.bf16.msra.mxu0 %v255
      %280 = vmatmul.bf16.gmra.mxu0 %v266
      %v281 = vpop.f32.mrf.mxu0
      %v282 = vadd.f32 %v230, %v281
      %v283 = vpop.f32.mrf.mxu0
      %v284 = vadd.f32 %v230, %v283
      %285 = vdwg.mxu0
      %vm286 = vcmp.gt.f32.partialorder %v282, 0.0
      %vm287 = vcmp.gt.f32.partialorder %v284, 0.0
      %v288 = vmul.f32 %v282, 0.2
      %v289 = vmul.f32 %v284, 0.2
      %v290 = vsel %vm286, %v282, %v288
      %v291 = vsel %vm287, %v284, %v289
      %v294 = vunpack.c.l.b16 %v223
      %v295 = vunpack.c.l.b16 %v224
      %v296 = vpack.c.b16 %v295, %v294
      %v298 = vsel %vm264, %v296, 0
      %300 = vmatpush.bf16.msra.mxu0 0
      %301 = vmatpush.bf16.msra.mxu0 0
      %302 = vmatpush.bf16.msra.mxu0 0
      %303 = vmatpush.bf16.msra.mxu0 %v270
      %304 = vmatpush.bf16.msra.mxu0 %v258
      %305 = vmatpush.bf16.msra.mxu0 %v257
      %306 = vmatpush.bf16.msra.mxu0 %v256
      %307 = vmatpush.bf16.msra.mxu0 %v255
      %308 = vmatmul.bf16.gmra.mxu0 %v298
      %v309 = vpop.f32.mrf.mxu0
      %v310 = vadd.f32 %v230, %v309
      %v311 = vpop.f32.mrf.mxu0
      %v312 = vadd.f32 %v230, %v311
      %313 = vdwg.mxu0
      %vm314 = vcmp.gt.f32.partialorder %v310, 0.0
      %vm315 = vcmp.gt.f32.partialorder %v312, 0.0
      %v316 = vmul.f32 %v310, 0.2
      %v317 = vmul.f32 %v312, 0.2
      %v318 = vsel %vm314, %v310, %v316
      %v319 = vsel %vm315, %v312, %v317
      %v320 = vadd.f32 %v290, %v318
      %v321 = vadd.f32 %v291, %v319
      %v324 = vunpack.c.l.b16 %v225
      %v325 = vunpack.c.l.b16 %v226
      %v326 = vpack.c.b16 %v325, %v324
      %v328 = vsel %vm264, %v326, 0
      %330 = vmatpush.bf16.msra.mxu0 0
      %331 = vmatpush.bf16.msra.mxu0 0
      %332 = vmatpush.bf16.msra.mxu0 0
      %333 = vmatpush.bf16.msra.mxu0 %v270
      %334 = vmatpush.bf16.msra.mxu0 %v258
      %335 = vmatpush.bf16.msra.mxu0 %v257
      %336 = vmatpush.bf16.msra.mxu0 %v256
      %337 = vmatpush.bf16.msra.mxu0 %v255
      %338 = vmatmul.bf16.gmra.mxu0 %v328
      %v339 = vpop.f32.mrf.mxu0
      %v340 = vadd.f32 %v230, %v339
      %v341 = vpop.f32.mrf.mxu0
      %v342 = vadd.f32 %v230, %v341
      %343 = vdwg.mxu0
      %vm344 = vcmp.gt.f32.partialorder %v340, 0.0
      %vm345 = vcmp.gt.f32.partialorder %v342, 0.0
      %v346 = vmul.f32 %v340, 0.2
      %v347 = vmul.f32 %v342, 0.2
      %v348 = vsel %vm344, %v340, %v346
      %v349 = vsel %vm345, %v342, %v347
      %v350 = vadd.f32 %v320, %v348
      %v351 = vadd.f32 %v321, %v349
      %v354 = vunpack.c.l.b16 %v227
      %v355 = vunpack.c.l.b16 %v228
      %v356 = vpack.c.b16 %v355, %v354
      %v358 = vsel %vm264, %v356, 0
      %360 = vmatpush.bf16.msra.mxu0 0
      %361 = vmatpush.bf16.msra.mxu0 0
      %362 = vmatpush.bf16.msra.mxu0 0
      %363 = vmatpush.bf16.msra.mxu0 %v270
      %364 = vmatpush.bf16.msra.mxu0 %v258
      %365 = vmatpush.bf16.msra.mxu0 %v257
      %366 = vmatpush.bf16.msra.mxu0 %v256
      %367 = vmatpush.bf16.msra.mxu0 %v255
      %368 = vmatmul.bf16.gmra.mxu0 %v358
      %v369 = vpop.f32.mrf.mxu0
      %v370 = vadd.f32 %v230, %v369
      %v371 = vpop.f32.mrf.mxu0
      %v372 = vadd.f32 %v230, %v371
      %373 = vdwg.mxu0
      %vm374 = vcmp.gt.f32.partialorder %v370, 0.0
      %vm375 = vcmp.gt.f32.partialorder %v372, 0.0
      %v376 = vmul.f32 %v370, 0.2
      %v377 = vmul.f32 %v372, 0.2
      %v378 = vsel %vm374, %v370, %v376
      %v379 = vsel %vm375, %v372, %v377
      %v380 = vadd.f32 %v350, %v378
      %v381 = vadd.f32 %v351, %v379
      %v382 = vmul.f32 %v380, 0.25
      %v383 = vmul.f32 %v381, 0.25
      %v384 = vpack.c.bf16 %v382, %v382
      %v385 = vpack.c.bf16 %v383, %v383
      %vm386 = vcmask 125952
      %387 = vst.msk [vmem:[%s208] sm:$0xf] %vm386, %v384
      %vm388 = vcmask 123904
      %389 = vst.msk [vmem:[%s208 + $0x4] sm:$0x3] %vm388, %v385
      %s390 = smul.u32 2, %s19
      %p391 = scmp.lt.s32.totalorder %s18, 1
      %s392 = scalar_select %p391, %s18, 1
      %p393 = scmp.lt.s32.totalorder %s390, 1
      %s394 = scalar_select %p393, %s390, 1
      %s395 = smul.addr %s392, 2
      %s396 = sadd.s32 %s394, %s395
      %s397 = smul.addr %s396, 4
      %s398 = scalar_lea.vmem %s3, %s397
      // Predicated region
      $region33: #{_lambda_.8} parent=31 // pred_check
        %p399 = pneg %p116
      $region34: #{_lambda_.8} parent=31 // pred_check_branch
        %401 = sbr.rel (%p399) target = $region36
      $region35: #{_lambda_.8} parent=31 // pred_region
        %s402 = smul.u32 2, %s19
      $region36: #{_lambda_.8} parent=31 // pred_fallthru
        _
    $region32: #{_lambda_.8} parent=5 // pred_fallthru
      _
    %p403 = scmp.le.s32.totalorder 2, %s9
    // Predicated region
    $region37: #{_lambda_.8} parent=5 // pred_check
      %p404 = pneg %p403
    $region38: #{_lambda_.8} parent=5 // pred_check_branch
      %406 = sbr.rel (%p404) target = $region40
    $region39: #{_lambda_.8} parent=5 // pred_region
      %s407 = ssub.s32 %s9, 2
      // Predicated region
      $region41: #{_lambda_.8} parent=39 // pred_check
        %p408 = pneg %p122
      $region42: #{_lambda_.8} parent=39 // pred_check_branch
        %410 = sbr.rel (%p408) target = $region44
      $region43: #{_lambda_.8} parent=39 // pred_region
        %s411 = smul.u32 2, %s21
        %p412 = scmp.lt.s32.totalorder %s20, 1
        %s413 = scalar_select %p412, %s20, 1
        %p414 = scmp.lt.s32.totalorder %s411, 1
        %s415 = scalar_select %p414, %s411, 1
        %s416 = smul.addr %s413, 2
        %s417 = sadd.s32 %s415, %s416
        %s418 = smul.addr %s417, 4
        %s419 = scalar_lea.vmem %s3, %s418
      $region44: #{_lambda_.8} parent=39 // pred_fallthru
        _
    $region40: #{_lambda_.8} parent=5 // pred_fallthru
      _
  $region6: #{_lambda_.8} parent=0 // loop_footer
    %s13 = sadd.s32 1, %s9
  $region7: #{_lambda_.8} parent=0 // loop_footer_branch
    %8 = sbr.rel target = $region3
  $region8: #{_lambda_.8} parent=0 // loop_exit
    _

</llo_original>
